<compile_context>
chip_gen: v7x
topology: tpu7x:2x2x1
jax: 0.10.0
libtpu: 0.0.40
codegen_flags: <defaults>
</compile_context>

<pallas_src>
import functools

import jax
import jax.numpy as jnp
from jax.experimental import pallas as pl
from jax.experimental.pallas import tpu as pltpu


# ----------------------------- fused Pallas kernel ----------------------------


def _fused_forward_kernel(
    patches_ref,   # (nP*F, C*P*P) bf16, rows patch-major: row = p*F + f   (F = S*B)
    w_emb_ref,     # (C*P*P, E)    bf16
    b_emb_ref,     # (1, E)        f32
    w_fc_ref,      # (nP, E, D)    bf16
    b_fc_ref,      # (1, D)        f32
    w_ih_ref,      # (4, D, H)     bf16   gate order i, f, g, o
    w_hh_ref,      # (4, H, H)     bf16
    b_lstm_ref,    # (4, 1, H)     f32
    w_dec_ref,     # (H, C*H*W)    bf16
    b_dec_ref,     # (1, C*H*W)    f32
    o_ref,         # (B, C*H*W)    f32
    *,
    seq_len, batch, n_patches, sigmoid_factor,
):
    F = seq_len * batch

    # ---- encoder: patch-embed conv as ONE big MXU matmul + ReLU ----
    emb = jnp.dot(patches_ref[...], w_emb_ref[...],
                  preferred_element_type=jnp.float32)          # (nP*F, E) f32
    emb = jnp.maximum(emb + b_emb_ref[...], 0.0)
    emb_b = emb.astype(jnp.bfloat16)

    # ---- encoder FC folded as a reduction over patches (stays in VMEM, no relayout) ----
    latent_dim = b_fc_ref.shape[-1]
    acc = jnp.zeros((F, latent_dim), jnp.float32)
    for p in range(n_patches):                                  # static unroll, aligned row slices
        acc = acc + jnp.dot(emb_b[p * F:(p + 1) * F, :], w_fc_ref[p],
                            preferred_element_type=jnp.float32)
    lat = acc + b_fc_ref[...]                                   # (F, D) f32
    lat_b = lat.astype(jnp.bfloat16)

    # ---- temporal LSTM: input projection hoisted out of the recurrence ----
    xw = [jnp.dot(lat_b, w_ih_ref[g], preferred_element_type=jnp.float32)
          for g in range(4)]                                    # 4 x (F, H) f32

    hid = w_hh_ref.shape[-1]
    h = jnp.zeros((batch, hid), jnp.float32)
    c = jnp.zeros((batch, hid), jnp.float32)
    for t in range(seq_len):                                    # static unroll over time
        h_b = h.astype(jnp.bfloat16)
        pre = [xw[g][t * batch:(t + 1) * batch, :]
               + jnp.dot(h_b, w_hh_ref[g], preferred_element_type=jnp.float32)
               + b_lstm_ref[g]
               for g in range(4)]
        i_g = jax.nn.sigmoid(pre[0])
        f_g = jax.nn.sigmoid(pre[1])
        g_g = jnp.tanh(pre[2])
        o_g = jax.nn.sigmoid(pre[3])
        c = f_g * c + i_g * g_g
        h = o_g * jnp.tanh(c)

    # ---- decoder: FC + scaled sigmoid (lane-dense 1024-wide output) ----
    y = jnp.dot(h.astype(jnp.bfloat16), w_dec_ref[...],
                preferred_element_type=jnp.float32) + b_dec_ref[...]
    o_ref[...] = jax.nn.sigmoid(sigmoid_factor * y)


# ----------------------------- model ------------------------------------------


class SpacialTemporalDecoderPallas:
    """Deterministic synthetic parameterization of SpacialTemporalDecoder (fused forward)."""

    def __init__(self, *, channels=4, img=16, patch=4, embed=32, latent=32,
                 hidden=32, sequence_len=8, sigmoid_factor=1.0, seed=0):
        self.C, self.IMG, self.P = channels, img, patch
        self.E, self.D, self.H = embed, latent, hidden
        self.sequence_len = sequence_len
        self.sigmoid_factor = float(sigmoid_factor)
        self.temporal_active = True      # config['temporal'] == 'LSTM'
        self.encoder_active = True
        self.decoder_active = True

        nP = (img // patch) ** 2
        self.nP = nP
        patch_dim = channels * patch * patch
        out_dim = channels * img * img
        self.out_dim = out_dim

        key = jax.random.PRNGKey(seed)
        ks = jax.random.split(key, 10)
        scale = 0.05
        f32, bf16 = jnp.float32, jnp.bfloat16

        # encoder: patch-embed conv (as matmul) + FC   (matmul weights in bf16, biases f32)
        self.w_embed = (scale * jax.random.normal(ks[0], (patch_dim, embed))).astype(bf16)
        self.b_embed = (scale * jax.random.normal(ks[1], (1, embed))).astype(f32)
        w_enc_fc = (scale * jax.random.normal(ks[2], (nP * embed, latent))).astype(f32)
        self.w_enc_fc = w_enc_fc.reshape(nP, embed, latent).astype(bf16)   # per-patch slabs
        self.b_enc_fc = (scale * jax.random.normal(ks[3], (1, latent))).astype(f32)

        # temporal: LSTM (gate order i, f, g, o like torch.nn.LSTM) — per-gate weight slabs
        w_ih = (scale * jax.random.normal(ks[4], (latent, 4 * hidden))).astype(f32)
        w_hh = (scale * jax.random.normal(ks[5], (hidden, 4 * hidden))).astype(f32)
        b_lstm = (scale * jax.random.normal(ks[6], (1, 4 * hidden))).astype(f32)
        self.w_ih = jnp.transpose(w_ih.reshape(latent, 4, hidden), (1, 0, 2)).astype(bf16)
        self.w_hh = jnp.transpose(w_hh.reshape(hidden, 4, hidden), (1, 0, 2)).astype(bf16)
        self.b_lstm = jnp.transpose(b_lstm.reshape(1, 4, hidden), (1, 0, 2)).astype(f32)

        # decoder: FC to full image
        self.w_dec = (scale * jax.random.normal(ks[7], (hidden, out_dim))).astype(bf16)
        self.b_dec = (scale * jax.random.normal(ks[8], (1, out_dim))).astype(f32)

    def _patchify_patch_major(self, frames):
        """(F, C, H, W) -> (nP*F, C*P*P): non-overlapping patches, channel-major features,
        rows ordered patch-major (row = p*F + f) so the in-kernel FC reduction uses aligned
        contiguous row slices."""
        F, C, Himg, Wimg = frames.shape
        P = self.P
        x = frames.reshape(F, C, Himg // P, P, Wimg // P, P)
        x = jnp.transpose(x, (2, 4, 0, 1, 3, 5))            # (hP, wP, F, C, P, P)
        return x.reshape((Himg // P) * (Wimg // P) * F, C * P * P)

    def __call__(self, x):
        # x: (S, B, C, H, W)
        residual = x[-1, ...]  # noqa: F841  (computed but unused, as in the reference)
        s, b, c, h, w = x.shape

        # wrapper-side glue only: patchify + bf16 cast; all compute is one pallas_call
        frames = x.reshape(s * b, c, h, w)
        patches = self._patchify_patch_major(frames).astype(jnp.bfloat16)   # (nP*s*b, C*P*P)

        kernel = functools.partial(
            _fused_forward_kernel,
            seq_len=s, batch=b, n_patches=self.nP,
            sigmoid_factor=self.sigmoid_factor)

        img = pl.pallas_call(
            kernel,
            out_shape=jax.ShapeDtypeStruct((b, self.out_dim), jnp.float32),
            grid=(1,),
            in_specs=[
                pl.BlockSpec(patches.shape, lambda i: (0, 0)),
                pl.BlockSpec(self.w_embed.shape, lambda i: (0, 0)),
                pl.BlockSpec(self.b_embed.shape, lambda i: (0, 0)),
                pl.BlockSpec(self.w_enc_fc.shape, lambda i: (0, 0, 0)),
                pl.BlockSpec(self.b_enc_fc.shape, lambda i: (0, 0)),
                pl.BlockSpec(self.w_ih.shape, lambda i: (0, 0, 0)),
                pl.BlockSpec(self.w_hh.shape, lambda i: (0, 0, 0)),
                pl.BlockSpec(self.b_lstm.shape, lambda i: (0, 0, 0)),
                pl.BlockSpec(self.w_dec.shape, lambda i: (0, 0)),
                pl.BlockSpec(self.b_dec.shape, lambda i: (0, 0)),
            ],
            out_specs=pl.BlockSpec((b, self.out_dim), lambda i: (0, 0)),
            compiler_params=pltpu.CompilerParams(
                dimension_semantics=("arbitrary",)),
        )(patches, self.w_embed, self.b_embed, self.w_enc_fc, self.b_enc_fc,
          self.w_ih, self.w_hh, self.b_lstm, self.w_dec, self.b_dec)

        return img.reshape(b, c, h, w)


# ----------------------------- main --------------------------------------------

if __name__ == "__main__":
    S, B, C, H, W = 8, 2, 4, 16, 16
    key = jax.random.PRNGKey(0)
    x = jax.random.uniform(key, (S, B, C, H, W), dtype=jnp.float32)

    model = SpacialTemporalDecoderPallas(channels=C, img=H, patch=4, embed=32,
                                         latent=32, hidden=32, sequence_len=S,
                                         sigmoid_factor=1.0, seed=0)
    out = model(x)
    out = jax.block_until_ready(out)
    assert out.shape == (B, C, H, W), out.shape
    assert jnp.all(jnp.isfinite(out))
    print("KERNEL_OK")
</pallas_src>

<mosaic_0001>
module attributes {stable_mosaic.version = 11 : i64} {
  func.func @_fused_forward_kernel(%arg0: i32, %arg1: memref<256x64xbf16, #tpu.memory_space<vmem>>, %arg2: memref<64x32xbf16, #tpu.memory_space<vmem>>, %arg3: memref<1x32xf32, #tpu.memory_space<vmem>>, %arg4: memref<16x32x32xbf16, #tpu.memory_space<vmem>>, %arg5: memref<1x32xf32, #tpu.memory_space<vmem>>, %arg6: memref<4x32x32xbf16, #tpu.memory_space<vmem>>, %arg7: memref<4x32x32xbf16, #tpu.memory_space<vmem>>, %arg8: memref<4x1x32xf32, #tpu.memory_space<vmem>>, %arg9: memref<32x1024xbf16, #tpu.memory_space<vmem>>, %arg10: memref<1x1024xf32, #tpu.memory_space<vmem>>, %arg11: memref<2x1024xf32, #tpu.memory_space<vmem>>) attributes {dimension_semantics = [#tpu.dimension_semantics<arbitrary>], iteration_bounds = array<i64: 1>, scalar_prefetch = 0 : i64, scratch_operands = 0 : i64, tpu.core_type = #tpu.core_type<tc>, window_params = [{pipeline_mode = #tpu.pipeline_mode<synchronous>, transform_indices = @transform_0, window_bounds = array<i64: 256, 64>}, {pipeline_mode = #tpu.pipeline_mode<synchronous>, transform_indices = @transform_1, window_bounds = array<i64: 64, 32>}, {pipeline_mode = #tpu.pipeline_mode<synchronous>, transform_indices = @transform_2, window_bounds = array<i64: 1, 32>}, {pipeline_mode = #tpu.pipeline_mode<synchronous>, transform_indices = @transform_3, window_bounds = array<i64: 16, 32, 32>}, {pipeline_mode = #tpu.pipeline_mode<synchronous>, transform_indices = @transform_4, window_bounds = array<i64: 1, 32>}, {pipeline_mode = #tpu.pipeline_mode<synchronous>, transform_indices = @transform_5, window_bounds = array<i64: 4, 32, 32>}, {pipeline_mode = #tpu.pipeline_mode<synchronous>, transform_indices = @transform_6, window_bounds = array<i64: 4, 32, 32>}, {pipeline_mode = #tpu.pipeline_mode<synchronous>, transform_indices = @transform_7, window_bounds = array<i64: 4, 1, 32>}, {pipeline_mode = #tpu.pipeline_mode<synchronous>, transform_indices = @transform_8, window_bounds = array<i64: 32, 1024>}, {pipeline_mode = #tpu.pipeline_mode<synchronous>, transform_indices = @transform_9, window_bounds = array<i64: 1, 1024>}, {pipeline_mode = #tpu.pipeline_mode<synchronous>, transform_indices = @transform_10, window_bounds = array<i64: 2, 1024>}]} {
    %c0 = arith.constant 0 : index
    %c0_0 = arith.constant 0 : index
    %0 = vector.load %arg1[%c0, %c0_0] : memref<256x64xbf16, #tpu.memory_space<vmem>>, vector<256x64xbf16>
    %c0_1 = arith.constant 0 : index
    %c0_2 = arith.constant 0 : index
    %1 = vector.load %arg2[%c0_1, %c0_2] : memref<64x32xbf16, #tpu.memory_space<vmem>>, vector<64x32xbf16>
    %cst = arith.constant dense<0.000000e+00> : vector<256x32xf32>
    %2 = tpu.matmul %0, %1, %cst {dimension_numbers = #tpu.dot_dimension_numbers<[1], [0], [0], [1], [0, 0, 1, 1], [], []>} : vector<256x64xbf16>, vector<64x32xbf16>, vector<256x32xf32> -> vector<256x32xf32>
    %c0_3 = arith.constant 0 : index
    %c0_4 = arith.constant 0 : index
    %3 = vector.load %arg3[%c0_3, %c0_4] : memref<1x32xf32, #tpu.memory_space<vmem>>, vector<1x32xf32>
    %4 = vector.broadcast %3 : vector<1x32xf32> to vector<256x32xf32>
    %5 = arith.addf %2, %4 : vector<256x32xf32>
    %cst_5 = arith.constant 0.000000e+00 : f32
    %6 = vector.broadcast %cst_5 : f32 to vector<256x32xf32>
    %7 = arith.maximumf %5, %6 : vector<256x32xf32>
    %8 = arith.truncf %7 : vector<256x32xf32> to vector<256x32xbf16>
    %cst_6 = arith.constant 0.000000e+00 : f32
    %9 = vector.broadcast %cst_6 : f32 to vector<16x32xf32>
    %10 = vector.extract_strided_slice %8 {offsets = [0, 0], sizes = [16, 32], strides = [1, 1]} : vector<256x32xbf16> to vector<16x32xbf16>
    %c0_7 = arith.constant 0 : index
    %c0_8 = arith.constant 0 : index
    %c0_9 = arith.constant 0 : index
    %11 = vector.load %arg4[%c0_7, %c0_8, %c0_9] : memref<16x32x32xbf16, #tpu.memory_space<vmem>>, vector<1x32x32xbf16>
    %12 = vector.shape_cast %11 : vector<1x32x32xbf16> to vector<32x32xbf16>
    %cst_10 = arith.constant dense<0.000000e+00> : vector<16x32xf32>
    %13 = tpu.matmul %10, %12, %cst_10 {dimension_numbers = #tpu.dot_dimension_numbers<[1], [0], [0], [1], [0, 0, 1, 1], [], []>} : vector<16x32xbf16>, vector<32x32xbf16>, vector<16x32xf32> -> vector<16x32xf32>
    %14 = arith.addf %9, %13 : vector<16x32xf32>
    %15 = vector.extract_strided_slice %8 {offsets = [16, 0], sizes = [16, 32], strides = [1, 1]} : vector<256x32xbf16> to vector<16x32xbf16>
    %c1 = arith.constant 1 : index
    %c0_11 = arith.constant 0 : index
    %c0_12 = arith.constant 0 : index
    %16 = vector.load %arg4[%c1, %c0_11, %c0_12] : memref<16x32x32xbf16, #tpu.memory_space<vmem>>, vector<1x32x32xbf16>
    %17 = vector.shape_cast %16 : vector<1x32x32xbf16> to vector<32x32xbf16>
    %cst_13 = arith.constant dense<0.000000e+00> : vector<16x32xf32>
    %18 = tpu.matmul %15, %17, %cst_13 {dimension_numbers = #tpu.dot_dimension_numbers<[1], [0], [0], [1], [0, 0, 1, 1], [], []>} : vector<16x32xbf16>, vector<32x32xbf16>, vector<16x32xf32> -> vector<16x32xf32>
    %19 = arith.addf %14, %18 : vector<16x32xf32>
    %20 = vector.extract_strided_slice %8 {offsets = [32, 0], sizes = [16, 32], strides = [1, 1]} : vector<256x32xbf16> to vector<16x32xbf16>
    %c2 = arith.constant 2 : index
    %c0_14 = arith.constant 0 : index
    %c0_15 = arith.constant 0 : index
    %21 = vector.load %arg4[%c2, %c0_14, %c0_15] : memref<16x32x32xbf16, #tpu.memory_space<vmem>>, vector<1x32x32xbf16>
    %22 = vector.shape_cast %21 : vector<1x32x32xbf16> to vector<32x32xbf16>
    %cst_16 = arith.constant dense<0.000000e+00> : vector<16x32xf32>
    %23 = tpu.matmul %20, %22, %cst_16 {dimension_numbers = #tpu.dot_dimension_numbers<[1], [0], [0], [1], [0, 0, 1, 1], [], []>} : vector<16x32xbf16>, vector<32x32xbf16>, vector<16x32xf32> -> vector<16x32xf32>
    %24 = arith.addf %19, %23 : vector<16x32xf32>
    %25 = vector.extract_strided_slice %8 {offsets = [48, 0], sizes = [16, 32], strides = [1, 1]} : vector<256x32xbf16> to vector<16x32xbf16>
    %c3 = arith.constant 3 : index
    %c0_17 = arith.constant 0 : index
    %c0_18 = arith.constant 0 : index
    %26 = vector.load %arg4[%c3, %c0_17, %c0_18] : memref<16x32x32xbf16, #tpu.memory_space<vmem>>, vector<1x32x32xbf16>
    %27 = vector.shape_cast %26 : vector<1x32x32xbf16> to vector<32x32xbf16>
    %cst_19 = arith.constant dense<0.000000e+00> : vector<16x32xf32>
    %28 = tpu.matmul %25, %27, %cst_19 {dimension_numbers = #tpu.dot_dimension_numbers<[1], [0], [0], [1], [0, 0, 1, 1], [], []>} : vector<16x32xbf16>, vector<32x32xbf16>, vector<16x32xf32> -> vector<16x32xf32>
    %29 = arith.addf %24, %28 : vector<16x32xf32>
    %30 = vector.extract_strided_slice %8 {offsets = [64, 0], sizes = [16, 32], strides = [1, 1]} : vector<256x32xbf16> to vector<16x32xbf16>
    %c4 = arith.constant 4 : index
    %c0_20 = arith.constant 0 : index
    %c0_21 = arith.constant 0 : index
    %31 = vector.load %arg4[%c4, %c0_20, %c0_21] : memref<16x32x32xbf16, #tpu.memory_space<vmem>>, vector<1x32x32xbf16>
    %32 = vector.shape_cast %31 : vector<1x32x32xbf16> to vector<32x32xbf16>
    %cst_22 = arith.constant dense<0.000000e+00> : vector<16x32xf32>
    %33 = tpu.matmul %30, %32, %cst_22 {dimension_numbers = #tpu.dot_dimension_numbers<[1], [0], [0], [1], [0, 0, 1, 1], [], []>} : vector<16x32xbf16>, vector<32x32xbf16>, vector<16x32xf32> -> vector<16x32xf32>
    %34 = arith.addf %29, %33 : vector<16x32xf32>
    %35 = vector.extract_strided_slice %8 {offsets = [80, 0], sizes = [16, 32], strides = [1, 1]} : vector<256x32xbf16> to vector<16x32xbf16>
    %c5 = arith.constant 5 : index
    %c0_23 = arith.constant 0 : index
    %c0_24 = arith.constant 0 : index
    %36 = vector.load %arg4[%c5, %c0_23, %c0_24] : memref<16x32x32xbf16, #tpu.memory_space<vmem>>, vector<1x32x32xbf16>
    %37 = vector.shape_cast %36 : vector<1x32x32xbf16> to vector<32x32xbf16>
    %cst_25 = arith.constant dense<0.000000e+00> : vector<16x32xf32>
    %38 = tpu.matmul %35, %37, %cst_25 {dimension_numbers = #tpu.dot_dimension_numbers<[1], [0], [0], [1], [0, 0, 1, 1], [], []>} : vector<16x32xbf16>, vector<32x32xbf16>, vector<16x32xf32> -> vector<16x32xf32>
    %39 = arith.addf %34, %38 : vector<16x32xf32>
    %40 = vector.extract_strided_slice %8 {offsets = [96, 0], sizes = [16, 32], strides = [1, 1]} : vector<256x32xbf16> to vector<16x32xbf16>
    %c6 = arith.constant 6 : index
    %c0_26 = arith.constant 0 : index
    %c0_27 = arith.constant 0 : index
    %41 = vector.load %arg4[%c6, %c0_26, %c0_27] : memref<16x32x32xbf16, #tpu.memory_space<vmem>>, vector<1x32x32xbf16>
    %42 = vector.shape_cast %41 : vector<1x32x32xbf16> to vector<32x32xbf16>
    %cst_28 = arith.constant dense<0.000000e+00> : vector<16x32xf32>
    %43 = tpu.matmul %40, %42, %cst_28 {dimension_numbers = #tpu.dot_dimension_numbers<[1], [0], [0], [1], [0, 0, 1, 1], [], []>} : vector<16x32xbf16>, vector<32x32xbf16>, vector<16x32xf32> -> vector<16x32xf32>
    %44 = arith.addf %39, %43 : vector<16x32xf32>
    %45 = vector.extract_strided_slice %8 {offsets = [112, 0], sizes = [16, 32], strides = [1, 1]} : vector<256x32xbf16> to vector<16x32xbf16>
    %c7 = arith.constant 7 : index
    %c0_29 = arith.constant 0 : index
    %c0_30 = arith.constant 0 : index
    %46 = vector.load %arg4[%c7, %c0_29, %c0_30] : memref<16x32x32xbf16, #tpu.memory_space<vmem>>, vector<1x32x32xbf16>
    %47 = vector.shape_cast %46 : vector<1x32x32xbf16> to vector<32x32xbf16>
    %cst_31 = arith.constant dense<0.000000e+00> : vector<16x32xf32>
    %48 = tpu.matmul %45, %47, %cst_31 {dimension_numbers = #tpu.dot_dimension_numbers<[1], [0], [0], [1], [0, 0, 1, 1], [], []>} : vector<16x32xbf16>, vector<32x32xbf16>, vector<16x32xf32> -> vector<16x32xf32>
    %49 = arith.addf %44, %48 : vector<16x32xf32>
    %50 = vector.extract_strided_slice %8 {offsets = [128, 0], sizes = [16, 32], strides = [1, 1]} : vector<256x32xbf16> to vector<16x32xbf16>
    %c8 = arith.constant 8 : index
    %c0_32 = arith.constant 0 : index
    %c0_33 = arith.constant 0 : index
    %51 = vector.load %arg4[%c8, %c0_32, %c0_33] : memref<16x32x32xbf16, #tpu.memory_space<vmem>>, vector<1x32x32xbf16>
    %52 = vector.shape_cast %51 : vector<1x32x32xbf16> to vector<32x32xbf16>
    %cst_34 = arith.constant dense<0.000000e+00> : vector<16x32xf32>
    %53 = tpu.matmul %50, %52, %cst_34 {dimension_numbers = #tpu.dot_dimension_numbers<[1], [0], [0], [1], [0, 0, 1, 1], [], []>} : vector<16x32xbf16>, vector<32x32xbf16>, vector<16x32xf32> -> vector<16x32xf32>
    %54 = arith.addf %49, %53 : vector<16x32xf32>
    %55 = vector.extract_strided_slice %8 {offsets = [144, 0], sizes = [16, 32], strides = [1, 1]} : vector<256x32xbf16> to vector<16x32xbf16>
    %c9 = arith.constant 9 : index
    %c0_35 = arith.constant 0 : index
    %c0_36 = arith.constant 0 : index
    %56 = vector.load %arg4[%c9, %c0_35, %c0_36] : memref<16x32x32xbf16, #tpu.memory_space<vmem>>, vector<1x32x32xbf16>
    %57 = vector.shape_cast %56 : vector<1x32x32xbf16> to vector<32x32xbf16>
    %cst_37 = arith.constant dense<0.000000e+00> : vector<16x32xf32>
    %58 = tpu.matmul %55, %57, %cst_37 {dimension_numbers = #tpu.dot_dimension_numbers<[1], [0], [0], [1], [0, 0, 1, 1], [], []>} : vector<16x32xbf16>, vector<32x32xbf16>, vector<16x32xf32> -> vector<16x32xf32>
    %59 = arith.addf %54, %58 : vector<16x32xf32>
    %60 = vector.extract_strided_slice %8 {offsets = [160, 0], sizes = [16, 32], strides = [1, 1]} : vector<256x32xbf16> to vector<16x32xbf16>
    %c10 = arith.constant 10 : index
    %c0_38 = arith.constant 0 : index
    %c0_39 = arith.constant 0 : index
    %61 = vector.load %arg4[%c10, %c0_38, %c0_39] : memref<16x32x32xbf16, #tpu.memory_space<vmem>>, vector<1x32x32xbf16>
    %62 = vector.shape_cast %61 : vector<1x32x32xbf16> to vector<32x32xbf16>
    %cst_40 = arith.constant dense<0.000000e+00> : vector<16x32xf32>
    %63 = tpu.matmul %60, %62, %cst_40 {dimension_numbers = #tpu.dot_dimension_numbers<[1], [0], [0], [1], [0, 0, 1, 1], [], []>} : vector<16x32xbf16>, vector<32x32xbf16>, vector<16x32xf32> -> vector<16x32xf32>
    %64 = arith.addf %59, %63 : vector<16x32xf32>
    %65 = vector.extract_strided_slice %8 {offsets = [176, 0], sizes = [16, 32], strides = [1, 1]} : vector<256x32xbf16> to vector<16x32xbf16>
    %c11 = arith.constant 11 : index
    %c0_41 = arith.constant 0 : index
    %c0_42 = arith.constant 0 : index
    %66 = vector.load %arg4[%c11, %c0_41, %c0_42] : memref<16x32x32xbf16, #tpu.memory_space<vmem>>, vector<1x32x32xbf16>
    %67 = vector.shape_cast %66 : vector<1x32x32xbf16> to vector<32x32xbf16>
    %cst_43 = arith.constant dense<0.000000e+00> : vector<16x32xf32>
    %68 = tpu.matmul %65, %67, %cst_43 {dimension_numbers = #tpu.dot_dimension_numbers<[1], [0], [0], [1], [0, 0, 1, 1], [], []>} : vector<16x32xbf16>, vector<32x32xbf16>, vector<16x32xf32> -> vector<16x32xf32>
    %69 = arith.addf %64, %68 : vector<16x32xf32>
    %70 = vector.extract_strided_slice %8 {offsets = [192, 0], sizes = [16, 32], strides = [1, 1]} : vector<256x32xbf16> to vector<16x32xbf16>
    %c12 = arith.constant 12 : index
    %c0_44 = arith.constant 0 : index
    %c0_45 = arith.constant 0 : index
    %71 = vector.load %arg4[%c12, %c0_44, %c0_45] : memref<16x32x32xbf16, #tpu.memory_space<vmem>>, vector<1x32x32xbf16>
    %72 = vector.shape_cast %71 : vector<1x32x32xbf16> to vector<32x32xbf16>
    %cst_46 = arith.constant dense<0.000000e+00> : vector<16x32xf32>
    %73 = tpu.matmul %70, %72, %cst_46 {dimension_numbers = #tpu.dot_dimension_numbers<[1], [0], [0], [1], [0, 0, 1, 1], [], []>} : vector<16x32xbf16>, vector<32x32xbf16>, vector<16x32xf32> -> vector<16x32xf32>
    %74 = arith.addf %69, %73 : vector<16x32xf32>
    %75 = vector.extract_strided_slice %8 {offsets = [208, 0], sizes = [16, 32], strides = [1, 1]} : vector<256x32xbf16> to vector<16x32xbf16>
    %c13 = arith.constant 13 : index
    %c0_47 = arith.constant 0 : index
    %c0_48 = arith.constant 0 : index
    %76 = vector.load %arg4[%c13, %c0_47, %c0_48] : memref<16x32x32xbf16, #tpu.memory_space<vmem>>, vector<1x32x32xbf16>
    %77 = vector.shape_cast %76 : vector<1x32x32xbf16> to vector<32x32xbf16>
    %cst_49 = arith.constant dense<0.000000e+00> : vector<16x32xf32>
    %78 = tpu.matmul %75, %77, %cst_49 {dimension_numbers = #tpu.dot_dimension_numbers<[1], [0], [0], [1], [0, 0, 1, 1], [], []>} : vector<16x32xbf16>, vector<32x32xbf16>, vector<16x32xf32> -> vector<16x32xf32>
    %79 = arith.addf %74, %78 : vector<16x32xf32>
    %80 = vector.extract_strided_slice %8 {offsets = [224, 0], sizes = [16, 32], strides = [1, 1]} : vector<256x32xbf16> to vector<16x32xbf16>
    %c14 = arith.constant 14 : index
    %c0_50 = arith.constant 0 : index
    %c0_51 = arith.constant 0 : index
    %81 = vector.load %arg4[%c14, %c0_50, %c0_51] : memref<16x32x32xbf16, #tpu.memory_space<vmem>>, vector<1x32x32xbf16>
    %82 = vector.shape_cast %81 : vector<1x32x32xbf16> to vector<32x32xbf16>
    %cst_52 = arith.constant dense<0.000000e+00> : vector<16x32xf32>
    %83 = tpu.matmul %80, %82, %cst_52 {dimension_numbers = #tpu.dot_dimension_numbers<[1], [0], [0], [1], [0, 0, 1, 1], [], []>} : vector<16x32xbf16>, vector<32x32xbf16>, vector<16x32xf32> -> vector<16x32xf32>
    %84 = arith.addf %79, %83 : vector<16x32xf32>
    %85 = vector.extract_strided_slice %8 {offsets = [240, 0], sizes = [16, 32], strides = [1, 1]} : vector<256x32xbf16> to vector<16x32xbf16>
    %c15 = arith.constant 15 : index
    %c0_53 = arith.constant 0 : index
    %c0_54 = arith.constant 0 : index
    %86 = vector.load %arg4[%c15, %c0_53, %c0_54] : memref<16x32x32xbf16, #tpu.memory_space<vmem>>, vector<1x32x32xbf16>
    %87 = vector.shape_cast %86 : vector<1x32x32xbf16> to vector<32x32xbf16>
    %cst_55 = arith.constant dense<0.000000e+00> : vector<16x32xf32>
    %88 = tpu.matmul %85, %87, %cst_55 {dimension_numbers = #tpu.dot_dimension_numbers<[1], [0], [0], [1], [0, 0, 1, 1], [], []>} : vector<16x32xbf16>, vector<32x32xbf16>, vector<16x32xf32> -> vector<16x32xf32>
    %89 = arith.addf %84, %88 : vector<16x32xf32>
    %c0_56 = arith.constant 0 : index
    %c0_57 = arith.constant 0 : index
    %90 = vector.load %arg5[%c0_56, %c0_57] : memref<1x32xf32, #tpu.memory_space<vmem>>, vector<1x32xf32>
    %91 = vector.broadcast %90 : vector<1x32xf32> to vector<16x32xf32>
    %92 = arith.addf %89, %91 : vector<16x32xf32>
    %93 = arith.truncf %92 : vector<16x32xf32> to vector<16x32xbf16>
    %c0_58 = arith.constant 0 : index
    %c0_59 = arith.constant 0 : index
    %c0_60 = arith.constant 0 : index
    %94 = vector.load %arg6[%c0_58, %c0_59, %c0_60] : memref<4x32x32xbf16, #tpu.memory_space<vmem>>, vector<1x32x32xbf16>
    %95 = vector.shape_cast %94 : vector<1x32x32xbf16> to vector<32x32xbf16>
    %cst_61 = arith.constant dense<0.000000e+00> : vector<16x32xf32>
    %96 = tpu.matmul %93, %95, %cst_61 {dimension_numbers = #tpu.dot_dimension_numbers<[1], [0], [0], [1], [0, 0, 1, 1], [], []>} : vector<16x32xbf16>, vector<32x32xbf16>, vector<16x32xf32> -> vector<16x32xf32>
    %c1_62 = arith.constant 1 : index
    %c0_63 = arith.constant 0 : index
    %c0_64 = arith.constant 0 : index
    %97 = vector.load %arg6[%c1_62, %c0_63, %c0_64] : memref<4x32x32xbf16, #tpu.memory_space<vmem>>, vector<1x32x32xbf16>
    %98 = vector.shape_cast %97 : vector<1x32x32xbf16> to vector<32x32xbf16>
    %cst_65 = arith.constant dense<0.000000e+00> : vector<16x32xf32>
    %99 = tpu.matmul %93, %98, %cst_65 {dimension_numbers = #tpu.dot_dimension_numbers<[1], [0], [0], [1], [0, 0, 1, 1], [], []>} : vector<16x32xbf16>, vector<32x32xbf16>, vector<16x32xf32> -> vector<16x32xf32>
    %c2_66 = arith.constant 2 : index
    %c0_67 = arith.constant 0 : index
    %c0_68 = arith.constant 0 : index
    %100 = vector.load %arg6[%c2_66, %c0_67, %c0_68] : memref<4x32x32xbf16, #tpu.memory_space<vmem>>, vector<1x32x32xbf16>
    %101 = vector.shape_cast %100 : vector<1x32x32xbf16> to vector<32x32xbf16>
    %cst_69 = arith.constant dense<0.000000e+00> : vector<16x32xf32>
    %102 = tpu.matmul %93, %101, %cst_69 {dimension_numbers = #tpu.dot_dimension_numbers<[1], [0], [0], [1], [0, 0, 1, 1], [], []>} : vector<16x32xbf16>, vector<32x32xbf16>, vector<16x32xf32> -> vector<16x32xf32>
    %c3_70 = arith.constant 3 : index
    %c0_71 = arith.constant 0 : index
    %c0_72 = arith.constant 0 : index
    %103 = vector.load %arg6[%c3_70, %c0_71, %c0_72] : memref<4x32x32xbf16, #tpu.memory_space<vmem>>, vector<1x32x32xbf16>
    %104 = vector.shape_cast %103 : vector<1x32x32xbf16> to vector<32x32xbf16>
    %cst_73 = arith.constant dense<0.000000e+00> : vector<16x32xf32>
    %105 = tpu.matmul %93, %104, %cst_73 {dimension_numbers = #tpu.dot_dimension_numbers<[1], [0], [0], [1], [0, 0, 1, 1], [], []>} : vector<16x32xbf16>, vector<32x32xbf16>, vector<16x32xf32> -> vector<16x32xf32>
    %cst_74 = arith.constant 0.000000e+00 : f32
    %106 = vector.broadcast %cst_74 : f32 to vector<2x32xf32>
    %cst_75 = arith.constant 0.000000e+00 : f32
    %107 = vector.broadcast %cst_75 : f32 to vector<2x32xf32>
    %108 = arith.truncf %106 : vector<2x32xf32> to vector<2x32xbf16>
    %109 = vector.extract_strided_slice %96 {offsets = [0, 0], sizes = [2, 32], strides = [1, 1]} : vector<16x32xf32> to vector<2x32xf32>
    %c0_76 = arith.constant 0 : index
    %c0_77 = arith.constant 0 : index
    %c0_78 = arith.constant 0 : index
    %110 = vector.load %arg7[%c0_76, %c0_77, %c0_78] : memref<4x32x32xbf16, #tpu.memory_space<vmem>>, vector<1x32x32xbf16>
    %111 = vector.shape_cast %110 : vector<1x32x32xbf16> to vector<32x32xbf16>
    %cst_79 = arith.constant dense<0.000000e+00> : vector<2x32xf32>
    %112 = tpu.matmul %108, %111, %cst_79 {dimension_numbers = #tpu.dot_dimension_numbers<[1], [0], [0], [1], [0, 0, 1, 1], [], []>} : vector<2x32xbf16>, vector<32x32xbf16>, vector<2x32xf32> -> vector<2x32xf32>
    %113 = arith.addf %109, %112 : vector<2x32xf32>
    %c0_80 = arith.constant 0 : index
    %c0_81 = arith.constant 0 : index
    %c0_82 = arith.constant 0 : index
    %114 = vector.load %arg8[%c0_80, %c0_81, %c0_82] : memref<4x1x32xf32, #tpu.memory_space<vmem>>, vector<1x1x32xf32>
    %115 = vector.shape_cast %114 : vector<1x1x32xf32> to vector<1x32xf32>
    %116 = vector.broadcast %115 : vector<1x32xf32> to vector<2x32xf32>
    %117 = arith.addf %113, %116 : vector<2x32xf32>
    %118 = vector.extract_strided_slice %99 {offsets = [0, 0], sizes = [2, 32], strides = [1, 1]} : vector<16x32xf32> to vector<2x32xf32>
    %c1_83 = arith.constant 1 : index
    %c0_84 = arith.constant 0 : index
    %c0_85 = arith.constant 0 : index
    %119 = vector.load %arg7[%c1_83, %c0_84, %c0_85] : memref<4x32x32xbf16, #tpu.memory_space<vmem>>, vector<1x32x32xbf16>
    %120 = vector.shape_cast %119 : vector<1x32x32xbf16> to vector<32x32xbf16>
    %cst_86 = arith.constant dense<0.000000e+00> : vector<2x32xf32>
    %121 = tpu.matmul %108, %120, %cst_86 {dimension_numbers = #tpu.dot_dimension_numbers<[1], [0], [0], [1], [0, 0, 1, 1], [], []>} : vector<2x32xbf16>, vector<32x32xbf16>, vector<2x32xf32> -> vector<2x32xf32>
    %122 = arith.addf %118, %121 : vector<2x32xf32>
    %c1_87 = arith.constant 1 : index
    %c0_88 = arith.constant 0 : index
    %c0_89 = arith.constant 0 : index
    %123 = vector.load %arg8[%c1_87, %c0_88, %c0_89] : memref<4x1x32xf32, #tpu.memory_space<vmem>>, vector<1x1x32xf32>
    %124 = vector.shape_cast %123 : vector<1x1x32xf32> to vector<1x32xf32>
    %125 = vector.broadcast %124 : vector<1x32xf32> to vector<2x32xf32>
    %126 = arith.addf %122, %125 : vector<2x32xf32>
    %127 = vector.extract_strided_slice %102 {offsets = [0, 0], sizes = [2, 32], strides = [1, 1]} : vector<16x32xf32> to vector<2x32xf32>
    %c2_90 = arith.constant 2 : index
    %c0_91 = arith.constant 0 : index
    %c0_92 = arith.constant 0 : index
    %128 = vector.load %arg7[%c2_90, %c0_91, %c0_92] : memref<4x32x32xbf16, #tpu.memory_space<vmem>>, vector<1x32x32xbf16>
    %129 = vector.shape_cast %128 : vector<1x32x32xbf16> to vector<32x32xbf16>
    %cst_93 = arith.constant dense<0.000000e+00> : vector<2x32xf32>
    %130 = tpu.matmul %108, %129, %cst_93 {dimension_numbers = #tpu.dot_dimension_numbers<[1], [0], [0], [1], [0, 0, 1, 1], [], []>} : vector<2x32xbf16>, vector<32x32xbf16>, vector<2x32xf32> -> vector<2x32xf32>
    %131 = arith.addf %127, %130 : vector<2x32xf32>
    %c2_94 = arith.constant 2 : index
    %c0_95 = arith.constant 0 : index
    %c0_96 = arith.constant 0 : index
    %132 = vector.load %arg8[%c2_94, %c0_95, %c0_96] : memref<4x1x32xf32, #tpu.memory_space<vmem>>, vector<1x1x32xf32>
    %133 = vector.shape_cast %132 : vector<1x1x32xf32> to vector<1x32xf32>
    %134 = vector.broadcast %133 : vector<1x32xf32> to vector<2x32xf32>
    %135 = arith.addf %131, %134 : vector<2x32xf32>
    %136 = vector.extract_strided_slice %105 {offsets = [0, 0], sizes = [2, 32], strides = [1, 1]} : vector<16x32xf32> to vector<2x32xf32>
    %c3_97 = arith.constant 3 : index
    %c0_98 = arith.constant 0 : index
    %c0_99 = arith.constant 0 : index
    %137 = vector.load %arg7[%c3_97, %c0_98, %c0_99] : memref<4x32x32xbf16, #tpu.memory_space<vmem>>, vector<1x32x32xbf16>
    %138 = vector.shape_cast %137 : vector<1x32x32xbf16> to vector<32x32xbf16>
    %cst_100 = arith.constant dense<0.000000e+00> : vector<2x32xf32>
    %139 = tpu.matmul %108, %138, %cst_100 {dimension_numbers = #tpu.dot_dimension_numbers<[1], [0], [0], [1], [0, 0, 1, 1], [], []>} : vector<2x32xbf16>, vector<32x32xbf16>, vector<2x32xf32> -> vector<2x32xf32>
    %140 = arith.addf %136, %139 : vector<2x32xf32>
    %c3_101 = arith.constant 3 : index
    %c0_102 = arith.constant 0 : index
    %c0_103 = arith.constant 0 : index
    %141 = vector.load %arg8[%c3_101, %c0_102, %c0_103] : memref<4x1x32xf32, #tpu.memory_space<vmem>>, vector<1x1x32xf32>
    %142 = vector.shape_cast %141 : vector<1x1x32xf32> to vector<1x32xf32>
    %143 = vector.broadcast %142 : vector<1x32xf32> to vector<2x32xf32>
    %144 = arith.addf %140, %143 : vector<2x32xf32>
    %145 = arith.negf %117 : vector<2x32xf32>
    %146 = math.exp %145 : vector<2x32xf32>
    %cst_104 = arith.constant 1.000000e+00 : f32
    %147 = vector.broadcast %cst_104 : f32 to vector<2x32xf32>
    %148 = arith.addf %147, %146 : vector<2x32xf32>
    %149 = arith.divf %147, %148 : vector<2x32xf32>
    %150 = arith.negf %126 : vector<2x32xf32>
    %151 = math.exp %150 : vector<2x32xf32>
    %cst_105 = arith.constant 1.000000e+00 : f32
    %152 = vector.broadcast %cst_105 : f32 to vector<2x32xf32>
    %153 = arith.addf %152, %151 : vector<2x32xf32>
    %154 = arith.divf %152, %153 : vector<2x32xf32>
    %155 = math.tanh %135 : vector<2x32xf32>
    %156 = arith.negf %144 : vector<2x32xf32>
    %157 = math.exp %156 : vector<2x32xf32>
    %cst_106 = arith.constant 1.000000e+00 : f32
    %158 = vector.broadcast %cst_106 : f32 to vector<2x32xf32>
    %159 = arith.addf %158, %157 : vector<2x32xf32>
    %160 = arith.divf %158, %159 : vector<2x32xf32>
    %161 = arith.mulf %154, %107 : vector<2x32xf32>
    %162 = arith.mulf %149, %155 : vector<2x32xf32>
    %163 = arith.addf %161, %162 : vector<2x32xf32>
    %164 = math.tanh %163 : vector<2x32xf32>
    %165 = arith.mulf %160, %164 : vector<2x32xf32>
    %166 = arith.truncf %165 : vector<2x32xf32> to vector<2x32xbf16>
    %167 = vector.extract_strided_slice %96 {offsets = [2, 0], sizes = [2, 32], strides = [1, 1]} : vector<16x32xf32> to vector<2x32xf32>
    %c0_107 = arith.constant 0 : index
    %c0_108 = arith.constant 0 : index
    %c0_109 = arith.constant 0 : index
    %168 = vector.load %arg7[%c0_107, %c0_108, %c0_109] : memref<4x32x32xbf16, #tpu.memory_space<vmem>>, vector<1x32x32xbf16>
    %169 = vector.shape_cast %168 : vector<1x32x32xbf16> to vector<32x32xbf16>
    %cst_110 = arith.constant dense<0.000000e+00> : vector<2x32xf32>
    %170 = tpu.matmul %166, %169, %cst_110 {dimension_numbers = #tpu.dot_dimension_numbers<[1], [0], [0], [1], [0, 0, 1, 1], [], []>} : vector<2x32xbf16>, vector<32x32xbf16>, vector<2x32xf32> -> vector<2x32xf32>
    %171 = arith.addf %167, %170 : vector<2x32xf32>
    %c0_111 = arith.constant 0 : index
    %c0_112 = arith.constant 0 : index
    %c0_113 = arith.constant 0 : index
    %172 = vector.load %arg8[%c0_111, %c0_112, %c0_113] : memref<4x1x32xf32, #tpu.memory_space<vmem>>, vector<1x1x32xf32>
    %173 = vector.shape_cast %172 : vector<1x1x32xf32> to vector<1x32xf32>
    %174 = vector.broadcast %173 : vector<1x32xf32> to vector<2x32xf32>
    %175 = arith.addf %171, %174 : vector<2x32xf32>
    %176 = vector.extract_strided_slice %99 {offsets = [2, 0], sizes = [2, 32], strides = [1, 1]} : vector<16x32xf32> to vector<2x32xf32>
    %c1_114 = arith.constant 1 : index
    %c0_115 = arith.constant 0 : index
    %c0_116 = arith.constant 0 : index
    %177 = vector.load %arg7[%c1_114, %c0_115, %c0_116] : memref<4x32x32xbf16, #tpu.memory_space<vmem>>, vector<1x32x32xbf16>
    %178 = vector.shape_cast %177 : vector<1x32x32xbf16> to vector<32x32xbf16>
    %cst_117 = arith.constant dense<0.000000e+00> : vector<2x32xf32>
    %179 = tpu.matmul %166, %178, %cst_117 {dimension_numbers = #tpu.dot_dimension_numbers<[1], [0], [0], [1], [0, 0, 1, 1], [], []>} : vector<2x32xbf16>, vector<32x32xbf16>, vector<2x32xf32> -> vector<2x32xf32>
    %180 = arith.addf %176, %179 : vector<2x32xf32>
    %c1_118 = arith.constant 1 : index
    %c0_119 = arith.constant 0 : index
    %c0_120 = arith.constant 0 : index
    %181 = vector.load %arg8[%c1_118, %c0_119, %c0_120] : memref<4x1x32xf32, #tpu.memory_space<vmem>>, vector<1x1x32xf32>
    %182 = vector.shape_cast %181 : vector<1x1x32xf32> to vector<1x32xf32>
    %183 = vector.broadcast %182 : vector<1x32xf32> to vector<2x32xf32>
    %184 = arith.addf %180, %183 : vector<2x32xf32>
    %185 = vector.extract_strided_slice %102 {offsets = [2, 0], sizes = [2, 32], strides = [1, 1]} : vector<16x32xf32> to vector<2x32xf32>
    %c2_121 = arith.constant 2 : index
    %c0_122 = arith.constant 0 : index
    %c0_123 = arith.constant 0 : index
    %186 = vector.load %arg7[%c2_121, %c0_122, %c0_123] : memref<4x32x32xbf16, #tpu.memory_space<vmem>>, vector<1x32x32xbf16>
    %187 = vector.shape_cast %186 : vector<1x32x32xbf16> to vector<32x32xbf16>
    %cst_124 = arith.constant dense<0.000000e+00> : vector<2x32xf32>
    %188 = tpu.matmul %166, %187, %cst_124 {dimension_numbers = #tpu.dot_dimension_numbers<[1], [0], [0], [1], [0, 0, 1, 1], [], []>} : vector<2x32xbf16>, vector<32x32xbf16>, vector<2x32xf32> -> vector<2x32xf32>
    %189 = arith.addf %185, %188 : vector<2x32xf32>
    %c2_125 = arith.constant 2 : index
    %c0_126 = arith.constant 0 : index
    %c0_127 = arith.constant 0 : index
    %190 = vector.load %arg8[%c2_125, %c0_126, %c0_127] : memref<4x1x32xf32, #tpu.memory_space<vmem>>, vector<1x1x32xf32>
    %191 = vector.shape_cast %190 : vector<1x1x32xf32> to vector<1x32xf32>
    %192 = vector.broadcast %191 : vector<1x32xf32> to vector<2x32xf32>
    %193 = arith.addf %189, %192 : vector<2x32xf32>
    %194 = vector.extract_strided_slice %105 {offsets = [2, 0], sizes = [2, 32], strides = [1, 1]} : vector<16x32xf32> to vector<2x32xf32>
    %c3_128 = arith.constant 3 : index
    %c0_129 = arith.constant 0 : index
    %c0_130 = arith.constant 0 : index
    %195 = vector.load %arg7[%c3_128, %c0_129, %c0_130] : memref<4x32x32xbf16, #tpu.memory_space<vmem>>, vector<1x32x32xbf16>
    %196 = vector.shape_cast %195 : vector<1x32x32xbf16> to vector<32x32xbf16>
    %cst_131 = arith.constant dense<0.000000e+00> : vector<2x32xf32>
    %197 = tpu.matmul %166, %196, %cst_131 {dimension_numbers = #tpu.dot_dimension_numbers<[1], [0], [0], [1], [0, 0, 1, 1], [], []>} : vector<2x32xbf16>, vector<32x32xbf16>, vector<2x32xf32> -> vector<2x32xf32>
    %198 = arith.addf %194, %197 : vector<2x32xf32>
    %c3_132 = arith.constant 3 : index
    %c0_133 = arith.constant 0 : index
    %c0_134 = arith.constant 0 : index
    %199 = vector.load %arg8[%c3_132, %c0_133, %c0_134] : memref<4x1x32xf32, #tpu.memory_space<vmem>>, vector<1x1x32xf32>
    %200 = vector.shape_cast %199 : vector<1x1x32xf32> to vector<1x32xf32>
    %201 = vector.broadcast %200 : vector<1x32xf32> to vector<2x32xf32>
    %202 = arith.addf %198, %201 : vector<2x32xf32>
    %203 = arith.negf %175 : vector<2x32xf32>
    %204 = math.exp %203 : vector<2x32xf32>
    %cst_135 = arith.constant 1.000000e+00 : f32
    %205 = vector.broadcast %cst_135 : f32 to vector<2x32xf32>
    %206 = arith.addf %205, %204 : vector<2x32xf32>
    %207 = arith.divf %205, %206 : vector<2x32xf32>
    %208 = arith.negf %184 : vector<2x32xf32>
    %209 = math.exp %208 : vector<2x32xf32>
    %cst_136 = arith.constant 1.000000e+00 : f32
    %210 = vector.broadcast %cst_136 : f32 to vector<2x32xf32>
    %211 = arith.addf %210, %209 : vector<2x32xf32>
    %212 = arith.divf %210, %211 : vector<2x32xf32>
    %213 = math.tanh %193 : vector<2x32xf32>
    %214 = arith.negf %202 : vector<2x32xf32>
    %215 = math.exp %214 : vector<2x32xf32>
    %cst_137 = arith.constant 1.000000e+00 : f32
    %216 = vector.broadcast %cst_137 : f32 to vector<2x32xf32>
    %217 = arith.addf %216, %215 : vector<2x32xf32>
    %218 = arith.divf %216, %217 : vector<2x32xf32>
    %219 = arith.mulf %212, %163 : vector<2x32xf32>
    %220 = arith.mulf %207, %213 : vector<2x32xf32>
    %221 = arith.addf %219, %220 : vector<2x32xf32>
    %222 = math.tanh %221 : vector<2x32xf32>
    %223 = arith.mulf %218, %222 : vector<2x32xf32>
    %224 = arith.truncf %223 : vector<2x32xf32> to vector<2x32xbf16>
    %225 = vector.extract_strided_slice %96 {offsets = [4, 0], sizes = [2, 32], strides = [1, 1]} : vector<16x32xf32> to vector<2x32xf32>
    %c0_138 = arith.constant 0 : index
    %c0_139 = arith.constant 0 : index
    %c0_140 = arith.constant 0 : index
    %226 = vector.load %arg7[%c0_138, %c0_139, %c0_140] : memref<4x32x32xbf16, #tpu.memory_space<vmem>>, vector<1x32x32xbf16>
    %227 = vector.shape_cast %226 : vector<1x32x32xbf16> to vector<32x32xbf16>
    %cst_141 = arith.constant dense<0.000000e+00> : vector<2x32xf32>
    %228 = tpu.matmul %224, %227, %cst_141 {dimension_numbers = #tpu.dot_dimension_numbers<[1], [0], [0], [1], [0, 0, 1, 1], [], []>} : vector<2x32xbf16>, vector<32x32xbf16>, vector<2x32xf32> -> vector<2x32xf32>
    %229 = arith.addf %225, %228 : vector<2x32xf32>
    %c0_142 = arith.constant 0 : index
    %c0_143 = arith.constant 0 : index
    %c0_144 = arith.constant 0 : index
    %230 = vector.load %arg8[%c0_142, %c0_143, %c0_144] : memref<4x1x32xf32, #tpu.memory_space<vmem>>, vector<1x1x32xf32>
    %231 = vector.shape_cast %230 : vector<1x1x32xf32> to vector<1x32xf32>
    %232 = vector.broadcast %231 : vector<1x32xf32> to vector<2x32xf32>
    %233 = arith.addf %229, %232 : vector<2x32xf32>
    %234 = vector.extract_strided_slice %99 {offsets = [4, 0], sizes = [2, 32], strides = [1, 1]} : vector<16x32xf32> to vector<2x32xf32>
    %c1_145 = arith.constant 1 : index
    %c0_146 = arith.constant 0 : index
    %c0_147 = arith.constant 0 : index
    %235 = vector.load %arg7[%c1_145, %c0_146, %c0_147] : memref<4x32x32xbf16, #tpu.memory_space<vmem>>, vector<1x32x32xbf16>
    %236 = vector.shape_cast %235 : vector<1x32x32xbf16> to vector<32x32xbf16>
    %cst_148 = arith.constant dense<0.000000e+00> : vector<2x32xf32>
    %237 = tpu.matmul %224, %236, %cst_148 {dimension_numbers = #tpu.dot_dimension_numbers<[1], [0], [0], [1], [0, 0, 1, 1], [], []>} : vector<2x32xbf16>, vector<32x32xbf16>, vector<2x32xf32> -> vector<2x32xf32>
    %238 = arith.addf %234, %237 : vector<2x32xf32>
    %c1_149 = arith.constant 1 : index
    %c0_150 = arith.constant 0 : index
    %c0_151 = arith.constant 0 : index
    %239 = vector.load %arg8[%c1_149, %c0_150, %c0_151] : memref<4x1x32xf32, #tpu.memory_space<vmem>>, vector<1x1x32xf32>
    %240 = vector.shape_cast %239 : vector<1x1x32xf32> to vector<1x32xf32>
    %241 = vector.broadcast %240 : vector<1x32xf32> to vector<2x32xf32>
    %242 = arith.addf %238, %241 : vector<2x32xf32>
    %243 = vector.extract_strided_slice %102 {offsets = [4, 0], sizes = [2, 32], strides = [1, 1]} : vector<16x32xf32> to vector<2x32xf32>
    %c2_152 = arith.constant 2 : index
    %c0_153 = arith.constant 0 : index
    %c0_154 = arith.constant 0 : index
    %244 = vector.load %arg7[%c2_152, %c0_153, %c0_154] : memref<4x32x32xbf16, #tpu.memory_space<vmem>>, vector<1x32x32xbf16>
    %245 = vector.shape_cast %244 : vector<1x32x32xbf16> to vector<32x32xbf16>
    %cst_155 = arith.constant dense<0.000000e+00> : vector<2x32xf32>
    %246 = tpu.matmul %224, %245, %cst_155 {dimension_numbers = #tpu.dot_dimension_numbers<[1], [0], [0], [1], [0, 0, 1, 1], [], []>} : vector<2x32xbf16>, vector<32x32xbf16>, vector<2x32xf32> -> vector<2x32xf32>
    %247 = arith.addf %243, %246 : vector<2x32xf32>
    %c2_156 = arith.constant 2 : index
    %c0_157 = arith.constant 0 : index
    %c0_158 = arith.constant 0 : index
    %248 = vector.load %arg8[%c2_156, %c0_157, %c0_158] : memref<4x1x32xf32, #tpu.memory_space<vmem>>, vector<1x1x32xf32>
    %249 = vector.shape_cast %248 : vector<1x1x32xf32> to vector<1x32xf32>
    %250 = vector.broadcast %249 : vector<1x32xf32> to vector<2x32xf32>
    %251 = arith.addf %247, %250 : vector<2x32xf32>
    %252 = vector.extract_strided_slice %105 {offsets = [4, 0], sizes = [2, 32], strides = [1, 1]} : vector<16x32xf32> to vector<2x32xf32>
    %c3_159 = arith.constant 3 : index
    %c0_160 = arith.constant 0 : index
    %c0_161 = arith.constant 0 : index
    %253 = vector.load %arg7[%c3_159, %c0_160, %c0_161] : memref<4x32x32xbf16, #tpu.memory_space<vmem>>, vector<1x32x32xbf16>
    %254 = vector.shape_cast %253 : vector<1x32x32xbf16> to vector<32x32xbf16>
    %cst_162 = arith.constant dense<0.000000e+00> : vector<2x32xf32>
    %255 = tpu.matmul %224, %254, %cst_162 {dimension_numbers = #tpu.dot_dimension_numbers<[1], [0], [0], [1], [0, 0, 1, 1], [], []>} : vector<2x32xbf16>, vector<32x32xbf16>, vector<2x32xf32> -> vector<2x32xf32>
    %256 = arith.addf %252, %255 : vector<2x32xf32>
    %c3_163 = arith.constant 3 : index
    %c0_164 = arith.constant 0 : index
    %c0_165 = arith.constant 0 : index
    %257 = vector.load %arg8[%c3_163, %c0_164, %c0_165] : memref<4x1x32xf32, #tpu.memory_space<vmem>>, vector<1x1x32xf32>
    %258 = vector.shape_cast %257 : vector<1x1x32xf32> to vector<1x32xf32>
    %259 = vector.broadcast %258 : vector<1x32xf32> to vector<2x32xf32>
    %260 = arith.addf %256, %259 : vector<2x32xf32>
    %261 = arith.negf %233 : vector<2x32xf32>
    %262 = math.exp %261 : vector<2x32xf32>
    %cst_166 = arith.constant 1.000000e+00 : f32
    %263 = vector.broadcast %cst_166 : f32 to vector<2x32xf32>
    %264 = arith.addf %263, %262 : vector<2x32xf32>
    %265 = arith.divf %263, %264 : vector<2x32xf32>
    %266 = arith.negf %242 : vector<2x32xf32>
    %267 = math.exp %266 : vector<2x32xf32>
    %cst_167 = arith.constant 1.000000e+00 : f32
    %268 = vector.broadcast %cst_167 : f32 to vector<2x32xf32>
    %269 = arith.addf %268, %267 : vector<2x32xf32>
    %270 = arith.divf %268, %269 : vector<2x32xf32>
    %271 = math.tanh %251 : vector<2x32xf32>
    %272 = arith.negf %260 : vector<2x32xf32>
    %273 = math.exp %272 : vector<2x32xf32>
    %cst_168 = arith.constant 1.000000e+00 : f32
    %274 = vector.broadcast %cst_168 : f32 to vector<2x32xf32>
    %275 = arith.addf %274, %273 : vector<2x32xf32>
    %276 = arith.divf %274, %275 : vector<2x32xf32>
    %277 = arith.mulf %270, %221 : vector<2x32xf32>
    %278 = arith.mulf %265, %271 : vector<2x32xf32>
    %279 = arith.addf %277, %278 : vector<2x32xf32>
    %280 = math.tanh %279 : vector<2x32xf32>
    %281 = arith.mulf %276, %280 : vector<2x32xf32>
    %282 = arith.truncf %281 : vector<2x32xf32> to vector<2x32xbf16>
    %283 = vector.extract_strided_slice %96 {offsets = [6, 0], sizes = [2, 32], strides = [1, 1]} : vector<16x32xf32> to vector<2x32xf32>
    %c0_169 = arith.constant 0 : index
    %c0_170 = arith.constant 0 : index
    %c0_171 = arith.constant 0 : index
    %284 = vector.load %arg7[%c0_169, %c0_170, %c0_171] : memref<4x32x32xbf16, #tpu.memory_space<vmem>>, vector<1x32x32xbf16>
    %285 = vector.shape_cast %284 : vector<1x32x32xbf16> to vector<32x32xbf16>
    %cst_172 = arith.constant dense<0.000000e+00> : vector<2x32xf32>
    %286 = tpu.matmul %282, %285, %cst_172 {dimension_numbers = #tpu.dot_dimension_numbers<[1], [0], [0], [1], [0, 0, 1, 1], [], []>} : vector<2x32xbf16>, vector<32x32xbf16>, vector<2x32xf32> -> vector<2x32xf32>
    %287 = arith.addf %283, %286 : vector<2x32xf32>
    %c0_173 = arith.constant 0 : index
    %c0_174 = arith.constant 0 : index
    %c0_175 = arith.constant 0 : index
    %288 = vector.load %arg8[%c0_173, %c0_174, %c0_175] : memref<4x1x32xf32, #tpu.memory_space<vmem>>, vector<1x1x32xf32>
    %289 = vector.shape_cast %288 : vector<1x1x32xf32> to vector<1x32xf32>
    %290 = vector.broadcast %289 : vector<1x32xf32> to vector<2x32xf32>
    %291 = arith.addf %287, %290 : vector<2x32xf32>
    %292 = vector.extract_strided_slice %99 {offsets = [6, 0], sizes = [2, 32], strides = [1, 1]} : vector<16x32xf32> to vector<2x32xf32>
    %c1_176 = arith.constant 1 : index
    %c0_177 = arith.constant 0 : index
    %c0_178 = arith.constant 0 : index
    %293 = vector.load %arg7[%c1_176, %c0_177, %c0_178] : memref<4x32x32xbf16, #tpu.memory_space<vmem>>, vector<1x32x32xbf16>
    %294 = vector.shape_cast %293 : vector<1x32x32xbf16> to vector<32x32xbf16>
    %cst_179 = arith.constant dense<0.000000e+00> : vector<2x32xf32>
    %295 = tpu.matmul %282, %294, %cst_179 {dimension_numbers = #tpu.dot_dimension_numbers<[1], [0], [0], [1], [0, 0, 1, 1], [], []>} : vector<2x32xbf16>, vector<32x32xbf16>, vector<2x32xf32> -> vector<2x32xf32>
    %296 = arith.addf %292, %295 : vector<2x32xf32>
    %c1_180 = arith.constant 1 : index
    %c0_181 = arith.constant 0 : index
    %c0_182 = arith.constant 0 : index
    %297 = vector.load %arg8[%c1_180, %c0_181, %c0_182] : memref<4x1x32xf32, #tpu.memory_space<vmem>>, vector<1x1x32xf32>
    %298 = vector.shape_cast %297 : vector<1x1x32xf32> to vector<1x32xf32>
    %299 = vector.broadcast %298 : vector<1x32xf32> to vector<2x32xf32>
    %300 = arith.addf %296, %299 : vector<2x32xf32>
    %301 = vector.extract_strided_slice %102 {offsets = [6, 0], sizes = [2, 32], strides = [1, 1]} : vector<16x32xf32> to vector<2x32xf32>
    %c2_183 = arith.constant 2 : index
    %c0_184 = arith.constant 0 : index
    %c0_185 = arith.constant 0 : index
    %302 = vector.load %arg7[%c2_183, %c0_184, %c0_185] : memref<4x32x32xbf16, #tpu.memory_space<vmem>>, vector<1x32x32xbf16>
    %303 = vector.shape_cast %302 : vector<1x32x32xbf16> to vector<32x32xbf16>
    %cst_186 = arith.constant dense<0.000000e+00> : vector<2x32xf32>
    %304 = tpu.matmul %282, %303, %cst_186 {dimension_numbers = #tpu.dot_dimension_numbers<[1], [0], [0], [1], [0, 0, 1, 1], [], []>} : vector<2x32xbf16>, vector<32x32xbf16>, vector<2x32xf32> -> vector<2x32xf32>
    %305 = arith.addf %301, %304 : vector<2x32xf32>
    %c2_187 = arith.constant 2 : index
    %c0_188 = arith.constant 0 : index
    %c0_189 = arith.constant 0 : index
    %306 = vector.load %arg8[%c2_187, %c0_188, %c0_189] : memref<4x1x32xf32, #tpu.memory_space<vmem>>, vector<1x1x32xf32>
    %307 = vector.shape_cast %306 : vector<1x1x32xf32> to vector<1x32xf32>
    %308 = vector.broadcast %307 : vector<1x32xf32> to vector<2x32xf32>
    %309 = arith.addf %305, %308 : vector<2x32xf32>
    %310 = vector.extract_strided_slice %105 {offsets = [6, 0], sizes = [2, 32], strides = [1, 1]} : vector<16x32xf32> to vector<2x32xf32>
    %c3_190 = arith.constant 3 : index
    %c0_191 = arith.constant 0 : index
    %c0_192 = arith.constant 0 : index
    %311 = vector.load %arg7[%c3_190, %c0_191, %c0_192] : memref<4x32x32xbf16, #tpu.memory_space<vmem>>, vector<1x32x32xbf16>
    %312 = vector.shape_cast %311 : vector<1x32x32xbf16> to vector<32x32xbf16>
    %cst_193 = arith.constant dense<0.000000e+00> : vector<2x32xf32>
    %313 = tpu.matmul %282, %312, %cst_193 {dimension_numbers = #tpu.dot_dimension_numbers<[1], [0], [0], [1], [0, 0, 1, 1], [], []>} : vector<2x32xbf16>, vector<32x32xbf16>, vector<2x32xf32> -> vector<2x32xf32>
    %314 = arith.addf %310, %313 : vector<2x32xf32>
    %c3_194 = arith.constant 3 : index
    %c0_195 = arith.constant 0 : index
    %c0_196 = arith.constant 0 : index
    %315 = vector.load %arg8[%c3_194, %c0_195, %c0_196] : memref<4x1x32xf32, #tpu.memory_space<vmem>>, vector<1x1x32xf32>
    %316 = vector.shape_cast %315 : vector<1x1x32xf32> to vector<1x32xf32>
    %317 = vector.broadcast %316 : vector<1x32xf32> to vector<2x32xf32>
    %318 = arith.addf %314, %317 : vector<2x32xf32>
    %319 = arith.negf %291 : vector<2x32xf32>
    %320 = math.exp %319 : vector<2x32xf32>
    %cst_197 = arith.constant 1.000000e+00 : f32
    %321 = vector.broadcast %cst_197 : f32 to vector<2x32xf32>
    %322 = arith.addf %321, %320 : vector<2x32xf32>
    %323 = arith.divf %321, %322 : vector<2x32xf32>
    %324 = arith.negf %300 : vector<2x32xf32>
    %325 = math.exp %324 : vector<2x32xf32>
    %cst_198 = arith.constant 1.000000e+00 : f32
    %326 = vector.broadcast %cst_198 : f32 to vector<2x32xf32>
    %327 = arith.addf %326, %325 : vector<2x32xf32>
    %328 = arith.divf %326, %327 : vector<2x32xf32>
    %329 = math.tanh %309 : vector<2x32xf32>
    %330 = arith.negf %318 : vector<2x32xf32>
    %331 = math.exp %330 : vector<2x32xf32>
    %cst_199 = arith.constant 1.000000e+00 : f32
    %332 = vector.broadcast %cst_199 : f32 to vector<2x32xf32>
    %333 = arith.addf %332, %331 : vector<2x32xf32>
    %334 = arith.divf %332, %333 : vector<2x32xf32>
    %335 = arith.mulf %328, %279 : vector<2x32xf32>
    %336 = arith.mulf %323, %329 : vector<2x32xf32>
    %337 = arith.addf %335, %336 : vector<2x32xf32>
    %338 = math.tanh %337 : vector<2x32xf32>
    %339 = arith.mulf %334, %338 : vector<2x32xf32>
    %340 = arith.truncf %339 : vector<2x32xf32> to vector<2x32xbf16>
    %341 = vector.extract_strided_slice %96 {offsets = [8, 0], sizes = [2, 32], strides = [1, 1]} : vector<16x32xf32> to vector<2x32xf32>
    %c0_200 = arith.constant 0 : index
    %c0_201 = arith.constant 0 : index
    %c0_202 = arith.constant 0 : index
    %342 = vector.load %arg7[%c0_200, %c0_201, %c0_202] : memref<4x32x32xbf16, #tpu.memory_space<vmem>>, vector<1x32x32xbf16>
    %343 = vector.shape_cast %342 : vector<1x32x32xbf16> to vector<32x32xbf16>
    %cst_203 = arith.constant dense<0.000000e+00> : vector<2x32xf32>
    %344 = tpu.matmul %340, %343, %cst_203 {dimension_numbers = #tpu.dot_dimension_numbers<[1], [0], [0], [1], [0, 0, 1, 1], [], []>} : vector<2x32xbf16>, vector<32x32xbf16>, vector<2x32xf32> -> vector<2x32xf32>
    %345 = arith.addf %341, %344 : vector<2x32xf32>
    %c0_204 = arith.constant 0 : index
    %c0_205 = arith.constant 0 : index
    %c0_206 = arith.constant 0 : index
    %346 = vector.load %arg8[%c0_204, %c0_205, %c0_206] : memref<4x1x32xf32, #tpu.memory_space<vmem>>, vector<1x1x32xf32>
    %347 = vector.shape_cast %346 : vector<1x1x32xf32> to vector<1x32xf32>
    %348 = vector.broadcast %347 : vector<1x32xf32> to vector<2x32xf32>
    %349 = arith.addf %345, %348 : vector<2x32xf32>
    %350 = vector.extract_strided_slice %99 {offsets = [8, 0], sizes = [2, 32], strides = [1, 1]} : vector<16x32xf32> to vector<2x32xf32>
    %c1_207 = arith.constant 1 : index
    %c0_208 = arith.constant 0 : index
    %c0_209 = arith.constant 0 : index
    %351 = vector.load %arg7[%c1_207, %c0_208, %c0_209] : memref<4x32x32xbf16, #tpu.memory_space<vmem>>, vector<1x32x32xbf16>
    %352 = vector.shape_cast %351 : vector<1x32x32xbf16> to vector<32x32xbf16>
    %cst_210 = arith.constant dense<0.000000e+00> : vector<2x32xf32>
    %353 = tpu.matmul %340, %352, %cst_210 {dimension_numbers = #tpu.dot_dimension_numbers<[1], [0], [0], [1], [0, 0, 1, 1], [], []>} : vector<2x32xbf16>, vector<32x32xbf16>, vector<2x32xf32> -> vector<2x32xf32>
    %354 = arith.addf %350, %353 : vector<2x32xf32>
    %c1_211 = arith.constant 1 : index
    %c0_212 = arith.constant 0 : index
    %c0_213 = arith.constant 0 : index
    %355 = vector.load %arg8[%c1_211, %c0_212, %c0_213] : memref<4x1x32xf32, #tpu.memory_space<vmem>>, vector<1x1x32xf32>
    %356 = vector.shape_cast %355 : vector<1x1x32xf32> to vector<1x32xf32>
    %357 = vector.broadcast %356 : vector<1x32xf32> to vector<2x32xf32>
    %358 = arith.addf %354, %357 : vector<2x32xf32>
    %359 = vector.extract_strided_slice %102 {offsets = [8, 0], sizes = [2, 32], strides = [1, 1]} : vector<16x32xf32> to vector<2x32xf32>
    %c2_214 = arith.constant 2 : index
    %c0_215 = arith.constant 0 : index
    %c0_216 = arith.constant 0 : index
    %360 = vector.load %arg7[%c2_214, %c0_215, %c0_216] : memref<4x32x32xbf16, #tpu.memory_space<vmem>>, vector<1x32x32xbf16>
    %361 = vector.shape_cast %360 : vector<1x32x32xbf16> to vector<32x32xbf16>
    %cst_217 = arith.constant dense<0.000000e+00> : vector<2x32xf32>
    %362 = tpu.matmul %340, %361, %cst_217 {dimension_numbers = #tpu.dot_dimension_numbers<[1], [0], [0], [1], [0, 0, 1, 1], [], []>} : vector<2x32xbf16>, vector<32x32xbf16>, vector<2x32xf32> -> vector<2x32xf32>
    %363 = arith.addf %359, %362 : vector<2x32xf32>
    %c2_218 = arith.constant 2 : index
    %c0_219 = arith.constant 0 : index
    %c0_220 = arith.constant 0 : index
    %364 = vector.load %arg8[%c2_218, %c0_219, %c0_220] : memref<4x1x32xf32, #tpu.memory_space<vmem>>, vector<1x1x32xf32>
    %365 = vector.shape_cast %364 : vector<1x1x32xf32> to vector<1x32xf32>
    %366 = vector.broadcast %365 : vector<1x32xf32> to vector<2x32xf32>
    %367 = arith.addf %363, %366 : vector<2x32xf32>
    %368 = vector.extract_strided_slice %105 {offsets = [8, 0], sizes = [2, 32], strides = [1, 1]} : vector<16x32xf32> to vector<2x32xf32>
    %c3_221 = arith.constant 3 : index
    %c0_222 = arith.constant 0 : index
    %c0_223 = arith.constant 0 : index
    %369 = vector.load %arg7[%c3_221, %c0_222, %c0_223] : memref<4x32x32xbf16, #tpu.memory_space<vmem>>, vector<1x32x32xbf16>
    %370 = vector.shape_cast %369 : vector<1x32x32xbf16> to vector<32x32xbf16>
    %cst_224 = arith.constant dense<0.000000e+00> : vector<2x32xf32>
    %371 = tpu.matmul %340, %370, %cst_224 {dimension_numbers = #tpu.dot_dimension_numbers<[1], [0], [0], [1], [0, 0, 1, 1], [], []>} : vector<2x32xbf16>, vector<32x32xbf16>, vector<2x32xf32> -> vector<2x32xf32>
    %372 = arith.addf %368, %371 : vector<2x32xf32>
    %c3_225 = arith.constant 3 : index
    %c0_226 = arith.constant 0 : index
    %c0_227 = arith.constant 0 : index
    %373 = vector.load %arg8[%c3_225, %c0_226, %c0_227] : memref<4x1x32xf32, #tpu.memory_space<vmem>>, vector<1x1x32xf32>
    %374 = vector.shape_cast %373 : vector<1x1x32xf32> to vector<1x32xf32>
    %375 = vector.broadcast %374 : vector<1x32xf32> to vector<2x32xf32>
    %376 = arith.addf %372, %375 : vector<2x32xf32>
    %377 = arith.negf %349 : vector<2x32xf32>
    %378 = math.exp %377 : vector<2x32xf32>
    %cst_228 = arith.constant 1.000000e+00 : f32
    %379 = vector.broadcast %cst_228 : f32 to vector<2x32xf32>
    %380 = arith.addf %379, %378 : vector<2x32xf32>
    %381 = arith.divf %379, %380 : vector<2x32xf32>
    %382 = arith.negf %358 : vector<2x32xf32>
    %383 = math.exp %382 : vector<2x32xf32>
    %cst_229 = arith.constant 1.000000e+00 : f32
    %384 = vector.broadcast %cst_229 : f32 to vector<2x32xf32>
    %385 = arith.addf %384, %383 : vector<2x32xf32>
    %386 = arith.divf %384, %385 : vector<2x32xf32>
    %387 = math.tanh %367 : vector<2x32xf32>
    %388 = arith.negf %376 : vector<2x32xf32>
    %389 = math.exp %388 : vector<2x32xf32>
    %cst_230 = arith.constant 1.000000e+00 : f32
    %390 = vector.broadcast %cst_230 : f32 to vector<2x32xf32>
    %391 = arith.addf %390, %389 : vector<2x32xf32>
    %392 = arith.divf %390, %391 : vector<2x32xf32>
    %393 = arith.mulf %386, %337 : vector<2x32xf32>
    %394 = arith.mulf %381, %387 : vector<2x32xf32>
    %395 = arith.addf %393, %394 : vector<2x32xf32>
    %396 = math.tanh %395 : vector<2x32xf32>
    %397 = arith.mulf %392, %396 : vector<2x32xf32>
    %398 = arith.truncf %397 : vector<2x32xf32> to vector<2x32xbf16>
    %399 = vector.extract_strided_slice %96 {offsets = [10, 0], sizes = [2, 32], strides = [1, 1]} : vector<16x32xf32> to vector<2x32xf32>
    %c0_231 = arith.constant 0 : index
    %c0_232 = arith.constant 0 : index
    %c0_233 = arith.constant 0 : index
    %400 = vector.load %arg7[%c0_231, %c0_232, %c0_233] : memref<4x32x32xbf16, #tpu.memory_space<vmem>>, vector<1x32x32xbf16>
    %401 = vector.shape_cast %400 : vector<1x32x32xbf16> to vector<32x32xbf16>
    %cst_234 = arith.constant dense<0.000000e+00> : vector<2x32xf32>
    %402 = tpu.matmul %398, %401, %cst_234 {dimension_numbers = #tpu.dot_dimension_numbers<[1], [0], [0], [1], [0, 0, 1, 1], [], []>} : vector<2x32xbf16>, vector<32x32xbf16>, vector<2x32xf32> -> vector<2x32xf32>
    %403 = arith.addf %399, %402 : vector<2x32xf32>
    %c0_235 = arith.constant 0 : index
    %c0_236 = arith.constant 0 : index
    %c0_237 = arith.constant 0 : index
    %404 = vector.load %arg8[%c0_235, %c0_236, %c0_237] : memref<4x1x32xf32, #tpu.memory_space<vmem>>, vector<1x1x32xf32>
    %405 = vector.shape_cast %404 : vector<1x1x32xf32> to vector<1x32xf32>
    %406 = vector.broadcast %405 : vector<1x32xf32> to vector<2x32xf32>
    %407 = arith.addf %403, %406 : vector<2x32xf32>
    %408 = vector.extract_strided_slice %99 {offsets = [10, 0], sizes = [2, 32], strides = [1, 1]} : vector<16x32xf32> to vector<2x32xf32>
    %c1_238 = arith.constant 1 : index
    %c0_239 = arith.constant 0 : index
    %c0_240 = arith.constant 0 : index
    %409 = vector.load %arg7[%c1_238, %c0_239, %c0_240] : memref<4x32x32xbf16, #tpu.memory_space<vmem>>, vector<1x32x32xbf16>
    %410 = vector.shape_cast %409 : vector<1x32x32xbf16> to vector<32x32xbf16>
    %cst_241 = arith.constant dense<0.000000e+00> : vector<2x32xf32>
    %411 = tpu.matmul %398, %410, %cst_241 {dimension_numbers = #tpu.dot_dimension_numbers<[1], [0], [0], [1], [0, 0, 1, 1], [], []>} : vector<2x32xbf16>, vector<32x32xbf16>, vector<2x32xf32> -> vector<2x32xf32>
    %412 = arith.addf %408, %411 : vector<2x32xf32>
    %c1_242 = arith.constant 1 : index
    %c0_243 = arith.constant 0 : index
    %c0_244 = arith.constant 0 : index
    %413 = vector.load %arg8[%c1_242, %c0_243, %c0_244] : memref<4x1x32xf32, #tpu.memory_space<vmem>>, vector<1x1x32xf32>
    %414 = vector.shape_cast %413 : vector<1x1x32xf32> to vector<1x32xf32>
    %415 = vector.broadcast %414 : vector<1x32xf32> to vector<2x32xf32>
    %416 = arith.addf %412, %415 : vector<2x32xf32>
    %417 = vector.extract_strided_slice %102 {offsets = [10, 0], sizes = [2, 32], strides = [1, 1]} : vector<16x32xf32> to vector<2x32xf32>
    %c2_245 = arith.constant 2 : index
    %c0_246 = arith.constant 0 : index
    %c0_247 = arith.constant 0 : index
    %418 = vector.load %arg7[%c2_245, %c0_246, %c0_247] : memref<4x32x32xbf16, #tpu.memory_space<vmem>>, vector<1x32x32xbf16>
    %419 = vector.shape_cast %418 : vector<1x32x32xbf16> to vector<32x32xbf16>
    %cst_248 = arith.constant dense<0.000000e+00> : vector<2x32xf32>
    %420 = tpu.matmul %398, %419, %cst_248 {dimension_numbers = #tpu.dot_dimension_numbers<[1], [0], [0], [1], [0, 0, 1, 1], [], []>} : vector<2x32xbf16>, vector<32x32xbf16>, vector<2x32xf32> -> vector<2x32xf32>
    %421 = arith.addf %417, %420 : vector<2x32xf32>
    %c2_249 = arith.constant 2 : index
    %c0_250 = arith.constant 0 : index
    %c0_251 = arith.constant 0 : index
    %422 = vector.load %arg8[%c2_249, %c0_250, %c0_251] : memref<4x1x32xf32, #tpu.memory_space<vmem>>, vector<1x1x32xf32>
    %423 = vector.shape_cast %422 : vector<1x1x32xf32> to vector<1x32xf32>
    %424 = vector.broadcast %423 : vector<1x32xf32> to vector<2x32xf32>
    %425 = arith.addf %421, %424 : vector<2x32xf32>
    %426 = vector.extract_strided_slice %105 {offsets = [10, 0], sizes = [2, 32], strides = [1, 1]} : vector<16x32xf32> to vector<2x32xf32>
    %c3_252 = arith.constant 3 : index
    %c0_253 = arith.constant 0 : index
    %c0_254 = arith.constant 0 : index
    %427 = vector.load %arg7[%c3_252, %c0_253, %c0_254] : memref<4x32x32xbf16, #tpu.memory_space<vmem>>, vector<1x32x32xbf16>
    %428 = vector.shape_cast %427 : vector<1x32x32xbf16> to vector<32x32xbf16>
    %cst_255 = arith.constant dense<0.000000e+00> : vector<2x32xf32>
    %429 = tpu.matmul %398, %428, %cst_255 {dimension_numbers = #tpu.dot_dimension_numbers<[1], [0], [0], [1], [0, 0, 1, 1], [], []>} : vector<2x32xbf16>, vector<32x32xbf16>, vector<2x32xf32> -> vector<2x32xf32>
    %430 = arith.addf %426, %429 : vector<2x32xf32>
    %c3_256 = arith.constant 3 : index
    %c0_257 = arith.constant 0 : index
    %c0_258 = arith.constant 0 : index
    %431 = vector.load %arg8[%c3_256, %c0_257, %c0_258] : memref<4x1x32xf32, #tpu.memory_space<vmem>>, vector<1x1x32xf32>
    %432 = vector.shape_cast %431 : vector<1x1x32xf32> to vector<1x32xf32>
    %433 = vector.broadcast %432 : vector<1x32xf32> to vector<2x32xf32>
    %434 = arith.addf %430, %433 : vector<2x32xf32>
    %435 = arith.negf %407 : vector<2x32xf32>
    %436 = math.exp %435 : vector<2x32xf32>
    %cst_259 = arith.constant 1.000000e+00 : f32
    %437 = vector.broadcast %cst_259 : f32 to vector<2x32xf32>
    %438 = arith.addf %437, %436 : vector<2x32xf32>
    %439 = arith.divf %437, %438 : vector<2x32xf32>
    %440 = arith.negf %416 : vector<2x32xf32>
    %441 = math.exp %440 : vector<2x32xf32>
    %cst_260 = arith.constant 1.000000e+00 : f32
    %442 = vector.broadcast %cst_260 : f32 to vector<2x32xf32>
    %443 = arith.addf %442, %441 : vector<2x32xf32>
    %444 = arith.divf %442, %443 : vector<2x32xf32>
    %445 = math.tanh %425 : vector<2x32xf32>
    %446 = arith.negf %434 : vector<2x32xf32>
    %447 = math.exp %446 : vector<2x32xf32>
    %cst_261 = arith.constant 1.000000e+00 : f32
    %448 = vector.broadcast %cst_261 : f32 to vector<2x32xf32>
    %449 = arith.addf %448, %447 : vector<2x32xf32>
    %450 = arith.divf %448, %449 : vector<2x32xf32>
    %451 = arith.mulf %444, %395 : vector<2x32xf32>
    %452 = arith.mulf %439, %445 : vector<2x32xf32>
    %453 = arith.addf %451, %452 : vector<2x32xf32>
    %454 = math.tanh %453 : vector<2x32xf32>
    %455 = arith.mulf %450, %454 : vector<2x32xf32>
    %456 = arith.truncf %455 : vector<2x32xf32> to vector<2x32xbf16>
    %457 = vector.extract_strided_slice %96 {offsets = [12, 0], sizes = [2, 32], strides = [1, 1]} : vector<16x32xf32> to vector<2x32xf32>
    %c0_262 = arith.constant 0 : index
    %c0_263 = arith.constant 0 : index
    %c0_264 = arith.constant 0 : index
    %458 = vector.load %arg7[%c0_262, %c0_263, %c0_264] : memref<4x32x32xbf16, #tpu.memory_space<vmem>>, vector<1x32x32xbf16>
    %459 = vector.shape_cast %458 : vector<1x32x32xbf16> to vector<32x32xbf16>
    %cst_265 = arith.constant dense<0.000000e+00> : vector<2x32xf32>
    %460 = tpu.matmul %456, %459, %cst_265 {dimension_numbers = #tpu.dot_dimension_numbers<[1], [0], [0], [1], [0, 0, 1, 1], [], []>} : vector<2x32xbf16>, vector<32x32xbf16>, vector<2x32xf32> -> vector<2x32xf32>
    %461 = arith.addf %457, %460 : vector<2x32xf32>
    %c0_266 = arith.constant 0 : index
    %c0_267 = arith.constant 0 : index
    %c0_268 = arith.constant 0 : index
    %462 = vector.load %arg8[%c0_266, %c0_267, %c0_268] : memref<4x1x32xf32, #tpu.memory_space<vmem>>, vector<1x1x32xf32>
    %463 = vector.shape_cast %462 : vector<1x1x32xf32> to vector<1x32xf32>
    %464 = vector.broadcast %463 : vector<1x32xf32> to vector<2x32xf32>
    %465 = arith.addf %461, %464 : vector<2x32xf32>
    %466 = vector.extract_strided_slice %99 {offsets = [12, 0], sizes = [2, 32], strides = [1, 1]} : vector<16x32xf32> to vector<2x32xf32>
    %c1_269 = arith.constant 1 : index
    %c0_270 = arith.constant 0 : index
    %c0_271 = arith.constant 0 : index
    %467 = vector.load %arg7[%c1_269, %c0_270, %c0_271] : memref<4x32x32xbf16, #tpu.memory_space<vmem>>, vector<1x32x32xbf16>
    %468 = vector.shape_cast %467 : vector<1x32x32xbf16> to vector<32x32xbf16>
    %cst_272 = arith.constant dense<0.000000e+00> : vector<2x32xf32>
    %469 = tpu.matmul %456, %468, %cst_272 {dimension_numbers = #tpu.dot_dimension_numbers<[1], [0], [0], [1], [0, 0, 1, 1], [], []>} : vector<2x32xbf16>, vector<32x32xbf16>, vector<2x32xf32> -> vector<2x32xf32>
    %470 = arith.addf %466, %469 : vector<2x32xf32>
    %c1_273 = arith.constant 1 : index
    %c0_274 = arith.constant 0 : index
    %c0_275 = arith.constant 0 : index
    %471 = vector.load %arg8[%c1_273, %c0_274, %c0_275] : memref<4x1x32xf32, #tpu.memory_space<vmem>>, vector<1x1x32xf32>
    %472 = vector.shape_cast %471 : vector<1x1x32xf32> to vector<1x32xf32>
    %473 = vector.broadcast %472 : vector<1x32xf32> to vector<2x32xf32>
    %474 = arith.addf %470, %473 : vector<2x32xf32>
    %475 = vector.extract_strided_slice %102 {offsets = [12, 0], sizes = [2, 32], strides = [1, 1]} : vector<16x32xf32> to vector<2x32xf32>
    %c2_276 = arith.constant 2 : index
    %c0_277 = arith.constant 0 : index
    %c0_278 = arith.constant 0 : index
    %476 = vector.load %arg7[%c2_276, %c0_277, %c0_278] : memref<4x32x32xbf16, #tpu.memory_space<vmem>>, vector<1x32x32xbf16>
    %477 = vector.shape_cast %476 : vector<1x32x32xbf16> to vector<32x32xbf16>
    %cst_279 = arith.constant dense<0.000000e+00> : vector<2x32xf32>
    %478 = tpu.matmul %456, %477, %cst_279 {dimension_numbers = #tpu.dot_dimension_numbers<[1], [0], [0], [1], [0, 0, 1, 1], [], []>} : vector<2x32xbf16>, vector<32x32xbf16>, vector<2x32xf32> -> vector<2x32xf32>
    %479 = arith.addf %475, %478 : vector<2x32xf32>
    %c2_280 = arith.constant 2 : index
    %c0_281 = arith.constant 0 : index
    %c0_282 = arith.constant 0 : index
    %480 = vector.load %arg8[%c2_280, %c0_281, %c0_282] : memref<4x1x32xf32, #tpu.memory_space<vmem>>, vector<1x1x32xf32>
    %481 = vector.shape_cast %480 : vector<1x1x32xf32> to vector<1x32xf32>
    %482 = vector.broadcast %481 : vector<1x32xf32> to vector<2x32xf32>
    %483 = arith.addf %479, %482 : vector<2x32xf32>
    %484 = vector.extract_strided_slice %105 {offsets = [12, 0], sizes = [2, 32], strides = [1, 1]} : vector<16x32xf32> to vector<2x32xf32>
    %c3_283 = arith.constant 3 : index
    %c0_284 = arith.constant 0 : index
    %c0_285 = arith.constant 0 : index
    %485 = vector.load %arg7[%c3_283, %c0_284, %c0_285] : memref<4x32x32xbf16, #tpu.memory_space<vmem>>, vector<1x32x32xbf16>
    %486 = vector.shape_cast %485 : vector<1x32x32xbf16> to vector<32x32xbf16>
    %cst_286 = arith.constant dense<0.000000e+00> : vector<2x32xf32>
    %487 = tpu.matmul %456, %486, %cst_286 {dimension_numbers = #tpu.dot_dimension_numbers<[1], [0], [0], [1], [0, 0, 1, 1], [], []>} : vector<2x32xbf16>, vector<32x32xbf16>, vector<2x32xf32> -> vector<2x32xf32>
    %488 = arith.addf %484, %487 : vector<2x32xf32>
    %c3_287 = arith.constant 3 : index
    %c0_288 = arith.constant 0 : index
    %c0_289 = arith.constant 0 : index
    %489 = vector.load %arg8[%c3_287, %c0_288, %c0_289] : memref<4x1x32xf32, #tpu.memory_space<vmem>>, vector<1x1x32xf32>
    %490 = vector.shape_cast %489 : vector<1x1x32xf32> to vector<1x32xf32>
    %491 = vector.broadcast %490 : vector<1x32xf32> to vector<2x32xf32>
    %492 = arith.addf %488, %491 : vector<2x32xf32>
    %493 = arith.negf %465 : vector<2x32xf32>
    %494 = math.exp %493 : vector<2x32xf32>
    %cst_290 = arith.constant 1.000000e+00 : f32
    %495 = vector.broadcast %cst_290 : f32 to vector<2x32xf32>
    %496 = arith.addf %495, %494 : vector<2x32xf32>
    %497 = arith.divf %495, %496 : vector<2x32xf32>
    %498 = arith.negf %474 : vector<2x32xf32>
    %499 = math.exp %498 : vector<2x32xf32>
    %cst_291 = arith.constant 1.000000e+00 : f32
    %500 = vector.broadcast %cst_291 : f32 to vector<2x32xf32>
    %501 = arith.addf %500, %499 : vector<2x32xf32>
    %502 = arith.divf %500, %501 : vector<2x32xf32>
    %503 = math.tanh %483 : vector<2x32xf32>
    %504 = arith.negf %492 : vector<2x32xf32>
    %505 = math.exp %504 : vector<2x32xf32>
    %cst_292 = arith.constant 1.000000e+00 : f32
    %506 = vector.broadcast %cst_292 : f32 to vector<2x32xf32>
    %507 = arith.addf %506, %505 : vector<2x32xf32>
    %508 = arith.divf %506, %507 : vector<2x32xf32>
    %509 = arith.mulf %502, %453 : vector<2x32xf32>
    %510 = arith.mulf %497, %503 : vector<2x32xf32>
    %511 = arith.addf %509, %510 : vector<2x32xf32>
    %512 = math.tanh %511 : vector<2x32xf32>
    %513 = arith.mulf %508, %512 : vector<2x32xf32>
    %514 = arith.truncf %513 : vector<2x32xf32> to vector<2x32xbf16>
    %515 = vector.extract_strided_slice %96 {offsets = [14, 0], sizes = [2, 32], strides = [1, 1]} : vector<16x32xf32> to vector<2x32xf32>
    %c0_293 = arith.constant 0 : index
    %c0_294 = arith.constant 0 : index
    %c0_295 = arith.constant 0 : index
    %516 = vector.load %arg7[%c0_293, %c0_294, %c0_295] : memref<4x32x32xbf16, #tpu.memory_space<vmem>>, vector<1x32x32xbf16>
    %517 = vector.shape_cast %516 : vector<1x32x32xbf16> to vector<32x32xbf16>
    %cst_296 = arith.constant dense<0.000000e+00> : vector<2x32xf32>
    %518 = tpu.matmul %514, %517, %cst_296 {dimension_numbers = #tpu.dot_dimension_numbers<[1], [0], [0], [1], [0, 0, 1, 1], [], []>} : vector<2x32xbf16>, vector<32x32xbf16>, vector<2x32xf32> -> vector<2x32xf32>
    %519 = arith.addf %515, %518 : vector<2x32xf32>
    %c0_297 = arith.constant 0 : index
    %c0_298 = arith.constant 0 : index
    %c0_299 = arith.constant 0 : index
    %520 = vector.load %arg8[%c0_297, %c0_298, %c0_299] : memref<4x1x32xf32, #tpu.memory_space<vmem>>, vector<1x1x32xf32>
    %521 = vector.shape_cast %520 : vector<1x1x32xf32> to vector<1x32xf32>
    %522 = vector.broadcast %521 : vector<1x32xf32> to vector<2x32xf32>
    %523 = arith.addf %519, %522 : vector<2x32xf32>
    %524 = vector.extract_strided_slice %99 {offsets = [14, 0], sizes = [2, 32], strides = [1, 1]} : vector<16x32xf32> to vector<2x32xf32>
    %c1_300 = arith.constant 1 : index
    %c0_301 = arith.constant 0 : index
    %c0_302 = arith.constant 0 : index
    %525 = vector.load %arg7[%c1_300, %c0_301, %c0_302] : memref<4x32x32xbf16, #tpu.memory_space<vmem>>, vector<1x32x32xbf16>
    %526 = vector.shape_cast %525 : vector<1x32x32xbf16> to vector<32x32xbf16>
    %cst_303 = arith.constant dense<0.000000e+00> : vector<2x32xf32>
    %527 = tpu.matmul %514, %526, %cst_303 {dimension_numbers = #tpu.dot_dimension_numbers<[1], [0], [0], [1], [0, 0, 1, 1], [], []>} : vector<2x32xbf16>, vector<32x32xbf16>, vector<2x32xf32> -> vector<2x32xf32>
    %528 = arith.addf %524, %527 : vector<2x32xf32>
    %c1_304 = arith.constant 1 : index
    %c0_305 = arith.constant 0 : index
    %c0_306 = arith.constant 0 : index
    %529 = vector.load %arg8[%c1_304, %c0_305, %c0_306] : memref<4x1x32xf32, #tpu.memory_space<vmem>>, vector<1x1x32xf32>
    %530 = vector.shape_cast %529 : vector<1x1x32xf32> to vector<1x32xf32>
    %531 = vector.broadcast %530 : vector<1x32xf32> to vector<2x32xf32>
    %532 = arith.addf %528, %531 : vector<2x32xf32>
    %533 = vector.extract_strided_slice %102 {offsets = [14, 0], sizes = [2, 32], strides = [1, 1]} : vector<16x32xf32> to vector<2x32xf32>
    %c2_307 = arith.constant 2 : index
    %c0_308 = arith.constant 0 : index
    %c0_309 = arith.constant 0 : index
    %534 = vector.load %arg7[%c2_307, %c0_308, %c0_309] : memref<4x32x32xbf16, #tpu.memory_space<vmem>>, vector<1x32x32xbf16>
    %535 = vector.shape_cast %534 : vector<1x32x32xbf16> to vector<32x32xbf16>
    %cst_310 = arith.constant dense<0.000000e+00> : vector<2x32xf32>
    %536 = tpu.matmul %514, %535, %cst_310 {dimension_numbers = #tpu.dot_dimension_numbers<[1], [0], [0], [1], [0, 0, 1, 1], [], []>} : vector<2x32xbf16>, vector<32x32xbf16>, vector<2x32xf32> -> vector<2x32xf32>
    %537 = arith.addf %533, %536 : vector<2x32xf32>
    %c2_311 = arith.constant 2 : index
    %c0_312 = arith.constant 0 : index
    %c0_313 = arith.constant 0 : index
    %538 = vector.load %arg8[%c2_311, %c0_312, %c0_313] : memref<4x1x32xf32, #tpu.memory_space<vmem>>, vector<1x1x32xf32>
    %539 = vector.shape_cast %538 : vector<1x1x32xf32> to vector<1x32xf32>
    %540 = vector.broadcast %539 : vector<1x32xf32> to vector<2x32xf32>
    %541 = arith.addf %537, %540 : vector<2x32xf32>
    %542 = vector.extract_strided_slice %105 {offsets = [14, 0], sizes = [2, 32], strides = [1, 1]} : vector<16x32xf32> to vector<2x32xf32>
    %c3_314 = arith.constant 3 : index
    %c0_315 = arith.constant 0 : index
    %c0_316 = arith.constant 0 : index
    %543 = vector.load %arg7[%c3_314, %c0_315, %c0_316] : memref<4x32x32xbf16, #tpu.memory_space<vmem>>, vector<1x32x32xbf16>
    %544 = vector.shape_cast %543 : vector<1x32x32xbf16> to vector<32x32xbf16>
    %cst_317 = arith.constant dense<0.000000e+00> : vector<2x32xf32>
    %545 = tpu.matmul %514, %544, %cst_317 {dimension_numbers = #tpu.dot_dimension_numbers<[1], [0], [0], [1], [0, 0, 1, 1], [], []>} : vector<2x32xbf16>, vector<32x32xbf16>, vector<2x32xf32> -> vector<2x32xf32>
    %546 = arith.addf %542, %545 : vector<2x32xf32>
    %c3_318 = arith.constant 3 : index
    %c0_319 = arith.constant 0 : index
    %c0_320 = arith.constant 0 : index
    %547 = vector.load %arg8[%c3_318, %c0_319, %c0_320] : memref<4x1x32xf32, #tpu.memory_space<vmem>>, vector<1x1x32xf32>
    %548 = vector.shape_cast %547 : vector<1x1x32xf32> to vector<1x32xf32>
    %549 = vector.broadcast %548 : vector<1x32xf32> to vector<2x32xf32>
    %550 = arith.addf %546, %549 : vector<2x32xf32>
    %551 = arith.negf %523 : vector<2x32xf32>
    %552 = math.exp %551 : vector<2x32xf32>
    %cst_321 = arith.constant 1.000000e+00 : f32
    %553 = vector.broadcast %cst_321 : f32 to vector<2x32xf32>
    %554 = arith.addf %553, %552 : vector<2x32xf32>
    %555 = arith.divf %553, %554 : vector<2x32xf32>
    %556 = arith.negf %532 : vector<2x32xf32>
    %557 = math.exp %556 : vector<2x32xf32>
    %cst_322 = arith.constant 1.000000e+00 : f32
    %558 = vector.broadcast %cst_322 : f32 to vector<2x32xf32>
    %559 = arith.addf %558, %557 : vector<2x32xf32>
    %560 = arith.divf %558, %559 : vector<2x32xf32>
    %561 = math.tanh %541 : vector<2x32xf32>
    %562 = arith.negf %550 : vector<2x32xf32>
    %563 = math.exp %562 : vector<2x32xf32>
    %cst_323 = arith.constant 1.000000e+00 : f32
    %564 = vector.broadcast %cst_323 : f32 to vector<2x32xf32>
    %565 = arith.addf %564, %563 : vector<2x32xf32>
    %566 = arith.divf %564, %565 : vector<2x32xf32>
    %567 = arith.mulf %560, %511 : vector<2x32xf32>
    %568 = arith.mulf %555, %561 : vector<2x32xf32>
    %569 = arith.addf %567, %568 : vector<2x32xf32>
    %570 = math.tanh %569 : vector<2x32xf32>
    %571 = arith.mulf %566, %570 : vector<2x32xf32>
    %572 = arith.truncf %571 : vector<2x32xf32> to vector<2x32xbf16>
    %c0_324 = arith.constant 0 : index
    %c0_325 = arith.constant 0 : index
    %573 = vector.load %arg9[%c0_324, %c0_325] : memref<32x1024xbf16, #tpu.memory_space<vmem>>, vector<32x1024xbf16>
    %cst_326 = arith.constant dense<0.000000e+00> : vector<2x1024xf32>
    %574 = tpu.matmul %572, %573, %cst_326 {dimension_numbers = #tpu.dot_dimension_numbers<[1], [0], [0], [1], [0, 0, 1, 1], [], []>} : vector<2x32xbf16>, vector<32x1024xbf16>, vector<2x1024xf32> -> vector<2x1024xf32>
    %c0_327 = arith.constant 0 : index
    %c0_328 = arith.constant 0 : index
    %575 = vector.load %arg10[%c0_327, %c0_328] : memref<1x1024xf32, #tpu.memory_space<vmem>>, vector<1x1024xf32>
    %576 = vector.broadcast %575 : vector<1x1024xf32> to vector<2x1024xf32>
    %577 = arith.addf %574, %576 : vector<2x1024xf32>
    %cst_329 = arith.constant 1.000000e+00 : f32
    %578 = vector.broadcast %cst_329 : f32 to vector<2x1024xf32>
    %579 = arith.mulf %578, %577 : vector<2x1024xf32>
    %580 = arith.negf %579 : vector<2x1024xf32>
    %581 = math.exp %580 : vector<2x1024xf32>
    %cst_330 = arith.constant 1.000000e+00 : f32
    %582 = vector.broadcast %cst_330 : f32 to vector<2x1024xf32>
    %583 = arith.addf %582, %581 : vector<2x1024xf32>
    %584 = arith.divf %582, %583 : vector<2x1024xf32>
    %c0_331 = arith.constant 0 : index
    %c0_332 = arith.constant 0 : index
    %585 = vector.load %arg11[%c0_331, %c0_332] : memref<2x1024xf32, #tpu.memory_space<vmem>>, vector<2x1024xf32>
    tpu.vector_store %arg11[%c0_331, %c0_332], %584 {strides = array<i32>} : memref<2x1024xf32, #tpu.memory_space<vmem>>, vector<2x1024xf32>,
    return
  }
  func.func @transform_0(%arg0: i32) -> (i32, i32) {
    %c0_i32 = arith.constant 0 : i32
    %c0_i32_0 = arith.constant 0 : i32
    %c0_i32_1 = arith.constant 0 : i32
    return %c0_i32, %c0_i32_0 : i32, i32
  }
  func.func @transform_1(%arg0: i32) -> (i32, i32) {
    %c0_i32 = arith.constant 0 : i32
    %c0_i32_0 = arith.constant 0 : i32
    %c0_i32_1 = arith.constant 0 : i32
    return %c0_i32, %c0_i32_0 : i32, i32
  }
  func.func @transform_2(%arg0: i32) -> (i32, i32) {
    %c0_i32 = arith.constant 0 : i32
    %c0_i32_0 = arith.constant 0 : i32
    %c0_i32_1 = arith.constant 0 : i32
    return %c0_i32, %c0_i32_0 : i32, i32
  }
  func.func @transform_3(%arg0: i32) -> (i32, i32, i32) {
    %c0_i32 = arith.constant 0 : i32
    %c0_i32_0 = arith.constant 0 : i32
    %c0_i32_1 = arith.constant 0 : i32
    %c0_i32_2 = arith.constant 0 : i32
    return %c0_i32, %c0_i32_0, %c0_i32_1 : i32, i32, i32
  }
  func.func @transform_4(%arg0: i32) -> (i32, i32) {
    %c0_i32 = arith.constant 0 : i32
    %c0_i32_0 = arith.constant 0 : i32
    %c0_i32_1 = arith.constant 0 : i32
    return %c0_i32, %c0_i32_0 : i32, i32
  }
  func.func @transform_5(%arg0: i32) -> (i32, i32, i32) {
    %c0_i32 = arith.constant 0 : i32
    %c0_i32_0 = arith.constant 0 : i32
    %c0_i32_1 = arith.constant 0 : i32
    %c0_i32_2 = arith.constant 0 : i32
    return %c0_i32, %c0_i32_0, %c0_i32_1 : i32, i32, i32
  }
  func.func @transform_6(%arg0: i32) -> (i32, i32, i32) {
    %c0_i32 = arith.constant 0 : i32
    %c0_i32_0 = arith.constant 0 : i32
    %c0_i32_1 = arith.constant 0 : i32
    %c0_i32_2 = arith.constant 0 : i32
    return %c0_i32, %c0_i32_0, %c0_i32_1 : i32, i32, i32
  }
  func.func @transform_7(%arg0: i32) -> (i32, i32, i32) {
    %c0_i32 = arith.constant 0 : i32
    %c0_i32_0 = arith.constant 0 : i32
    %c0_i32_1 = arith.constant 0 : i32
    %c0_i32_2 = arith.constant 0 : i32
    return %c0_i32, %c0_i32_0, %c0_i32_1 : i32, i32, i32
  }
  func.func @transform_8(%arg0: i32) -> (i32, i32) {
    %c0_i32 = arith.constant 0 : i32
    %c0_i32_0 = arith.constant 0 : i32
    %c0_i32_1 = arith.constant 0 : i32
    return %c0_i32, %c0_i32_0 : i32, i32
  }
  func.func @transform_9(%arg0: i32) -> (i32, i32) {
    %c0_i32 = arith.constant 0 : i32
    %c0_i32_0 = arith.constant 0 : i32
    %c0_i32_1 = arith.constant 0 : i32
    return %c0_i32, %c0_i32_0 : i32, i32
  }
  func.func @transform_10(%arg0: i32) -> (i32, i32) {
    %c0_i32 = arith.constant 0 : i32
    %c0_i32_0 = arith.constant 0 : i32
    %c0_i32_1 = arith.constant 0 : i32
    return %c0_i32, %c0_i32_0 : i32, i32
  }
}

</mosaic_0001>

<llo_original>
// kernel: tpu_custom_call.1
$region0: #{tpu_custom_call.1}
  #allocation0 [shape = 'u32[]', space=smem, size = 0x4, offset = 0x4, fixed_abs, tag = 'smem constant byte address 0x4 - core index']
  #allocation1 [shape = 'u32[144,128]{1,0:T(1,128)}', space=vmem, size = 0x12000, scoped, tag = 'internal scratch']
  %s0 = inlined_call_operand.vmem [shape: bf16[256,64], index: 0, kind: input, shape index: {}]
  %s1 = inlined_call_operand.vmem [shape: bf16[64,32], index: 1, kind: input, shape index: {}]
  %s2 = inlined_call_operand.vmem [shape: f32[1,32], index: 2, kind: input, shape index: {}]
  %s3 = inlined_call_operand.hbm [shape: bf16[16,32,32], index: 3, kind: input, shape index: {}]
  %s4 = inlined_call_operand.vmem [shape: f32[1,32], index: 4, kind: input, shape index: {}]
  %s5 = inlined_call_operand.vmem [shape: bf16[4,32,32], index: 5, kind: input, shape index: {}]
  %s6 = inlined_call_operand.vmem [shape: bf16[4,32,32], index: 6, kind: input, shape index: {}]
  %s7 = inlined_call_operand.hbm [shape: f32[4,1,32], index: 7, kind: input, shape index: {}]
  %s8 = inlined_call_operand.vmem [shape: bf16[32,1024], index: 8, kind: input, shape index: {}]
  %s9 = inlined_call_operand.vmem [shape: f32[1,1024], index: 9, kind: input, shape index: {}]
  %s10 = inlined_call_operand.hbm [shape: f32[2,1024], index: 10, kind: output, shape index: {}]
  %s11 = sld [smem:[#allocation0]]
  $region58: #{tpu_custom_call.1} parent=0
    _
  %s13 = ssub.s32 1, %s11
  %s14 = scalar_select 0, %s13, %s11
  $region1: #{tpu_custom_call.1} parent=0
    #allocation2 [shape = 'u8[131072]{0}', space=vmem, size = 0x20000, scoped, tag = 'input window, operand 3, single buffered']
    #allocation3 [shape = 's32[1]{0}', space=sflag, size = 0x4, scoped, tag = 'scoped memory for tpu_custom_call.1']
    #allocation4 [shape = 's32[1]{0}', space=sflag, size = 0x4, scoped, tag = 'scoped memory for tpu_custom_call.1']
    #allocation5 [shape = 'u8[2048]{0}', space=vmem, size = 0x800, scoped, tag = 'input window, operand 7, single buffered']
    #allocation6 [shape = 's32[1]{0}', space=sflag, size = 0x4, scoped, tag = 'scoped memory for tpu_custom_call.1']
    #allocation7 [shape = 'u8[8192]{0}', space=vmem, size = 0x2000, scoped, tag = 'output window, operand 0, single buffered']
    %15 = vsyncpa [#allocation3], 0
    %16 = vsyncpa [#allocation6], 0
    %17 = vsyncpa [#allocation4], 0
    // Predicated region
    $region2: #{tpu_custom_call.1} parent=1 // pred_check
      _
    $region3: #{tpu_custom_call.1} parent=1 // pred_check_branch
      %19 = sbr.rel (0) target = $region5
    $region4: #{tpu_custom_call.1} parent=1 // pred_region
      _
    $region5: #{tpu_custom_call.1} parent=1 // pred_fallthru
      _
    // Predicated region
    $region6: #{tpu_custom_call.1} parent=1 // pred_check
      _
    $region7: #{tpu_custom_call.1} parent=1 // pred_check_branch
      %21 = sbr.rel (0) target = $region9
    $region8: #{tpu_custom_call.1} parent=1 // pred_region
      _
    $region9: #{tpu_custom_call.1} parent=1 // pred_fallthru
      _
    // Predicated region
    $region10: #{tpu_custom_call.1} parent=1 // pred_check
      _
    $region11: #{tpu_custom_call.1} parent=1 // pred_check_branch
      %23 = sbr.rel (0) target = $region13
    $region12: #{tpu_custom_call.1} parent=1 // pred_region
      _
    $region13: #{tpu_custom_call.1} parent=1 // pred_fallthru
      _
    // Predicated region
    $region14: #{tpu_custom_call.1} parent=1 // pred_check
      _
    $region15: #{tpu_custom_call.1} parent=1 // pred_check_branch
      %25 = sbr.rel (0) target = $region17
    $region16: #{tpu_custom_call.1} parent=1 // pred_region
      %s27 = ssub.s32 4096, 4096
      %28 = vsyncadd [#allocation3], %s27
      %s29 = sshll.u32 [#allocation2], 4
      %s30 = int_to_ptr.vmem [resolvable:$true] %s29
      %35 = dma.hbm_to_vmem [thread:$0]  %s3, 4096, %s30, [#allocation3], 64, 64, 4
    $region17: #{tpu_custom_call.1} parent=1 // pred_fallthru
      _
    // Predicated region
    $region18: #{tpu_custom_call.1} parent=1 // pred_check
      _
    $region19: #{tpu_custom_call.1} parent=1 // pred_check_branch
      %37 = sbr.rel (0) target = $region21
    $region20: #{tpu_custom_call.1} parent=1 // pred_region
      _
    $region21: #{tpu_custom_call.1} parent=1 // pred_fallthru
      _
    // Predicated region
    $region22: #{tpu_custom_call.1} parent=1 // pred_check
      _
    $region23: #{tpu_custom_call.1} parent=1 // pred_check_branch
      %39 = sbr.rel (0) target = $region25
    $region24: #{tpu_custom_call.1} parent=1 // pred_region
      _
    $region25: #{tpu_custom_call.1} parent=1 // pred_fallthru
      _
    // Predicated region
    $region26: #{tpu_custom_call.1} parent=1 // pred_check
      _
    $region27: #{tpu_custom_call.1} parent=1 // pred_check_branch
      %41 = sbr.rel (0) target = $region29
    $region28: #{tpu_custom_call.1} parent=1 // pred_region
      _
    $region29: #{tpu_custom_call.1} parent=1 // pred_fallthru
      _
    // Predicated region
    $region30: #{tpu_custom_call.1} parent=1 // pred_check
      _
    $region31: #{tpu_custom_call.1} parent=1 // pred_check_branch
      %43 = sbr.rel (0) target = $region33
    $region32: #{tpu_custom_call.1} parent=1 // pred_region
      %s45 = ssub.s32 64, 64
      %46 = vsyncadd [#allocation6], %s45
      %s47 = sshll.u32 [#allocation5], 4
      %s48 = int_to_ptr.vmem [resolvable:$true] %s47
      %53 = dma.hbm_to_vmem [thread:$0]  %s7, 64, %s48, [#allocation6], 16, 16, 1
    $region33: #{tpu_custom_call.1} parent=1 // pred_fallthru
      _
    // Predicated region
    $region34: #{tpu_custom_call.1} parent=1 // pred_check
      _
    $region35: #{tpu_custom_call.1} parent=1 // pred_check_branch
      %55 = sbr.rel (0) target = $region37
    $region36: #{tpu_custom_call.1} parent=1 // pred_region
      _
    $region37: #{tpu_custom_call.1} parent=1 // pred_fallthru
      _
    // Predicated region
    $region38: #{tpu_custom_call.1} parent=1 // pred_check
      _
    $region39: #{tpu_custom_call.1} parent=1 // pred_check_branch
      %57 = sbr.rel (0) target = $region41
    $region40: #{tpu_custom_call.1} parent=1 // pred_region
      _
    $region41: #{tpu_custom_call.1} parent=1 // pred_fallthru
      _
    // Predicated region
    $region42: #{tpu_custom_call.1} parent=1 // pred_check
      _
    $region43: #{tpu_custom_call.1} parent=1 // pred_check_branch
      %59 = sbr.rel (0) target = $region45
    $region44: #{tpu_custom_call.1} parent=1 // pred_region
      %60 = dma.done [#allocation3], 4096
    $region45: #{tpu_custom_call.1} parent=1 // pred_fallthru
      _
    // Predicated region
    $region46: #{tpu_custom_call.1} parent=1 // pred_check
      _
    $region47: #{tpu_custom_call.1} parent=1 // pred_check_branch
      %62 = sbr.rel (0) target = $region49
    $region48: #{tpu_custom_call.1} parent=1 // pred_region
      %63 = dma.done [#allocation6], 64
    $region49: #{tpu_custom_call.1} parent=1 // pred_fallthru
      _
    %v65 = vld [vmem:[%s0] sm:$0xf]
    %v66 = vld [vmem:[%s0 + $0x4] sm:$0xf]
    %v67 = vld [vmem:[%s0 + $0x8] sm:$0xf]
    %v68 = vld [vmem:[%s0 + $0xc] sm:$0xf]
    %v69 = vld [vmem:[%s0 + $0x10] sm:$0xf]
    %v70 = vld [vmem:[%s0 + $0x14] sm:$0xf]
    %v71 = vld [vmem:[%s0 + $0x18] sm:$0xf]
    %v72 = vld [vmem:[%s0 + $0x1c] sm:$0xf]
    %v73 = vld [vmem:[%s0 + $0x20] sm:$0xf]
    %v74 = vld [vmem:[%s0 + $0x24] sm:$0xf]
    %v75 = vld [vmem:[%s0 + $0x28] sm:$0xf]
    %v76 = vld [vmem:[%s0 + $0x2c] sm:$0xf]
    %v77 = vld [vmem:[%s0 + $0x30] sm:$0xf]
    %v78 = vld [vmem:[%s0 + $0x34] sm:$0xf]
    %v79 = vld [vmem:[%s0 + $0x38] sm:$0xf]
    %v80 = vld [vmem:[%s0 + $0x3c] sm:$0xf]
    %v81 = vld [vmem:[%s0 + $0x40] sm:$0xf]
    %v82 = vld [vmem:[%s0 + $0x44] sm:$0xf]
    %v83 = vld [vmem:[%s0 + $0x48] sm:$0xf]
    %v84 = vld [vmem:[%s0 + $0x4c] sm:$0xf]
    %v85 = vld [vmem:[%s0 + $0x50] sm:$0xf]
    %v86 = vld [vmem:[%s0 + $0x54] sm:$0xf]
    %v87 = vld [vmem:[%s0 + $0x58] sm:$0xf]
    %v88 = vld [vmem:[%s0 + $0x5c] sm:$0xf]
    %v89 = vld [vmem:[%s0 + $0x60] sm:$0xf]
    %v90 = vld [vmem:[%s0 + $0x64] sm:$0xf]
    %v91 = vld [vmem:[%s0 + $0x68] sm:$0xf]
    %v92 = vld [vmem:[%s0 + $0x6c] sm:$0xf]
    %v93 = vld [vmem:[%s0 + $0x70] sm:$0xf]
    %v94 = vld [vmem:[%s0 + $0x74] sm:$0xf]
    %v95 = vld [vmem:[%s0 + $0x78] sm:$0xf]
    %v96 = vld [vmem:[%s0 + $0x7c] sm:$0xf]
    %v97 = vld [vmem:[%s1] sm:$0xf]
    %v98 = vld [vmem:[%s1 + $0x4] sm:$0xf]
    %v99 = vld [vmem:[%s1 + $0x8] sm:$0xf]
    %v100 = vld [vmem:[%s1 + $0xc] sm:$0xf]
    %v101 = vld [vmem:[%s1 + $0x10] sm:$0xf]
    %v102 = vld [vmem:[%s1 + $0x14] sm:$0xf]
    %v103 = vld [vmem:[%s1 + $0x18] sm:$0xf]
    %v104 = vld [vmem:[%s1 + $0x1c] sm:$0xf]
    %v105 = vld [vmem:[%s2] sm:$0x1]
    %v107 = vlaneseq
    %v108 = vshrl.u32 %v107, 7
    %v109 = vsub.s32 0, %v108
    %v110 = vrot.slane %v105, %v109
    %v144 = vunpack.c.l.b16 %v65
    %v145 = vunpack.c.l.b16 %v66
    %v146 = vunpack.c.l.b16 %v67
    %v147 = vunpack.c.l.b16 %v68
    %v148 = vunpack.c.l.b16 %v69
    %v149 = vunpack.c.l.b16 %v70
    %v150 = vunpack.c.l.b16 %v71
    %v151 = vunpack.c.l.b16 %v72
    %v152 = vunpack.c.l.b16 %v73
    %v153 = vunpack.c.l.b16 %v74
    %v154 = vunpack.c.l.b16 %v75
    %v155 = vunpack.c.l.b16 %v76
    %v156 = vunpack.c.l.b16 %v77
    %v157 = vunpack.c.l.b16 %v78
    %v158 = vunpack.c.l.b16 %v79
    %v159 = vunpack.c.l.b16 %v80
    %v160 = vunpack.c.l.b16 %v81
    %v161 = vunpack.c.l.b16 %v82
    %v162 = vunpack.c.l.b16 %v83
    %v163 = vunpack.c.l.b16 %v84
    %v164 = vunpack.c.l.b16 %v85
    %v165 = vunpack.c.l.b16 %v86
    %v166 = vunpack.c.l.b16 %v87
    %v167 = vunpack.c.l.b16 %v88
    %v168 = vunpack.c.l.b16 %v89
    %v169 = vunpack.c.l.b16 %v90
    %v170 = vunpack.c.l.b16 %v91
    %v171 = vunpack.c.l.b16 %v92
    %v172 = vunpack.c.l.b16 %v93
    %v173 = vunpack.c.l.b16 %v94
    %v174 = vunpack.c.l.b16 %v95
    %v175 = vunpack.c.l.b16 %v96
    %v176 = vpack.c.b16 %v145, %v144
    %v177 = vpack.c.b16 %v147, %v146
    %v178 = vpack.c.b16 %v149, %v148
    %v179 = vpack.c.b16 %v151, %v150
    %v180 = vpack.c.b16 %v153, %v152
    %v181 = vpack.c.b16 %v155, %v154
    %v182 = vpack.c.b16 %v157, %v156
    %v183 = vpack.c.b16 %v159, %v158
    %v184 = vpack.c.b16 %v161, %v160
    %v185 = vpack.c.b16 %v163, %v162
    %v186 = vpack.c.b16 %v165, %v164
    %v187 = vpack.c.b16 %v167, %v166
    %v188 = vpack.c.b16 %v169, %v168
    %v189 = vpack.c.b16 %v171, %v170
    %v190 = vpack.c.b16 %v173, %v172
    %v191 = vpack.c.b16 %v175, %v174
    %v200 = vunpack.c.l.b16 %v97
    %v201 = vunpack.c.l.b16 %v98
    %v202 = vunpack.c.l.b16 %v99
    %v203 = vunpack.c.l.b16 %v100
    %v204 = vunpack.c.l.b16 %v101
    %v205 = vunpack.c.l.b16 %v102
    %v206 = vunpack.c.l.b16 %v103
    %v207 = vunpack.c.l.b16 %v104
    %v208 = vpack.c.b16 %v201, %v200
    %v209 = vpack.c.b16 %v203, %v202
    %v210 = vpack.c.b16 %v205, %v204
    %v211 = vpack.c.b16 %v207, %v206
    %vm216 = vcmask 523264
    %v218 = vsel %vm216, %v176, 0
    %v221 = vsel %vm216, %v177, 0
    %v224 = vsel %vm216, %v178, 0
    %v227 = vsel %vm216, %v179, 0
    %v230 = vsel %vm216, %v180, 0
    %v233 = vsel %vm216, %v181, 0
    %v236 = vsel %vm216, %v182, 0
    %v239 = vsel %vm216, %v183, 0
    %v242 = vsel %vm216, %v184, 0
    %v245 = vsel %vm216, %v185, 0
    %v248 = vsel %vm216, %v186, 0
    %v251 = vsel %vm216, %v187, 0
    %v254 = vsel %vm216, %v188, 0
    %v257 = vsel %vm216, %v189, 0
    %v260 = vsel %vm216, %v190, 0
    %v263 = vsel %vm216, %v191, 0
    %265 = vmatprep.subr.bf16.mxu0 0
    %266 = vmatpush1.bf16.msra.mxu0 %v208
    %267 = vmatprep.subr.bf16.mxu0 0
    %268 = vmatpush1.bf16.msra.mxu0 %v209
    %269 = vmatprep.subr.bf16.mxu0 0
    %270 = vmatpush1.bf16.msra.mxu0 %v210
    %271 = vmatprep.subr.bf16.mxu0 0
    %272 = vmatpush1.bf16.msra.mxu0 %v211
    %273 = vmatprep.subr.bf16.mxu0 0
    %274 = vmatpush1.bf16.msra.mxu0 0
    %275 = vmatprep.subr.bf16.mxu0 0
    %276 = vmatpush1.bf16.msra.mxu0 0
    %277 = vmatprep.subr.bf16.mxu0 0
    %278 = vmatpush1.bf16.msra.mxu0 0
    %279 = vmatprep.subr.bf16.mxu0 0
    %280 = vmatpush1.bf16.msra.mxu0 0
    %281 = vmatprep.subr.bf16.mxu0 0
    %282 = vmatpush1.bf16.msra.mxu0 0
    %283 = vmatprep.subr.bf16.mxu0 0
    %284 = vmatpush1.bf16.msra.mxu0 0
    %285 = vmatprep.subr.bf16.mxu0 0
    %286 = vmatpush1.bf16.msra.mxu0 0
    %287 = vmatprep.subr.bf16.mxu0 0
    %288 = vmatpush1.bf16.msra.mxu0 0
    %289 = vmatprep.subr.bf16.mxu0 0
    %290 = vmatpush1.bf16.msra.mxu0 0
    %291 = vmatprep.subr.bf16.mxu0 0
    %292 = vmatpush1.bf16.msra.mxu0 0
    %293 = vmatprep.subr.bf16.mxu0 0
    %294 = vmatpush1.bf16.msra.mxu0 0
    %295 = vmatprep.subr.bf16.mxu0 0
    %296 = vmatpush1.bf16.msra.mxu0 0
    %297 = vmatprep.mubr.bf16.mxu0 0
    %298 = vmatmul.mubr.bf16.gmra.mrb[0].mxu0 %v218
    %v299 = vpop.f32.mrb[0].mxu0
    %v300 = vadd.f32 %v110, %v299
    %v301 = vpop.f32.mrb[0].mxu0
    %v302 = vpop.f32.mrb[0].mxu0
    %v303 = vadd.f32 %v110, %v302
    %v304 = vpop.f32.mrb[0].mxu0
    %305 = vmatprep.mubr.bf16.mxu0 0
    %306 = vmatmul.mubr.bf16.gmra.mrb[0].mxu0 %v221
    %v307 = vpop.f32.mrb[0].mxu0
    %v308 = vadd.f32 %v110, %v307
    %v309 = vpop.f32.mrb[0].mxu0
    %v310 = vpop.f32.mrb[0].mxu0
    %v311 = vadd.f32 %v110, %v310
    %v312 = vpop.f32.mrb[0].mxu0
    %313 = vmatprep.mubr.bf16.mxu0 0
    %314 = vmatmul.mubr.bf16.gmra.mrb[0].mxu0 %v224
    %v315 = vpop.f32.mrb[0].mxu0
    %v316 = vadd.f32 %v110, %v315
    %v317 = vpop.f32.mrb[0].mxu0
    %v318 = vpop.f32.mrb[0].mxu0
    %v319 = vadd.f32 %v110, %v318
    %v320 = vpop.f32.mrb[0].mxu0
    %321 = vmatprep.mubr.bf16.mxu0 0
    %322 = vmatmul.mubr.bf16.gmra.mrb[0].mxu0 %v227
    %v323 = vpop.f32.mrb[0].mxu0
    %v324 = vadd.f32 %v110, %v323
    %v325 = vpop.f32.mrb[0].mxu0
    %v326 = vpop.f32.mrb[0].mxu0
    %v327 = vadd.f32 %v110, %v326
    %v328 = vpop.f32.mrb[0].mxu0
    %329 = vmatprep.mubr.bf16.mxu0 0
    %330 = vmatmul.mubr.bf16.gmra.mrb[0].mxu0 %v230
    %v331 = vpop.f32.mrb[0].mxu0
    %v332 = vadd.f32 %v110, %v331
    %v333 = vpop.f32.mrb[0].mxu0
    %v334 = vpop.f32.mrb[0].mxu0
    %v335 = vadd.f32 %v110, %v334
    %v336 = vpop.f32.mrb[0].mxu0
    %337 = vmatprep.mubr.bf16.mxu0 0
    %338 = vmatmul.mubr.bf16.gmra.mrb[0].mxu0 %v233
    %v339 = vpop.f32.mrb[0].mxu0
    %v340 = vadd.f32 %v110, %v339
    %v341 = vpop.f32.mrb[0].mxu0
    %v342 = vpop.f32.mrb[0].mxu0
    %v343 = vadd.f32 %v110, %v342
    %v344 = vpop.f32.mrb[0].mxu0
    %345 = vmatprep.mubr.bf16.mxu0 0
    %346 = vmatmul.mubr.bf16.gmra.mrb[0].mxu0 %v236
    %v347 = vpop.f32.mrb[0].mxu0
    %v348 = vadd.f32 %v110, %v347
    %v349 = vpop.f32.mrb[0].mxu0
    %v350 = vpop.f32.mrb[0].mxu0
    %v351 = vadd.f32 %v110, %v350
    %v352 = vpop.f32.mrb[0].mxu0
    %353 = vmatprep.mubr.bf16.mxu0 0
    %354 = vmatmul.mubr.bf16.gmra.mrb[0].mxu0 %v239
    %v355 = vpop.f32.mrb[0].mxu0
    %v356 = vadd.f32 %v110, %v355
    %v357 = vpop.f32.mrb[0].mxu0
    %v358 = vpop.f32.mrb[0].mxu0
    %v359 = vadd.f32 %v110, %v358
    %v360 = vpop.f32.mrb[0].mxu0
    %361 = vmatprep.mubr.bf16.mxu0 0
    %362 = vmatmul.mubr.bf16.gmra.mrb[0].mxu0 %v242
    %v363 = vpop.f32.mrb[0].mxu0
    %v364 = vadd.f32 %v110, %v363
    %v365 = vpop.f32.mrb[0].mxu0
    %v366 = vpop.f32.mrb[0].mxu0
    %v367 = vadd.f32 %v110, %v366
    %v368 = vpop.f32.mrb[0].mxu0
    %369 = vmatprep.mubr.bf16.mxu0 0
    %370 = vmatmul.mubr.bf16.gmra.mrb[0].mxu0 %v245
    %v371 = vpop.f32.mrb[0].mxu0
    %v372 = vadd.f32 %v110, %v371
    %v373 = vpop.f32.mrb[0].mxu0
    %v374 = vpop.f32.mrb[0].mxu0
    %v375 = vadd.f32 %v110, %v374
    %v376 = vpop.f32.mrb[0].mxu0
    %377 = vmatprep.mubr.bf16.mxu0 0
    %378 = vmatmul.mubr.bf16.gmra.mrb[0].mxu0 %v248
    %v379 = vpop.f32.mrb[0].mxu0
    %v380 = vadd.f32 %v110, %v379
    %v381 = vpop.f32.mrb[0].mxu0
    %v382 = vpop.f32.mrb[0].mxu0
    %v383 = vadd.f32 %v110, %v382
    %v384 = vpop.f32.mrb[0].mxu0
    %385 = vmatprep.mubr.bf16.mxu0 0
    %386 = vmatmul.mubr.bf16.gmra.mrb[0].mxu0 %v251
    %v387 = vpop.f32.mrb[0].mxu0
    %v388 = vadd.f32 %v110, %v387
    %v389 = vpop.f32.mrb[0].mxu0
    %v390 = vpop.f32.mrb[0].mxu0
    %v391 = vadd.f32 %v110, %v390
    %v392 = vpop.f32.mrb[0].mxu0
    %393 = vmatprep.mubr.bf16.mxu0 0
    %394 = vmatmul.mubr.bf16.gmra.mrb[0].mxu0 %v254
    %v395 = vpop.f32.mrb[0].mxu0
    %v396 = vadd.f32 %v110, %v395
    %v397 = vpop.f32.mrb[0].mxu0
    %v398 = vpop.f32.mrb[0].mxu0
    %v399 = vadd.f32 %v110, %v398
    %v400 = vpop.f32.mrb[0].mxu0
    %401 = vmatprep.mubr.bf16.mxu0 0
    %402 = vmatmul.mubr.bf16.gmra.mrb[0].mxu0 %v257
    %v403 = vpop.f32.mrb[0].mxu0
    %v404 = vadd.f32 %v110, %v403
    %v405 = vpop.f32.mrb[0].mxu0
    %v406 = vpop.f32.mrb[0].mxu0
    %v407 = vadd.f32 %v110, %v406
    %v408 = vpop.f32.mrb[0].mxu0
    %409 = vmatprep.mubr.bf16.mxu0 0
    %410 = vmatmul.mubr.bf16.gmra.mrb[0].mxu0 %v260
    %v411 = vpop.f32.mrb[0].mxu0
    %v412 = vadd.f32 %v110, %v411
    %v413 = vpop.f32.mrb[0].mxu0
    %v414 = vpop.f32.mrb[0].mxu0
    %v415 = vadd.f32 %v110, %v414
    %v416 = vpop.f32.mrb[0].mxu0
    %417 = vmatprep.mubr.bf16.mxu0 0
    %418 = vmatmul.mubr.bf16.gmra.mrb[0].mxu0 %v263
    %v419 = vpop.f32.mrb[0].mxu0
    %v420 = vadd.f32 %v110, %v419
    %v421 = vpop.f32.mrb[0].mxu0
    %v422 = vpop.f32.mrb[0].mxu0
    %v423 = vadd.f32 %v110, %v422
    %v424 = vpop.f32.mrb[0].mxu0
    %425 = vdwg.mxu0
    %v426 = vmax.f32 %v300, 0.0
    %v427 = vmax.f32 %v303, 0.0
    %v428 = vmax.f32 %v308, 0.0
    %v429 = vmax.f32 %v311, 0.0
    %v430 = vmax.f32 %v316, 0.0
    %v431 = vmax.f32 %v319, 0.0
    %v432 = vmax.f32 %v324, 0.0
    %v433 = vmax.f32 %v327, 0.0
    %v434 = vmax.f32 %v332, 0.0
    %v435 = vmax.f32 %v335, 0.0
    %v436 = vmax.f32 %v340, 0.0
    %v437 = vmax.f32 %v343, 0.0
    %v438 = vmax.f32 %v348, 0.0
    %v439 = vmax.f32 %v351, 0.0
    %v440 = vmax.f32 %v356, 0.0
    %v441 = vmax.f32 %v359, 0.0
    %v442 = vmax.f32 %v364, 0.0
    %v443 = vmax.f32 %v367, 0.0
    %v444 = vmax.f32 %v372, 0.0
    %v445 = vmax.f32 %v375, 0.0
    %v446 = vmax.f32 %v380, 0.0
    %v447 = vmax.f32 %v383, 0.0
    %v448 = vmax.f32 %v388, 0.0
    %v449 = vmax.f32 %v391, 0.0
    %v450 = vmax.f32 %v396, 0.0
    %v451 = vmax.f32 %v399, 0.0
    %v452 = vmax.f32 %v404, 0.0
    %v453 = vmax.f32 %v407, 0.0
    %v454 = vmax.f32 %v412, 0.0
    %v455 = vmax.f32 %v415, 0.0
    %v456 = vmax.f32 %v420, 0.0
    %v457 = vmax.f32 %v423, 0.0
    %v458 = vpack.c.bf16 %v427, %v426
    %v459 = vpack.c.bf16 %v429, %v428
    %v460 = vpack.c.bf16 %v431, %v430
    %v461 = vpack.c.bf16 %v433, %v432
    %v462 = vpack.c.bf16 %v435, %v434
    %v463 = vpack.c.bf16 %v437, %v436
    %v464 = vpack.c.bf16 %v439, %v438
    %v465 = vpack.c.bf16 %v441, %v440
    %v466 = vpack.c.bf16 %v443, %v442
    %v467 = vpack.c.bf16 %v445, %v444
    %v468 = vpack.c.bf16 %v447, %v446
    %v469 = vpack.c.bf16 %v449, %v448
    %v470 = vpack.c.bf16 %v451, %v450
    %v471 = vpack.c.bf16 %v453, %v452
    %v472 = vpack.c.bf16 %v455, %v454
    %v473 = vpack.c.bf16 %v457, %v456
    %v474 = vld [vmem:[#allocation2] sm:$0xf]
    %v475 = vld [vmem:[#allocation2 + $0x4] sm:$0xf]
    %v476 = vld [vmem:[#allocation2 + $0x8] sm:$0xf]
    %v477 = vld [vmem:[#allocation2 + $0xc] sm:$0xf]
    %s478 = scalar_lea.vmem [#allocation2], 16
    %v479 = vld [vmem:[%s478] sm:$0xf]
    %v480 = vld [vmem:[%s478 + $0x4] sm:$0xf]
    %v481 = vld [vmem:[%s478 + $0x8] sm:$0xf]
    %v482 = vld [vmem:[%s478 + $0xc] sm:$0xf]
    %v487 = vunpack.c.l.b16 %v479
    %v488 = vunpack.c.l.b16 %v480
    %v489 = vunpack.c.l.b16 %v481
    %v490 = vunpack.c.l.b16 %v482
    %v491 = vpack.c.b16 %v488, %v487
    %v492 = vpack.c.b16 %v490, %v489
    %vm495 = vcmask 261120
    %v497 = vsel %vm495, %v459, 0
    %499 = vmatprep.subr.bf16.mxu0 0
    %500 = vmatpush1.bf16.msra.mxu0 %v491
    %501 = vmatprep.subr.bf16.mxu0 0
    %502 = vmatpush1.bf16.msra.mxu0 %v492
    %503 = vmatprep.subr.bf16.mxu0 0
    %504 = vmatpush1.bf16.msra.mxu0 0
    %505 = vmatprep.subr.bf16.mxu0 0
    %506 = vmatpush1.bf16.msra.mxu0 0
    %507 = vmatprep.subr.bf16.mxu0 0
    %508 = vmatpush1.bf16.msra.mxu0 0
    %509 = vmatprep.subr.bf16.mxu0 0
    %510 = vmatpush1.bf16.msra.mxu0 0
    %511 = vmatprep.subr.bf16.mxu0 0
    %512 = vmatpush1.bf16.msra.mxu0 0
    %513 = vmatprep.subr.bf16.mxu0 0
    %514 = vmatpush1.bf16.msra.mxu0 0
    %515 = vmatprep.subr.bf16.mxu0 0
    %516 = vmatpush1.bf16.msra.mxu0 0
    %517 = vmatprep.subr.bf16.mxu0 0
    %518 = vmatpush1.bf16.msra.mxu0 0
    %519 = vmatprep.subr.bf16.mxu0 0
    %520 = vmatpush1.bf16.msra.mxu0 0
    %521 = vmatprep.subr.bf16.mxu0 0
    %522 = vmatpush1.bf16.msra.mxu0 0
    %523 = vmatprep.subr.bf16.mxu0 0
    %524 = vmatpush1.bf16.msra.mxu0 0
    %525 = vmatprep.subr.bf16.mxu0 0
    %526 = vmatpush1.bf16.msra.mxu0 0
    %527 = vmatprep.subr.bf16.mxu0 0
    %528 = vmatpush1.bf16.msra.mxu0 0
    %529 = vmatprep.subr.bf16.mxu0 0
    %530 = vmatpush1.bf16.msra.mxu0 0
    %531 = vmatprep.mubr.bf16.mxu0 0
    %532 = vmatmul.mubr.bf16.gmra.mrb[0].mxu0 %v497
    %v533 = vpop.f32.mrb[0].mxu0
    %v534 = vadd.f32 0.0, %v533
    %v535 = vpop.f32.mrb[0].mxu0
    %v536 = vpop.f32.mrb[0].mxu0
    %v537 = vadd.f32 0.0, %v536
    %v538 = vpop.f32.mrb[0].mxu0
    %539 = vdwg.mxu0
    %v544 = vunpack.c.l.b16 %v474
    %v545 = vunpack.c.l.b16 %v475
    %v546 = vunpack.c.l.b16 %v476
    %v547 = vunpack.c.l.b16 %v477
    %v548 = vpack.c.b16 %v545, %v544
    %v549 = vpack.c.b16 %v547, %v546
    %v553 = vsel %vm495, %v458, 0
    %555 = vmatprep.subr.bf16.mxu0 0
    %556 = vmatpush1.bf16.msra.mxu0 %v548
    %557 = vmatprep.subr.bf16.mxu0 0
    %558 = vmatpush1.bf16.msra.mxu0 %v549
    %559 = vmatprep.subr.bf16.mxu0 0
    %560 = vmatpush1.bf16.msra.mxu0 0
    %561 = vmatprep.subr.bf16.mxu0 0
    %562 = vmatpush1.bf16.msra.mxu0 0
    %563 = vmatprep.subr.bf16.mxu0 0
    %564 = vmatpush1.bf16.msra.mxu0 0
    %565 = vmatprep.subr.bf16.mxu0 0
    %566 = vmatpush1.bf16.msra.mxu0 0
    %567 = vmatprep.subr.bf16.mxu0 0
    %568 = vmatpush1.bf16.msra.mxu0 0
    %569 = vmatprep.subr.bf16.mxu0 0
    %570 = vmatpush1.bf16.msra.mxu0 0
    %571 = vmatprep.subr.bf16.mxu0 0
    %572 = vmatpush1.bf16.msra.mxu0 0
    %573 = vmatprep.subr.bf16.mxu0 0
    %574 = vmatpush1.bf16.msra.mxu0 0
    %575 = vmatprep.subr.bf16.mxu0 0
    %576 = vmatpush1.bf16.msra.mxu0 0
    %577 = vmatprep.subr.bf16.mxu0 0
    %578 = vmatpush1.bf16.msra.mxu0 0
    %579 = vmatprep.subr.bf16.mxu0 0
    %580 = vmatpush1.bf16.msra.mxu0 0
    %581 = vmatprep.subr.bf16.mxu0 0
    %582 = vmatpush1.bf16.msra.mxu0 0
    %583 = vmatprep.subr.bf16.mxu0 0
    %584 = vmatpush1.bf16.msra.mxu0 0
    %585 = vmatprep.subr.bf16.mxu0 0
    %586 = vmatpush1.bf16.msra.mxu0 0
    %587 = vmatprep.mubr.bf16.mxu0 0
    %588 = vmatmul.mubr.bf16.gmra.mrb[0].mxu0 %v553
    %v589 = vpop.f32.mrb[0].mxu0
    %v590 = vadd.f32 %v534, %v589
    %v591 = vpop.f32.mrb[0].mxu0
    %v592 = vpop.f32.mrb[0].mxu0
    %v593 = vadd.f32 %v537, %v592
    %v594 = vpop.f32.mrb[0].mxu0
    %595 = vdwg.mxu0
    %s596 = scalar_lea.vmem [#allocation2], 32
    %v597 = vld [vmem:[%s596] sm:$0xf]
    %v598 = vld [vmem:[%s596 + $0x4] sm:$0xf]
    %v599 = vld [vmem:[%s596 + $0x8] sm:$0xf]
    %v600 = vld [vmem:[%s596 + $0xc] sm:$0xf]
    %v605 = vunpack.c.l.b16 %v597
    %v606 = vunpack.c.l.b16 %v598
    %v607 = vunpack.c.l.b16 %v599
    %v608 = vunpack.c.l.b16 %v600
    %v609 = vpack.c.b16 %v606, %v605
    %v610 = vpack.c.b16 %v608, %v607
    %v614 = vsel %vm495, %v460, 0
    %616 = vmatprep.subr.bf16.mxu0 0
    %617 = vmatpush1.bf16.msra.mxu0 %v609
    %618 = vmatprep.subr.bf16.mxu0 0
    %619 = vmatpush1.bf16.msra.mxu0 %v610
    %620 = vmatprep.subr.bf16.mxu0 0
    %621 = vmatpush1.bf16.msra.mxu0 0
    %622 = vmatprep.subr.bf16.mxu0 0
    %623 = vmatpush1.bf16.msra.mxu0 0
    %624 = vmatprep.subr.bf16.mxu0 0
    %625 = vmatpush1.bf16.msra.mxu0 0
    %626 = vmatprep.subr.bf16.mxu0 0
    %627 = vmatpush1.bf16.msra.mxu0 0
    %628 = vmatprep.subr.bf16.mxu0 0
    %629 = vmatpush1.bf16.msra.mxu0 0
    %630 = vmatprep.subr.bf16.mxu0 0
    %631 = vmatpush1.bf16.msra.mxu0 0
    %632 = vmatprep.subr.bf16.mxu0 0
    %633 = vmatpush1.bf16.msra.mxu0 0
    %634 = vmatprep.subr.bf16.mxu0 0
    %635 = vmatpush1.bf16.msra.mxu0 0
    %636 = vmatprep.subr.bf16.mxu0 0
    %637 = vmatpush1.bf16.msra.mxu0 0
    %638 = vmatprep.subr.bf16.mxu0 0
    %639 = vmatpush1.bf16.msra.mxu0 0
    %640 = vmatprep.subr.bf16.mxu0 0
    %641 = vmatpush1.bf16.msra.mxu0 0
    %642 = vmatprep.subr.bf16.mxu0 0
    %643 = vmatpush1.bf16.msra.mxu0 0
    %644 = vmatprep.subr.bf16.mxu0 0
    %645 = vmatpush1.bf16.msra.mxu0 0
    %646 = vmatprep.subr.bf16.mxu0 0
    %647 = vmatpush1.bf16.msra.mxu0 0
    %648 = vmatprep.mubr.bf16.mxu0 0
    %649 = vmatmul.mubr.bf16.gmra.mrb[0].mxu0 %v614
    %v650 = vpop.f32.mrb[0].mxu0
    %v651 = vadd.f32 0.0, %v650
    %v652 = vpop.f32.mrb[0].mxu0
    %v653 = vpop.f32.mrb[0].mxu0
    %v654 = vadd.f32 0.0, %v653
    %v655 = vpop.f32.mrb[0].mxu0
    %656 = vdwg.mxu0
    %v657 = vadd.f32 %v590, %v651
    %v658 = vadd.f32 %v593, %v654
    %s659 = scalar_lea.vmem [#allocation2], 48
    %v660 = vld [vmem:[%s659] sm:$0xf]
    %v661 = vld [vmem:[%s659 + $0x4] sm:$0xf]
    %v662 = vld [vmem:[%s659 + $0x8] sm:$0xf]
    %v663 = vld [vmem:[%s659 + $0xc] sm:$0xf]
    %v668 = vunpack.c.l.b16 %v660
    %v669 = vunpack.c.l.b16 %v661
    %v670 = vunpack.c.l.b16 %v662
    %v671 = vunpack.c.l.b16 %v663
    %v672 = vpack.c.b16 %v669, %v668
    %v673 = vpack.c.b16 %v671, %v670
    %v677 = vsel %vm495, %v461, 0
    %679 = vmatprep.subr.bf16.mxu0 0
    %680 = vmatpush1.bf16.msra.mxu0 %v672
    %681 = vmatprep.subr.bf16.mxu0 0
    %682 = vmatpush1.bf16.msra.mxu0 %v673
    %683 = vmatprep.subr.bf16.mxu0 0
    %684 = vmatpush1.bf16.msra.mxu0 0
    %685 = vmatprep.subr.bf16.mxu0 0
    %686 = vmatpush1.bf16.msra.mxu0 0
    %687 = vmatprep.subr.bf16.mxu0 0
    %688 = vmatpush1.bf16.msra.mxu0 0
    %689 = vmatprep.subr.bf16.mxu0 0
    %690 = vmatpush1.bf16.msra.mxu0 0
    %691 = vmatprep.subr.bf16.mxu0 0
    %692 = vmatpush1.bf16.msra.mxu0 0
    %693 = vmatprep.subr.bf16.mxu0 0
    %694 = vmatpush1.bf16.msra.mxu0 0
    %695 = vmatprep.subr.bf16.mxu0 0
    %696 = vmatpush1.bf16.msra.mxu0 0
    %697 = vmatprep.subr.bf16.mxu0 0
    %698 = vmatpush1.bf16.msra.mxu0 0
    %699 = vmatprep.subr.bf16.mxu0 0
    %700 = vmatpush1.bf16.msra.mxu0 0
    %701 = vmatprep.subr.bf16.mxu0 0
    %702 = vmatpush1.bf16.msra.mxu0 0
    %703 = vmatprep.subr.bf16.mxu0 0
    %704 = vmatpush1.bf16.msra.mxu0 0
    %705 = vmatprep.subr.bf16.mxu0 0
    %706 = vmatpush1.bf16.msra.mxu0 0
    %707 = vmatprep.subr.bf16.mxu0 0
    %708 = vmatpush1.bf16.msra.mxu0 0
    %709 = vmatprep.subr.bf16.mxu0 0
    %710 = vmatpush1.bf16.msra.mxu0 0
    %711 = vmatprep.mubr.bf16.mxu0 0
    %712 = vmatmul.mubr.bf16.gmra.mrb[0].mxu0 %v677
    %v713 = vpop.f32.mrb[0].mxu0
    %v714 = vadd.f32 0.0, %v713
    %v715 = vpop.f32.mrb[0].mxu0
    %v716 = vpop.f32.mrb[0].mxu0
    %v717 = vadd.f32 0.0, %v716
    %v718 = vpop.f32.mrb[0].mxu0
    %719 = vdwg.mxu0
    %v720 = vadd.f32 %v657, %v714
    %v721 = vadd.f32 %v658, %v717
    %s722 = scalar_lea.vmem [#allocation2], 64
    %v723 = vld [vmem:[%s722] sm:$0xf]
    %v724 = vld [vmem:[%s722 + $0x4] sm:$0xf]
    %v725 = vld [vmem:[%s722 + $0x8] sm:$0xf]
    %v726 = vld [vmem:[%s722 + $0xc] sm:$0xf]
    %v731 = vunpack.c.l.b16 %v723
    %v732 = vunpack.c.l.b16 %v724
    %v733 = vunpack.c.l.b16 %v725
    %v734 = vunpack.c.l.b16 %v726
    %v735 = vpack.c.b16 %v732, %v731
    %v736 = vpack.c.b16 %v734, %v733
    %v740 = vsel %vm495, %v462, 0
    %742 = vmatprep.subr.bf16.mxu0 0
    %743 = vmatpush1.bf16.msra.mxu0 %v735
    %744 = vmatprep.subr.bf16.mxu0 0
    %745 = vmatpush1.bf16.msra.mxu0 %v736
    %746 = vmatprep.subr.bf16.mxu0 0
    %747 = vmatpush1.bf16.msra.mxu0 0
    %748 = vmatprep.subr.bf16.mxu0 0
    %749 = vmatpush1.bf16.msra.mxu0 0
    %750 = vmatprep.subr.bf16.mxu0 0
    %751 = vmatpush1.bf16.msra.mxu0 0
    %752 = vmatprep.subr.bf16.mxu0 0
    %753 = vmatpush1.bf16.msra.mxu0 0
    %754 = vmatprep.subr.bf16.mxu0 0
    %755 = vmatpush1.bf16.msra.mxu0 0
    %756 = vmatprep.subr.bf16.mxu0 0
    %757 = vmatpush1.bf16.msra.mxu0 0
    %758 = vmatprep.subr.bf16.mxu0 0
    %759 = vmatpush1.bf16.msra.mxu0 0
    %760 = vmatprep.subr.bf16.mxu0 0
    %761 = vmatpush1.bf16.msra.mxu0 0
    %762 = vmatprep.subr.bf16.mxu0 0
    %763 = vmatpush1.bf16.msra.mxu0 0
    %764 = vmatprep.subr.bf16.mxu0 0
    %765 = vmatpush1.bf16.msra.mxu0 0
    %766 = vmatprep.subr.bf16.mxu0 0
    %767 = vmatpush1.bf16.msra.mxu0 0
    %768 = vmatprep.subr.bf16.mxu0 0
    %769 = vmatpush1.bf16.msra.mxu0 0
    %770 = vmatprep.subr.bf16.mxu0 0
    %771 = vmatpush1.bf16.msra.mxu0 0
    %772 = vmatprep.subr.bf16.mxu0 0
    %773 = vmatpush1.bf16.msra.mxu0 0
    %774 = vmatprep.mubr.bf16.mxu0 0
    %775 = vmatmul.mubr.bf16.gmra.mrb[0].mxu0 %v740
    %v776 = vpop.f32.mrb[0].mxu0
    %v777 = vadd.f32 0.0, %v776
    %v778 = vpop.f32.mrb[0].mxu0
    %v779 = vpop.f32.mrb[0].mxu0
    %v780 = vadd.f32 0.0, %v779
    %v781 = vpop.f32.mrb[0].mxu0
    %782 = vdwg.mxu0
    %v783 = vadd.f32 %v720, %v777
    %v784 = vadd.f32 %v721, %v780
    %s785 = scalar_lea.vmem [#allocation2], 80
    %v786 = vld [vmem:[%s785] sm:$0xf]
    %v787 = vld [vmem:[%s785 + $0x4] sm:$0xf]
    %v788 = vld [vmem:[%s785 + $0x8] sm:$0xf]
    %v789 = vld [vmem:[%s785 + $0xc] sm:$0xf]
    %v794 = vunpack.c.l.b16 %v786
    %v795 = vunpack.c.l.b16 %v787
    %v796 = vunpack.c.l.b16 %v788
    %v797 = vunpack.c.l.b16 %v789
    %v798 = vpack.c.b16 %v795, %v794
    %v799 = vpack.c.b16 %v797, %v796
    %v803 = vsel %vm495, %v463, 0
    %805 = vmatprep.subr.bf16.mxu0 0
    %806 = vmatpush1.bf16.msra.mxu0 %v798
    %807 = vmatprep.subr.bf16.mxu0 0
    %808 = vmatpush1.bf16.msra.mxu0 %v799
    %809 = vmatprep.subr.bf16.mxu0 0
    %810 = vmatpush1.bf16.msra.mxu0 0
    %811 = vmatprep.subr.bf16.mxu0 0
    %812 = vmatpush1.bf16.msra.mxu0 0
    %813 = vmatprep.subr.bf16.mxu0 0
    %814 = vmatpush1.bf16.msra.mxu0 0
    %815 = vmatprep.subr.bf16.mxu0 0
    %816 = vmatpush1.bf16.msra.mxu0 0
    %817 = vmatprep.subr.bf16.mxu0 0
    %818 = vmatpush1.bf16.msra.mxu0 0
    %819 = vmatprep.subr.bf16.mxu0 0
    %820 = vmatpush1.bf16.msra.mxu0 0
    %821 = vmatprep.subr.bf16.mxu0 0
    %822 = vmatpush1.bf16.msra.mxu0 0
    %823 = vmatprep.subr.bf16.mxu0 0
    %824 = vmatpush1.bf16.msra.mxu0 0
    %825 = vmatprep.subr.bf16.mxu0 0
    %826 = vmatpush1.bf16.msra.mxu0 0
    %827 = vmatprep.subr.bf16.mxu0 0
    %828 = vmatpush1.bf16.msra.mxu0 0
    %829 = vmatprep.subr.bf16.mxu0 0
    %830 = vmatpush1.bf16.msra.mxu0 0
    %831 = vmatprep.subr.bf16.mxu0 0
    %832 = vmatpush1.bf16.msra.mxu0 0
    %833 = vmatprep.subr.bf16.mxu0 0
    %834 = vmatpush1.bf16.msra.mxu0 0
    %835 = vmatprep.subr.bf16.mxu0 0
    %836 = vmatpush1.bf16.msra.mxu0 0
    %837 = vmatprep.mubr.bf16.mxu0 0
    %838 = vmatmul.mubr.bf16.gmra.mrb[0].mxu0 %v803
    %v839 = vpop.f32.mrb[0].mxu0
    %v840 = vadd.f32 0.0, %v839
    %v841 = vpop.f32.mrb[0].mxu0
    %v842 = vpop.f32.mrb[0].mxu0
    %v843 = vadd.f32 0.0, %v842
    %v844 = vpop.f32.mrb[0].mxu0
    %845 = vdwg.mxu0
    %v846 = vadd.f32 %v783, %v840
    %v847 = vadd.f32 %v784, %v843
    %s848 = scalar_lea.vmem [#allocation2], 96
    %v849 = vld [vmem:[%s848] sm:$0xf]
    %v850 = vld [vmem:[%s848 + $0x4] sm:$0xf]
    %v851 = vld [vmem:[%s848 + $0x8] sm:$0xf]
    %v852 = vld [vmem:[%s848 + $0xc] sm:$0xf]
    %v857 = vunpack.c.l.b16 %v849
    %v858 = vunpack.c.l.b16 %v850
    %v859 = vunpack.c.l.b16 %v851
    %v860 = vunpack.c.l.b16 %v852
    %v861 = vpack.c.b16 %v858, %v857
    %v862 = vpack.c.b16 %v860, %v859
    %v866 = vsel %vm495, %v464, 0
    %868 = vmatprep.subr.bf16.mxu0 0
    %869 = vmatpush1.bf16.msra.mxu0 %v861
    %870 = vmatprep.subr.bf16.mxu0 0
    %871 = vmatpush1.bf16.msra.mxu0 %v862
    %872 = vmatprep.subr.bf16.mxu0 0
    %873 = vmatpush1.bf16.msra.mxu0 0
    %874 = vmatprep.subr.bf16.mxu0 0
    %875 = vmatpush1.bf16.msra.mxu0 0
    %876 = vmatprep.subr.bf16.mxu0 0
    %877 = vmatpush1.bf16.msra.mxu0 0
    %878 = vmatprep.subr.bf16.mxu0 0
    %879 = vmatpush1.bf16.msra.mxu0 0
    %880 = vmatprep.subr.bf16.mxu0 0
    %881 = vmatpush1.bf16.msra.mxu0 0
    %882 = vmatprep.subr.bf16.mxu0 0
    %883 = vmatpush1.bf16.msra.mxu0 0
    %884 = vmatprep.subr.bf16.mxu0 0
    %885 = vmatpush1.bf16.msra.mxu0 0
    %886 = vmatprep.subr.bf16.mxu0 0
    %887 = vmatpush1.bf16.msra.mxu0 0
    %888 = vmatprep.subr.bf16.mxu0 0
    %889 = vmatpush1.bf16.msra.mxu0 0
    %890 = vmatprep.subr.bf16.mxu0 0
    %891 = vmatpush1.bf16.msra.mxu0 0
    %892 = vmatprep.subr.bf16.mxu0 0
    %893 = vmatpush1.bf16.msra.mxu0 0
    %894 = vmatprep.subr.bf16.mxu0 0
    %895 = vmatpush1.bf16.msra.mxu0 0
    %896 = vmatprep.subr.bf16.mxu0 0
    %897 = vmatpush1.bf16.msra.mxu0 0
    %898 = vmatprep.subr.bf16.mxu0 0
    %899 = vmatpush1.bf16.msra.mxu0 0
    %900 = vmatprep.mubr.bf16.mxu0 0
    %901 = vmatmul.mubr.bf16.gmra.mrb[0].mxu0 %v866
    %v902 = vpop.f32.mrb[0].mxu0
    %v903 = vadd.f32 0.0, %v902
    %v904 = vpop.f32.mrb[0].mxu0
    %v905 = vpop.f32.mrb[0].mxu0
    %v906 = vadd.f32 0.0, %v905
    %v907 = vpop.f32.mrb[0].mxu0
    %908 = vdwg.mxu0
    %v909 = vadd.f32 %v846, %v903
    %v910 = vadd.f32 %v847, %v906
    %s911 = scalar_lea.vmem [#allocation2], 112
    %v912 = vld [vmem:[%s911] sm:$0xf]
    %v913 = vld [vmem:[%s911 + $0x4] sm:$0xf]
    %v914 = vld [vmem:[%s911 + $0x8] sm:$0xf]
    %v915 = vld [vmem:[%s911 + $0xc] sm:$0xf]
    %v920 = vunpack.c.l.b16 %v912
    %v921 = vunpack.c.l.b16 %v913
    %v922 = vunpack.c.l.b16 %v914
    %v923 = vunpack.c.l.b16 %v915
    %v924 = vpack.c.b16 %v921, %v920
    %v925 = vpack.c.b16 %v923, %v922
    %v929 = vsel %vm495, %v465, 0
    %931 = vmatprep.subr.bf16.mxu0 0
    %932 = vmatpush1.bf16.msra.mxu0 %v924
    %933 = vmatprep.subr.bf16.mxu0 0
    %934 = vmatpush1.bf16.msra.mxu0 %v925
    %935 = vmatprep.subr.bf16.mxu0 0
    %936 = vmatpush1.bf16.msra.mxu0 0
    %937 = vmatprep.subr.bf16.mxu0 0
    %938 = vmatpush1.bf16.msra.mxu0 0
    %939 = vmatprep.subr.bf16.mxu0 0
    %940 = vmatpush1.bf16.msra.mxu0 0
    %941 = vmatprep.subr.bf16.mxu0 0
    %942 = vmatpush1.bf16.msra.mxu0 0
    %943 = vmatprep.subr.bf16.mxu0 0
    %944 = vmatpush1.bf16.msra.mxu0 0
    %945 = vmatprep.subr.bf16.mxu0 0
    %946 = vmatpush1.bf16.msra.mxu0 0
    %947 = vmatprep.subr.bf16.mxu0 0
    %948 = vmatpush1.bf16.msra.mxu0 0
    %949 = vmatprep.subr.bf16.mxu0 0
    %950 = vmatpush1.bf16.msra.mxu0 0
    %951 = vmatprep.subr.bf16.mxu0 0
    %952 = vmatpush1.bf16.msra.mxu0 0
    %953 = vmatprep.subr.bf16.mxu0 0
    %954 = vmatpush1.bf16.msra.mxu0 0
    %955 = vmatprep.subr.bf16.mxu0 0
    %956 = vmatpush1.bf16.msra.mxu0 0
    %957 = vmatprep.subr.bf16.mxu0 0
    %958 = vmatpush1.bf16.msra.mxu0 0
    %959 = vmatprep.subr.bf16.mxu0 0
    %960 = vmatpush1.bf16.msra.mxu0 0
    %961 = vmatprep.subr.bf16.mxu0 0
    %962 = vmatpush1.bf16.msra.mxu0 0
    %963 = vmatprep.mubr.bf16.mxu0 0
    %964 = vmatmul.mubr.bf16.gmra.mrb[0].mxu0 %v929
    %v965 = vpop.f32.mrb[0].mxu0
    %v966 = vadd.f32 0.0, %v965
    %v967 = vpop.f32.mrb[0].mxu0
    %v968 = vpop.f32.mrb[0].mxu0
    %v969 = vadd.f32 0.0, %v968
    %v970 = vpop.f32.mrb[0].mxu0
    %971 = vdwg.mxu0
    %v972 = vadd.f32 %v909, %v966
    %v973 = vadd.f32 %v910, %v969
    %s974 = scalar_lea.vmem [#allocation2], 128
    %v975 = vld [vmem:[%s974] sm:$0xf]
    %v976 = vld [vmem:[%s974 + $0x4] sm:$0xf]
    %v977 = vld [vmem:[%s974 + $0x8] sm:$0xf]
    %v978 = vld [vmem:[%s974 + $0xc] sm:$0xf]
    %v983 = vunpack.c.l.b16 %v975
    %v984 = vunpack.c.l.b16 %v976
    %v985 = vunpack.c.l.b16 %v977
    %v986 = vunpack.c.l.b16 %v978
    %v987 = vpack.c.b16 %v984, %v983
    %v988 = vpack.c.b16 %v986, %v985
    %v992 = vsel %vm495, %v466, 0
    %994 = vmatprep.subr.bf16.mxu0 0
    %995 = vmatpush1.bf16.msra.mxu0 %v987
    %996 = vmatprep.subr.bf16.mxu0 0
    %997 = vmatpush1.bf16.msra.mxu0 %v988
    %998 = vmatprep.subr.bf16.mxu0 0
    %999 = vmatpush1.bf16.msra.mxu0 0
    %1000 = vmatprep.subr.bf16.mxu0 0
    %1001 = vmatpush1.bf16.msra.mxu0 0
    %1002 = vmatprep.subr.bf16.mxu0 0
    %1003 = vmatpush1.bf16.msra.mxu0 0
    %1004 = vmatprep.subr.bf16.mxu0 0
    %1005 = vmatpush1.bf16.msra.mxu0 0
    %1006 = vmatprep.subr.bf16.mxu0 0
    %1007 = vmatpush1.bf16.msra.mxu0 0
    %1008 = vmatprep.subr.bf16.mxu0 0
    %1009 = vmatpush1.bf16.msra.mxu0 0
    %1010 = vmatprep.subr.bf16.mxu0 0
    %1011 = vmatpush1.bf16.msra.mxu0 0
    %1012 = vmatprep.subr.bf16.mxu0 0
    %1013 = vmatpush1.bf16.msra.mxu0 0
    %1014 = vmatprep.subr.bf16.mxu0 0
    %1015 = vmatpush1.bf16.msra.mxu0 0
    %1016 = vmatprep.subr.bf16.mxu0 0
    %1017 = vmatpush1.bf16.msra.mxu0 0
    %1018 = vmatprep.subr.bf16.mxu0 0
    %1019 = vmatpush1.bf16.msra.mxu0 0
    %1020 = vmatprep.subr.bf16.mxu0 0
    %1021 = vmatpush1.bf16.msra.mxu0 0
    %1022 = vmatprep.subr.bf16.mxu0 0
    %1023 = vmatpush1.bf16.msra.mxu0 0
    %1024 = vmatprep.subr.bf16.mxu0 0
    %1025 = vmatpush1.bf16.msra.mxu0 0
    %1026 = vmatprep.mubr.bf16.mxu0 0
    %1027 = vmatmul.mubr.bf16.gmra.mrb[0].mxu0 %v992
    %v1028 = vpop.f32.mrb[0].mxu0
    %v1029 = vadd.f32 0.0, %v1028
    %v1030 = vpop.f32.mrb[0].mxu0
    %v1031 = vpop.f32.mrb[0].mxu0
    %v1032 = vadd.f32 0.0, %v1031
    %v1033 = vpop.f32.mrb[0].mxu0
    %1034 = vdwg.mxu0
    %v1035 = vadd.f32 %v972, %v1029
    %v1036 = vadd.f32 %v973, %v1032
    %s1037 = scalar_lea.vmem [#allocation2], 144
    %v1038 = vld [vmem:[%s1037] sm:$0xf]
    %v1039 = vld [vmem:[%s1037 + $0x4] sm:$0xf]
    %v1040 = vld [vmem:[%s1037 + $0x8] sm:$0xf]
    %v1041 = vld [vmem:[%s1037 + $0xc] sm:$0xf]
    %v1046 = vunpack.c.l.b16 %v1038
    %v1047 = vunpack.c.l.b16 %v1039
    %v1048 = vunpack.c.l.b16 %v1040
    %v1049 = vunpack.c.l.b16 %v1041
    %v1050 = vpack.c.b16 %v1047, %v1046
    %v1051 = vpack.c.b16 %v1049, %v1048
    %v1055 = vsel %vm495, %v467, 0
    %1057 = vmatprep.subr.bf16.mxu0 0
    %1058 = vmatpush1.bf16.msra.mxu0 %v1050
    %1059 = vmatprep.subr.bf16.mxu0 0
    %1060 = vmatpush1.bf16.msra.mxu0 %v1051
    %1061 = vmatprep.subr.bf16.mxu0 0
    %1062 = vmatpush1.bf16.msra.mxu0 0
    %1063 = vmatprep.subr.bf16.mxu0 0
    %1064 = vmatpush1.bf16.msra.mxu0 0
    %1065 = vmatprep.subr.bf16.mxu0 0
    %1066 = vmatpush1.bf16.msra.mxu0 0
    %1067 = vmatprep.subr.bf16.mxu0 0
    %1068 = vmatpush1.bf16.msra.mxu0 0
    %1069 = vmatprep.subr.bf16.mxu0 0
    %1070 = vmatpush1.bf16.msra.mxu0 0
    %1071 = vmatprep.subr.bf16.mxu0 0
    %1072 = vmatpush1.bf16.msra.mxu0 0
    %1073 = vmatprep.subr.bf16.mxu0 0
    %1074 = vmatpush1.bf16.msra.mxu0 0
    %1075 = vmatprep.subr.bf16.mxu0 0
    %1076 = vmatpush1.bf16.msra.mxu0 0
    %1077 = vmatprep.subr.bf16.mxu0 0
    %1078 = vmatpush1.bf16.msra.mxu0 0
    %1079 = vmatprep.subr.bf16.mxu0 0
    %1080 = vmatpush1.bf16.msra.mxu0 0
    %1081 = vmatprep.subr.bf16.mxu0 0
    %1082 = vmatpush1.bf16.msra.mxu0 0
    %1083 = vmatprep.subr.bf16.mxu0 0
    %1084 = vmatpush1.bf16.msra.mxu0 0
    %1085 = vmatprep.subr.bf16.mxu0 0
    %1086 = vmatpush1.bf16.msra.mxu0 0
    %1087 = vmatprep.subr.bf16.mxu0 0
    %1088 = vmatpush1.bf16.msra.mxu0 0
    %1089 = vmatprep.mubr.bf16.mxu0 0
    %1090 = vmatmul.mubr.bf16.gmra.mrb[0].mxu0 %v1055
    %v1091 = vpop.f32.mrb[0].mxu0
    %v1092 = vadd.f32 0.0, %v1091
    %v1093 = vpop.f32.mrb[0].mxu0
    %v1094 = vpop.f32.mrb[0].mxu0
    %v1095 = vadd.f32 0.0, %v1094
    %v1096 = vpop.f32.mrb[0].mxu0
    %1097 = vdwg.mxu0
    %v1098 = vadd.f32 %v1035, %v1092
    %v1099 = vadd.f32 %v1036, %v1095
    %s1100 = scalar_lea.vmem [#allocation2], 160
    %v1101 = vld [vmem:[%s1100] sm:$0xf]
    %v1102 = vld [vmem:[%s1100 + $0x4] sm:$0xf]
    %v1103 = vld [vmem:[%s1100 + $0x8] sm:$0xf]
    %v1104 = vld [vmem:[%s1100 + $0xc] sm:$0xf]
    %v1109 = vunpack.c.l.b16 %v1101
    %v1110 = vunpack.c.l.b16 %v1102
    %v1111 = vunpack.c.l.b16 %v1103
    %v1112 = vunpack.c.l.b16 %v1104
    %v1113 = vpack.c.b16 %v1110, %v1109
    %v1114 = vpack.c.b16 %v1112, %v1111
    %v1118 = vsel %vm495, %v468, 0
    %1120 = vmatprep.subr.bf16.mxu0 0
    %1121 = vmatpush1.bf16.msra.mxu0 %v1113
    %1122 = vmatprep.subr.bf16.mxu0 0
    %1123 = vmatpush1.bf16.msra.mxu0 %v1114
    %1124 = vmatprep.subr.bf16.mxu0 0
    %1125 = vmatpush1.bf16.msra.mxu0 0
    %1126 = vmatprep.subr.bf16.mxu0 0
    %1127 = vmatpush1.bf16.msra.mxu0 0
    %1128 = vmatprep.subr.bf16.mxu0 0
    %1129 = vmatpush1.bf16.msra.mxu0 0
    %1130 = vmatprep.subr.bf16.mxu0 0
    %1131 = vmatpush1.bf16.msra.mxu0 0
    %1132 = vmatprep.subr.bf16.mxu0 0
    %1133 = vmatpush1.bf16.msra.mxu0 0
    %1134 = vmatprep.subr.bf16.mxu0 0
    %1135 = vmatpush1.bf16.msra.mxu0 0
    %1136 = vmatprep.subr.bf16.mxu0 0
    %1137 = vmatpush1.bf16.msra.mxu0 0
    %1138 = vmatprep.subr.bf16.mxu0 0
    %1139 = vmatpush1.bf16.msra.mxu0 0
    %1140 = vmatprep.subr.bf16.mxu0 0
    %1141 = vmatpush1.bf16.msra.mxu0 0
    %1142 = vmatprep.subr.bf16.mxu0 0
    %1143 = vmatpush1.bf16.msra.mxu0 0
    %1144 = vmatprep.subr.bf16.mxu0 0
    %1145 = vmatpush1.bf16.msra.mxu0 0
    %1146 = vmatprep.subr.bf16.mxu0 0
    %1147 = vmatpush1.bf16.msra.mxu0 0
    %1148 = vmatprep.subr.bf16.mxu0 0
    %1149 = vmatpush1.bf16.msra.mxu0 0
    %1150 = vmatprep.subr.bf16.mxu0 0
    %1151 = vmatpush1.bf16.msra.mxu0 0
    %1152 = vmatprep.mubr.bf16.mxu0 0
    %1153 = vmatmul.mubr.bf16.gmra.mrb[0].mxu0 %v1118
    %v1154 = vpop.f32.mrb[0].mxu0
    %v1155 = vadd.f32 0.0, %v1154
    %v1156 = vpop.f32.mrb[0].mxu0
    %v1157 = vpop.f32.mrb[0].mxu0
    %v1158 = vadd.f32 0.0, %v1157
    %v1159 = vpop.f32.mrb[0].mxu0
    %1160 = vdwg.mxu0
    %v1161 = vadd.f32 %v1098, %v1155
    %v1162 = vadd.f32 %v1099, %v1158
    %s1163 = scalar_lea.vmem [#allocation2], 176
    %v1164 = vld [vmem:[%s1163] sm:$0xf]
    %v1165 = vld [vmem:[%s1163 + $0x4] sm:$0xf]
    %v1166 = vld [vmem:[%s1163 + $0x8] sm:$0xf]
    %v1167 = vld [vmem:[%s1163 + $0xc] sm:$0xf]
    %v1172 = vunpack.c.l.b16 %v1164
    %v1173 = vunpack.c.l.b16 %v1165
    %v1174 = vunpack.c.l.b16 %v1166
    %v1175 = vunpack.c.l.b16 %v1167
    %v1176 = vpack.c.b16 %v1173, %v1172
    %v1177 = vpack.c.b16 %v1175, %v1174
    %v1181 = vsel %vm495, %v469, 0
    %1183 = vmatprep.subr.bf16.mxu0 0
    %1184 = vmatpush1.bf16.msra.mxu0 %v1176
    %1185 = vmatprep.subr.bf16.mxu0 0
    %1186 = vmatpush1.bf16.msra.mxu0 %v1177
    %1187 = vmatprep.subr.bf16.mxu0 0
    %1188 = vmatpush1.bf16.msra.mxu0 0
    %1189 = vmatprep.subr.bf16.mxu0 0
    %1190 = vmatpush1.bf16.msra.mxu0 0
    %1191 = vmatprep.subr.bf16.mxu0 0
    %1192 = vmatpush1.bf16.msra.mxu0 0
    %1193 = vmatprep.subr.bf16.mxu0 0
    %1194 = vmatpush1.bf16.msra.mxu0 0
    %1195 = vmatprep.subr.bf16.mxu0 0
    %1196 = vmatpush1.bf16.msra.mxu0 0
    %1197 = vmatprep.subr.bf16.mxu0 0
    %1198 = vmatpush1.bf16.msra.mxu0 0
    %1199 = vmatprep.subr.bf16.mxu0 0
    %1200 = vmatpush1.bf16.msra.mxu0 0
    %1201 = vmatprep.subr.bf16.mxu0 0
    %1202 = vmatpush1.bf16.msra.mxu0 0
    %1203 = vmatprep.subr.bf16.mxu0 0
    %1204 = vmatpush1.bf16.msra.mxu0 0
    %1205 = vmatprep.subr.bf16.mxu0 0
    %1206 = vmatpush1.bf16.msra.mxu0 0
    %1207 = vmatprep.subr.bf16.mxu0 0
    %1208 = vmatpush1.bf16.msra.mxu0 0
    %1209 = vmatprep.subr.bf16.mxu0 0
    %1210 = vmatpush1.bf16.msra.mxu0 0
    %1211 = vmatprep.subr.bf16.mxu0 0
    %1212 = vmatpush1.bf16.msra.mxu0 0
    %1213 = vmatprep.subr.bf16.mxu0 0
    %1214 = vmatpush1.bf16.msra.mxu0 0
    %1215 = vmatprep.mubr.bf16.mxu0 0
    %1216 = vmatmul.mubr.bf16.gmra.mrb[0].mxu0 %v1181
    %v1217 = vpop.f32.mrb[0].mxu0
    %v1218 = vadd.f32 0.0, %v1217
    %v1219 = vpop.f32.mrb[0].mxu0
    %v1220 = vpop.f32.mrb[0].mxu0
    %v1221 = vadd.f32 0.0, %v1220
    %v1222 = vpop.f32.mrb[0].mxu0
    %1223 = vdwg.mxu0
    %v1224 = vadd.f32 %v1161, %v1218
    %v1225 = vadd.f32 %v1162, %v1221
    %s1226 = scalar_lea.vmem [#allocation2], 192
    %v1227 = vld [vmem:[%s1226] sm:$0xf]
    %v1228 = vld [vmem:[%s1226 + $0x4] sm:$0xf]
    %v1229 = vld [vmem:[%s1226 + $0x8] sm:$0xf]
    %v1230 = vld [vmem:[%s1226 + $0xc] sm:$0xf]
    %v1235 = vunpack.c.l.b16 %v1227
    %v1236 = vunpack.c.l.b16 %v1228
    %v1237 = vunpack.c.l.b16 %v1229
    %v1238 = vunpack.c.l.b16 %v1230
    %v1239 = vpack.c.b16 %v1236, %v1235
    %v1240 = vpack.c.b16 %v1238, %v1237
    %v1244 = vsel %vm495, %v470, 0
    %1246 = vmatprep.subr.bf16.mxu0 0
    %1247 = vmatpush1.bf16.msra.mxu0 %v1239
    %1248 = vmatprep.subr.bf16.mxu0 0
    %1249 = vmatpush1.bf16.msra.mxu0 %v1240
    %1250 = vmatprep.subr.bf16.mxu0 0
    %1251 = vmatpush1.bf16.msra.mxu0 0
    %1252 = vmatprep.subr.bf16.mxu0 0
    %1253 = vmatpush1.bf16.msra.mxu0 0
    %1254 = vmatprep.subr.bf16.mxu0 0
    %1255 = vmatpush1.bf16.msra.mxu0 0
    %1256 = vmatprep.subr.bf16.mxu0 0
    %1257 = vmatpush1.bf16.msra.mxu0 0
    %1258 = vmatprep.subr.bf16.mxu0 0
    %1259 = vmatpush1.bf16.msra.mxu0 0
    %1260 = vmatprep.subr.bf16.mxu0 0
    %1261 = vmatpush1.bf16.msra.mxu0 0
    %1262 = vmatprep.subr.bf16.mxu0 0
    %1263 = vmatpush1.bf16.msra.mxu0 0
    %1264 = vmatprep.subr.bf16.mxu0 0
    %1265 = vmatpush1.bf16.msra.mxu0 0
    %1266 = vmatprep.subr.bf16.mxu0 0
    %1267 = vmatpush1.bf16.msra.mxu0 0
    %1268 = vmatprep.subr.bf16.mxu0 0
    %1269 = vmatpush1.bf16.msra.mxu0 0
    %1270 = vmatprep.subr.bf16.mxu0 0
    %1271 = vmatpush1.bf16.msra.mxu0 0
    %1272 = vmatprep.subr.bf16.mxu0 0
    %1273 = vmatpush1.bf16.msra.mxu0 0
    %1274 = vmatprep.subr.bf16.mxu0 0
    %1275 = vmatpush1.bf16.msra.mxu0 0
    %1276 = vmatprep.subr.bf16.mxu0 0
    %1277 = vmatpush1.bf16.msra.mxu0 0
    %1278 = vmatprep.mubr.bf16.mxu0 0
    %1279 = vmatmul.mubr.bf16.gmra.mrb[0].mxu0 %v1244
    %v1280 = vpop.f32.mrb[0].mxu0
    %v1281 = vadd.f32 0.0, %v1280
    %v1282 = vpop.f32.mrb[0].mxu0
    %v1283 = vpop.f32.mrb[0].mxu0
    %v1284 = vadd.f32 0.0, %v1283
    %v1285 = vpop.f32.mrb[0].mxu0
    %1286 = vdwg.mxu0
    %v1287 = vadd.f32 %v1224, %v1281
    %v1288 = vadd.f32 %v1225, %v1284
    %s1289 = scalar_lea.vmem [#allocation2], 208
    %v1290 = vld [vmem:[%s1289] sm:$0xf]
    %v1291 = vld [vmem:[%s1289 + $0x4] sm:$0xf]
    %v1292 = vld [vmem:[%s1289 + $0x8] sm:$0xf]
    %v1293 = vld [vmem:[%s1289 + $0xc] sm:$0xf]
    %v1298 = vunpack.c.l.b16 %v1290
    %v1299 = vunpack.c.l.b16 %v1291
    %v1300 = vunpack.c.l.b16 %v1292
    %v1301 = vunpack.c.l.b16 %v1293
    %v1302 = vpack.c.b16 %v1299, %v1298
    %v1303 = vpack.c.b16 %v1301, %v1300
    %v1307 = vsel %vm495, %v471, 0
    %1309 = vmatprep.subr.bf16.mxu0 0
    %1310 = vmatpush1.bf16.msra.mxu0 %v1302
    %1311 = vmatprep.subr.bf16.mxu0 0
    %1312 = vmatpush1.bf16.msra.mxu0 %v1303
    %1313 = vmatprep.subr.bf16.mxu0 0
    %1314 = vmatpush1.bf16.msra.mxu0 0
    %1315 = vmatprep.subr.bf16.mxu0 0
    %1316 = vmatpush1.bf16.msra.mxu0 0
    %1317 = vmatprep.subr.bf16.mxu0 0
    %1318 = vmatpush1.bf16.msra.mxu0 0
    %1319 = vmatprep.subr.bf16.mxu0 0
    %1320 = vmatpush1.bf16.msra.mxu0 0
    %1321 = vmatprep.subr.bf16.mxu0 0
    %1322 = vmatpush1.bf16.msra.mxu0 0
    %1323 = vmatprep.subr.bf16.mxu0 0
    %1324 = vmatpush1.bf16.msra.mxu0 0
    %1325 = vmatprep.subr.bf16.mxu0 0
    %1326 = vmatpush1.bf16.msra.mxu0 0
    %1327 = vmatprep.subr.bf16.mxu0 0
    %1328 = vmatpush1.bf16.msra.mxu0 0
    %1329 = vmatprep.subr.bf16.mxu0 0
    %1330 = vmatpush1.bf16.msra.mxu0 0
    %1331 = vmatprep.subr.bf16.mxu0 0
    %1332 = vmatpush1.bf16.msra.mxu0 0
    %1333 = vmatprep.subr.bf16.mxu0 0
    %1334 = vmatpush1.bf16.msra.mxu0 0
    %1335 = vmatprep.subr.bf16.mxu0 0
    %1336 = vmatpush1.bf16.msra.mxu0 0
    %1337 = vmatprep.subr.bf16.mxu0 0
    %1338 = vmatpush1.bf16.msra.mxu0 0
    %1339 = vmatprep.subr.bf16.mxu0 0
    %1340 = vmatpush1.bf16.msra.mxu0 0
    %1341 = vmatprep.mubr.bf16.mxu0 0
    %1342 = vmatmul.mubr.bf16.gmra.mrb[0].mxu0 %v1307
    %v1343 = vpop.f32.mrb[0].mxu0
    %v1344 = vadd.f32 0.0, %v1343
    %v1345 = vpop.f32.mrb[0].mxu0
    %v1346 = vpop.f32.mrb[0].mxu0
    %v1347 = vadd.f32 0.0, %v1346
    %v1348 = vpop.f32.mrb[0].mxu0
    %1349 = vdwg.mxu0
    %v1350 = vadd.f32 %v1287, %v1344
    %v1351 = vadd.f32 %v1288, %v1347
    %s1352 = scalar_lea.vmem [#allocation2], 224
    %v1353 = vld [vmem:[%s1352] sm:$0xf]
    %v1354 = vld [vmem:[%s1352 + $0x4] sm:$0xf]
    %v1355 = vld [vmem:[%s1352 + $0x8] sm:$0xf]
    %v1356 = vld [vmem:[%s1352 + $0xc] sm:$0xf]
    %v1361 = vunpack.c.l.b16 %v1353
    %v1362 = vunpack.c.l.b16 %v1354
    %v1363 = vunpack.c.l.b16 %v1355
    %v1364 = vunpack.c.l.b16 %v1356
    %v1365 = vpack.c.b16 %v1362, %v1361
    %v1366 = vpack.c.b16 %v1364, %v1363
    %v1370 = vsel %vm495, %v472, 0
    %1372 = vmatprep.subr.bf16.mxu0 0
    %1373 = vmatpush1.bf16.msra.mxu0 %v1365
    %1374 = vmatprep.subr.bf16.mxu0 0
    %1375 = vmatpush1.bf16.msra.mxu0 %v1366
    %1376 = vmatprep.subr.bf16.mxu0 0
    %1377 = vmatpush1.bf16.msra.mxu0 0
    %1378 = vmatprep.subr.bf16.mxu0 0
    %1379 = vmatpush1.bf16.msra.mxu0 0
    %1380 = vmatprep.subr.bf16.mxu0 0
    %1381 = vmatpush1.bf16.msra.mxu0 0
    %1382 = vmatprep.subr.bf16.mxu0 0
    %1383 = vmatpush1.bf16.msra.mxu0 0
    %1384 = vmatprep.subr.bf16.mxu0 0
    %1385 = vmatpush1.bf16.msra.mxu0 0
    %1386 = vmatprep.subr.bf16.mxu0 0
    %1387 = vmatpush1.bf16.msra.mxu0 0
    %1388 = vmatprep.subr.bf16.mxu0 0
    %1389 = vmatpush1.bf16.msra.mxu0 0
    %1390 = vmatprep.subr.bf16.mxu0 0
    %1391 = vmatpush1.bf16.msra.mxu0 0
    %1392 = vmatprep.subr.bf16.mxu0 0
    %1393 = vmatpush1.bf16.msra.mxu0 0
    %1394 = vmatprep.subr.bf16.mxu0 0
    %1395 = vmatpush1.bf16.msra.mxu0 0
    %1396 = vmatprep.subr.bf16.mxu0 0
    %1397 = vmatpush1.bf16.msra.mxu0 0
    %1398 = vmatprep.subr.bf16.mxu0 0
    %1399 = vmatpush1.bf16.msra.mxu0 0
    %1400 = vmatprep.subr.bf16.mxu0 0
    %1401 = vmatpush1.bf16.msra.mxu0 0
    %1402 = vmatprep.subr.bf16.mxu0 0
    %1403 = vmatpush1.bf16.msra.mxu0 0
    %1404 = vmatprep.mubr.bf16.mxu0 0
    %1405 = vmatmul.mubr.bf16.gmra.mrb[0].mxu0 %v1370
    %v1406 = vpop.f32.mrb[0].mxu0
    %v1407 = vadd.f32 0.0, %v1406
    %v1408 = vpop.f32.mrb[0].mxu0
    %v1409 = vpop.f32.mrb[0].mxu0
    %v1410 = vadd.f32 0.0, %v1409
    %v1411 = vpop.f32.mrb[0].mxu0
    %1412 = vdwg.mxu0
    %v1413 = vadd.f32 %v1350, %v1407
    %v1414 = vadd.f32 %v1351, %v1410
    %s1415 = scalar_lea.vmem [#allocation2], 240
    %v1416 = vld [vmem:[%s1415] sm:$0xf]
    %v1417 = vld [vmem:[%s1415 + $0x4] sm:$0xf]
    %v1418 = vld [vmem:[%s1415 + $0x8] sm:$0xf]
    %v1419 = vld [vmem:[%s1415 + $0xc] sm:$0xf]
    %v1424 = vunpack.c.l.b16 %v1416
    %v1425 = vunpack.c.l.b16 %v1417
    %v1426 = vunpack.c.l.b16 %v1418
    %v1427 = vunpack.c.l.b16 %v1419
    %v1428 = vpack.c.b16 %v1425, %v1424
    %v1429 = vpack.c.b16 %v1427, %v1426
    %v1433 = vsel %vm495, %v473, 0
    %1435 = vmatprep.subr.bf16.mxu0 0
    %1436 = vmatpush1.bf16.msra.mxu0 %v1428
    %1437 = vmatprep.subr.bf16.mxu0 0
    %1438 = vmatpush1.bf16.msra.mxu0 %v1429
    %1439 = vmatprep.subr.bf16.mxu0 0
    %1440 = vmatpush1.bf16.msra.mxu0 0
    %1441 = vmatprep.subr.bf16.mxu0 0
    %1442 = vmatpush1.bf16.msra.mxu0 0
    %1443 = vmatprep.subr.bf16.mxu0 0
    %1444 = vmatpush1.bf16.msra.mxu0 0
    %1445 = vmatprep.subr.bf16.mxu0 0
    %1446 = vmatpush1.bf16.msra.mxu0 0
    %1447 = vmatprep.subr.bf16.mxu0 0
    %1448 = vmatpush1.bf16.msra.mxu0 0
    %1449 = vmatprep.subr.bf16.mxu0 0
    %1450 = vmatpush1.bf16.msra.mxu0 0
    %1451 = vmatprep.subr.bf16.mxu0 0
    %1452 = vmatpush1.bf16.msra.mxu0 0
    %1453 = vmatprep.subr.bf16.mxu0 0
    %1454 = vmatpush1.bf16.msra.mxu0 0
    %1455 = vmatprep.subr.bf16.mxu0 0
    %1456 = vmatpush1.bf16.msra.mxu0 0
    %1457 = vmatprep.subr.bf16.mxu0 0
    %1458 = vmatpush1.bf16.msra.mxu0 0
    %1459 = vmatprep.subr.bf16.mxu0 0
    %1460 = vmatpush1.bf16.msra.mxu0 0
    %1461 = vmatprep.subr.bf16.mxu0 0
    %1462 = vmatpush1.bf16.msra.mxu0 0
    %1463 = vmatprep.subr.bf16.mxu0 0
    %1464 = vmatpush1.bf16.msra.mxu0 0
    %1465 = vmatprep.subr.bf16.mxu0 0
    %1466 = vmatpush1.bf16.msra.mxu0 0
    %1467 = vmatprep.mubr.bf16.mxu0 0
    %1468 = vmatmul.mubr.bf16.gmra.mrb[0].mxu0 %v1433
    %v1469 = vpop.f32.mrb[0].mxu0
    %v1470 = vadd.f32 0.0, %v1469
    %v1471 = vpop.f32.mrb[0].mxu0
    %v1472 = vpop.f32.mrb[0].mxu0
    %v1473 = vadd.f32 0.0, %v1472
    %v1474 = vpop.f32.mrb[0].mxu0
    %1475 = vdwg.mxu0
    %v1476 = vadd.f32 %v1413, %v1470
    %v1477 = vadd.f32 %v1414, %v1473
    %v1478 = vld [vmem:[%s4] sm:$0x1]
    %v1480 = vlaneseq
    %v1481 = vshrl.u32 %v1480, 7
    %v1482 = vsub.s32 0, %v1481
    %v1483 = vrot.slane %v1478, %v1482
    %v1485 = vadd.f32 %v1476, %v1483
    %v1486 = vadd.f32 %v1477, %v1483
    %v1487 = vpack.c.bf16 %v1486, %v1485
    %v1488 = vld [vmem:[%s5] sm:$0xf]
    %v1489 = vld [vmem:[%s5 + $0x4] sm:$0xf]
    %v1490 = vld [vmem:[%s5 + $0x8] sm:$0xf]
    %v1491 = vld [vmem:[%s5 + $0xc] sm:$0xf]
    %v1496 = vunpack.c.l.b16 %v1488
    %v1497 = vunpack.c.l.b16 %v1489
    %v1498 = vunpack.c.l.b16 %v1490
    %v1499 = vunpack.c.l.b16 %v1491
    %v1500 = vpack.c.b16 %v1497, %v1496
    %v1501 = vpack.c.b16 %v1499, %v1498
    %v1505 = vsel %vm495, %v1487, 0
    %1507 = vmatprep.subr.bf16.mxu0 0
    %1508 = vmatpush1.bf16.msra.mxu0 %v1500
    %1509 = vmatprep.subr.bf16.mxu0 0
    %1510 = vmatpush1.bf16.msra.mxu0 %v1501
    %1511 = vmatprep.subr.bf16.mxu0 0
    %1512 = vmatpush1.bf16.msra.mxu0 0
    %1513 = vmatprep.subr.bf16.mxu0 0
    %1514 = vmatpush1.bf16.msra.mxu0 0
    %1515 = vmatprep.subr.bf16.mxu0 0
    %1516 = vmatpush1.bf16.msra.mxu0 0
    %1517 = vmatprep.subr.bf16.mxu0 0
    %1518 = vmatpush1.bf16.msra.mxu0 0
    %1519 = vmatprep.subr.bf16.mxu0 0
    %1520 = vmatpush1.bf16.msra.mxu0 0
    %1521 = vmatprep.subr.bf16.mxu0 0
    %1522 = vmatpush1.bf16.msra.mxu0 0
    %1523 = vmatprep.subr.bf16.mxu0 0
    %1524 = vmatpush1.bf16.msra.mxu0 0
    %1525 = vmatprep.subr.bf16.mxu0 0
    %1526 = vmatpush1.bf16.msra.mxu0 0
    %1527 = vmatprep.subr.bf16.mxu0 0
    %1528 = vmatpush1.bf16.msra.mxu0 0
    %1529 = vmatprep.subr.bf16.mxu0 0
    %1530 = vmatpush1.bf16.msra.mxu0 0
    %1531 = vmatprep.subr.bf16.mxu0 0
    %1532 = vmatpush1.bf16.msra.mxu0 0
    %1533 = vmatprep.subr.bf16.mxu0 0
    %1534 = vmatpush1.bf16.msra.mxu0 0
    %1535 = vmatprep.subr.bf16.mxu0 0
    %1536 = vmatpush1.bf16.msra.mxu0 0
    %1537 = vmatprep.subr.bf16.mxu0 0
    %1538 = vmatpush1.bf16.msra.mxu0 0
    %1539 = vmatprep.mubr.bf16.mxu0 0
    %1540 = vmatmul.mubr.bf16.gmra.mrb[0].mxu0 %v1505
    %v1541 = vpop.f32.mrb[0].mxu0
    %v1542 = vadd.f32 0.0, %v1541
    %v1543 = vpop.f32.mrb[0].mxu0
    %v1544 = vpop.f32.mrb[0].mxu0
    %v1545 = vadd.f32 0.0, %v1544
    %v1546 = vpop.f32.mrb[0].mxu0
    %1547 = vdwg.mxu0
    %s1548 = scalar_lea.vmem %s5, 16
    %v1549 = vld [vmem:[%s1548] sm:$0xf]
    %v1550 = vld [vmem:[%s1548 + $0x4] sm:$0xf]
    %v1551 = vld [vmem:[%s1548 + $0x8] sm:$0xf]
    %v1552 = vld [vmem:[%s1548 + $0xc] sm:$0xf]
    %v1557 = vunpack.c.l.b16 %v1549
    %v1558 = vunpack.c.l.b16 %v1550
    %v1559 = vunpack.c.l.b16 %v1551
    %v1560 = vunpack.c.l.b16 %v1552
    %v1561 = vpack.c.b16 %v1558, %v1557
    %v1562 = vpack.c.b16 %v1560, %v1559
    %1565 = vmatprep.subr.bf16.mxu0 0
    %1566 = vmatpush1.bf16.msra.mxu0 %v1561
    %1567 = vmatprep.subr.bf16.mxu0 0
    %1568 = vmatpush1.bf16.msra.mxu0 %v1562
    %1569 = vmatprep.subr.bf16.mxu0 0
    %1570 = vmatpush1.bf16.msra.mxu0 0
    %1571 = vmatprep.subr.bf16.mxu0 0
    %1572 = vmatpush1.bf16.msra.mxu0 0
    %1573 = vmatprep.subr.bf16.mxu0 0
    %1574 = vmatpush1.bf16.msra.mxu0 0
    %1575 = vmatprep.subr.bf16.mxu0 0
    %1576 = vmatpush1.bf16.msra.mxu0 0
    %1577 = vmatprep.subr.bf16.mxu0 0
    %1578 = vmatpush1.bf16.msra.mxu0 0
    %1579 = vmatprep.subr.bf16.mxu0 0
    %1580 = vmatpush1.bf16.msra.mxu0 0
    %1581 = vmatprep.subr.bf16.mxu0 0
    %1582 = vmatpush1.bf16.msra.mxu0 0
    %1583 = vmatprep.subr.bf16.mxu0 0
    %1584 = vmatpush1.bf16.msra.mxu0 0
    %1585 = vmatprep.subr.bf16.mxu0 0
    %1586 = vmatpush1.bf16.msra.mxu0 0
    %1587 = vmatprep.subr.bf16.mxu0 0
    %1588 = vmatpush1.bf16.msra.mxu0 0
    %1589 = vmatprep.subr.bf16.mxu0 0
    %1590 = vmatpush1.bf16.msra.mxu0 0
    %1591 = vmatprep.subr.bf16.mxu0 0
    %1592 = vmatpush1.bf16.msra.mxu0 0
    %1593 = vmatprep.subr.bf16.mxu0 0
    %1594 = vmatpush1.bf16.msra.mxu0 0
    %1595 = vmatprep.subr.bf16.mxu0 0
    %1596 = vmatpush1.bf16.msra.mxu0 0
    %1597 = vmatprep.mubr.bf16.mxu0 0
    %1598 = vmatmul.mubr.bf16.gmra.mrb[0].mxu0 %v1505
    %v1599 = vpop.f32.mrb[0].mxu0
    %v1600 = vadd.f32 0.0, %v1599
    %v1601 = vpop.f32.mrb[0].mxu0
    %v1602 = vpop.f32.mrb[0].mxu0
    %v1603 = vadd.f32 0.0, %v1602
    %v1604 = vpop.f32.mrb[0].mxu0
    %1605 = vdwg.mxu0
    %s1606 = scalar_lea.vmem %s5, 32
    %v1607 = vld [vmem:[%s1606] sm:$0xf]
    %v1608 = vld [vmem:[%s1606 + $0x4] sm:$0xf]
    %v1609 = vld [vmem:[%s1606 + $0x8] sm:$0xf]
    %v1610 = vld [vmem:[%s1606 + $0xc] sm:$0xf]
    %v1615 = vunpack.c.l.b16 %v1607
    %v1616 = vunpack.c.l.b16 %v1608
    %v1617 = vunpack.c.l.b16 %v1609
    %v1618 = vunpack.c.l.b16 %v1610
    %v1619 = vpack.c.b16 %v1616, %v1615
    %v1620 = vpack.c.b16 %v1618, %v1617
    %1623 = vmatprep.subr.bf16.mxu0 0
    %1624 = vmatpush1.bf16.msra.mxu0 %v1619
    %1625 = vmatprep.subr.bf16.mxu0 0
    %1626 = vmatpush1.bf16.msra.mxu0 %v1620
    %1627 = vmatprep.subr.bf16.mxu0 0
    %1628 = vmatpush1.bf16.msra.mxu0 0
    %1629 = vmatprep.subr.bf16.mxu0 0
    %1630 = vmatpush1.bf16.msra.mxu0 0
    %1631 = vmatprep.subr.bf16.mxu0 0
    %1632 = vmatpush1.bf16.msra.mxu0 0
    %1633 = vmatprep.subr.bf16.mxu0 0
    %1634 = vmatpush1.bf16.msra.mxu0 0
    %1635 = vmatprep.subr.bf16.mxu0 0
    %1636 = vmatpush1.bf16.msra.mxu0 0
    %1637 = vmatprep.subr.bf16.mxu0 0
    %1638 = vmatpush1.bf16.msra.mxu0 0
    %1639 = vmatprep.subr.bf16.mxu0 0
    %1640 = vmatpush1.bf16.msra.mxu0 0
    %1641 = vmatprep.subr.bf16.mxu0 0
    %1642 = vmatpush1.bf16.msra.mxu0 0
    %1643 = vmatprep.subr.bf16.mxu0 0
    %1644 = vmatpush1.bf16.msra.mxu0 0
    %1645 = vmatprep.subr.bf16.mxu0 0
    %1646 = vmatpush1.bf16.msra.mxu0 0
    %1647 = vmatprep.subr.bf16.mxu0 0
    %1648 = vmatpush1.bf16.msra.mxu0 0
    %1649 = vmatprep.subr.bf16.mxu0 0
    %1650 = vmatpush1.bf16.msra.mxu0 0
    %1651 = vmatprep.subr.bf16.mxu0 0
    %1652 = vmatpush1.bf16.msra.mxu0 0
    %1653 = vmatprep.subr.bf16.mxu0 0
    %1654 = vmatpush1.bf16.msra.mxu0 0
    %1655 = vmatprep.mubr.bf16.mxu0 0
    %1656 = vmatmul.mubr.bf16.gmra.mrb[0].mxu0 %v1505
    %v1657 = vpop.f32.mrb[0].mxu0
    %v1658 = vadd.f32 0.0, %v1657
    %v1659 = vpop.f32.mrb[0].mxu0
    %v1660 = vpop.f32.mrb[0].mxu0
    %v1661 = vadd.f32 0.0, %v1660
    %v1662 = vpop.f32.mrb[0].mxu0
    %1663 = vdwg.mxu0
    %s1664 = scalar_lea.vmem %s5, 48
    %v1665 = vld [vmem:[%s1664] sm:$0xf]
    %v1666 = vld [vmem:[%s1664 + $0x4] sm:$0xf]
    %v1667 = vld [vmem:[%s1664 + $0x8] sm:$0xf]
    %v1668 = vld [vmem:[%s1664 + $0xc] sm:$0xf]
    %v1673 = vunpack.c.l.b16 %v1665
    %v1674 = vunpack.c.l.b16 %v1666
    %v1675 = vunpack.c.l.b16 %v1667
    %v1676 = vunpack.c.l.b16 %v1668
    %v1677 = vpack.c.b16 %v1674, %v1673
    %v1678 = vpack.c.b16 %v1676, %v1675
    %1681 = vmatprep.subr.bf16.mxu0 0
    %1682 = vmatpush1.bf16.msra.mxu0 %v1677
    %1683 = vmatprep.subr.bf16.mxu0 0
    %1684 = vmatpush1.bf16.msra.mxu0 %v1678
    %1685 = vmatprep.subr.bf16.mxu0 0
    %1686 = vmatpush1.bf16.msra.mxu0 0
    %1687 = vmatprep.subr.bf16.mxu0 0
    %1688 = vmatpush1.bf16.msra.mxu0 0
    %1689 = vmatprep.subr.bf16.mxu0 0
    %1690 = vmatpush1.bf16.msra.mxu0 0
    %1691 = vmatprep.subr.bf16.mxu0 0
    %1692 = vmatpush1.bf16.msra.mxu0 0
    %1693 = vmatprep.subr.bf16.mxu0 0
    %1694 = vmatpush1.bf16.msra.mxu0 0
    %1695 = vmatprep.subr.bf16.mxu0 0
    %1696 = vmatpush1.bf16.msra.mxu0 0
    %1697 = vmatprep.subr.bf16.mxu0 0
    %1698 = vmatpush1.bf16.msra.mxu0 0
    %1699 = vmatprep.subr.bf16.mxu0 0
    %1700 = vmatpush1.bf16.msra.mxu0 0
    %1701 = vmatprep.subr.bf16.mxu0 0
    %1702 = vmatpush1.bf16.msra.mxu0 0
    %1703 = vmatprep.subr.bf16.mxu0 0
    %1704 = vmatpush1.bf16.msra.mxu0 0
    %1705 = vmatprep.subr.bf16.mxu0 0
    %1706 = vmatpush1.bf16.msra.mxu0 0
    %1707 = vmatprep.subr.bf16.mxu0 0
    %1708 = vmatpush1.bf16.msra.mxu0 0
    %1709 = vmatprep.subr.bf16.mxu0 0
    %1710 = vmatpush1.bf16.msra.mxu0 0
    %1711 = vmatprep.subr.bf16.mxu0 0
    %1712 = vmatpush1.bf16.msra.mxu0 0
    %1713 = vmatprep.mubr.bf16.mxu0 0
    %1714 = vmatmul.mubr.bf16.gmra.mrb[0].mxu0 %v1505
    %v1715 = vpop.f32.mrb[0].mxu0
    %v1716 = vadd.f32 0.0, %v1715
    %v1717 = vpop.f32.mrb[0].mxu0
    %v1718 = vpop.f32.mrb[0].mxu0
    %v1719 = vadd.f32 0.0, %v1718
    %v1720 = vpop.f32.mrb[0].mxu0
    %1721 = vdwg.mxu0
    %v1722 = vld [vmem:[%s6] sm:$0xf]
    %v1723 = vld [vmem:[%s6 + $0x4] sm:$0xf]
    %v1724 = vld [vmem:[%s6 + $0x8] sm:$0xf]
    %v1725 = vld [vmem:[%s6 + $0xc] sm:$0xf]
    %v1730 = vunpack.c.l.b16 %v1722
    %v1731 = vunpack.c.l.b16 %v1723
    %v1732 = vunpack.c.l.b16 %v1724
    %v1733 = vunpack.c.l.b16 %v1725
    %v1734 = vpack.c.b16 %v1731, %v1730
    %v1735 = vpack.c.b16 %v1733, %v1732
    %v1739 = vsel %vm495, 0, 0
    %1741 = vmatprep.subr.bf16.mxu0 0
    %1742 = vmatpush1.bf16.msra.mxu0 %v1734
    %1743 = vmatprep.subr.bf16.mxu0 0
    %1744 = vmatpush1.bf16.msra.mxu0 %v1735
    %1745 = vmatprep.subr.bf16.mxu0 0
    %1746 = vmatpush1.bf16.msra.mxu0 0
    %1747 = vmatprep.subr.bf16.mxu0 0
    %1748 = vmatpush1.bf16.msra.mxu0 0
    %1749 = vmatprep.subr.bf16.mxu0 0
    %1750 = vmatpush1.bf16.msra.mxu0 0
    %1751 = vmatprep.subr.bf16.mxu0 0
    %1752 = vmatpush1.bf16.msra.mxu0 0
    %1753 = vmatprep.subr.bf16.mxu0 0
    %1754 = vmatpush1.bf16.msra.mxu0 0
    %1755 = vmatprep.subr.bf16.mxu0 0
    %1756 = vmatpush1.bf16.msra.mxu0 0
    %1757 = vmatprep.subr.bf16.mxu0 0
    %1758 = vmatpush1.bf16.msra.mxu0 0
    %1759 = vmatprep.subr.bf16.mxu0 0
    %1760 = vmatpush1.bf16.msra.mxu0 0
    %1761 = vmatprep.subr.bf16.mxu0 0
    %1762 = vmatpush1.bf16.msra.mxu0 0
    %1763 = vmatprep.subr.bf16.mxu0 0
    %1764 = vmatpush1.bf16.msra.mxu0 0
    %1765 = vmatprep.subr.bf16.mxu0 0
    %1766 = vmatpush1.bf16.msra.mxu0 0
    %1767 = vmatprep.subr.bf16.mxu0 0
    %1768 = vmatpush1.bf16.msra.mxu0 0
    %1769 = vmatprep.subr.bf16.mxu0 0
    %1770 = vmatpush1.bf16.msra.mxu0 0
    %1771 = vmatprep.subr.bf16.mxu0 0
    %1772 = vmatpush1.bf16.msra.mxu0 0
    %1773 = vmatprep.mubr.bf16.mxu0 0
    %1774 = vmatmul.mubr.bf16.gmra.mrb[0].mxu0 %v1739
    %v1775 = vpop.f32.mrb[0].mxu0
    %v1776 = vadd.f32 0.0, %v1775
    %v1777 = vpop.f32.mrb[0].mxu0
    %v1778 = vpop.f32.mrb[0].mxu0
    %v1779 = vpop.f32.mrb[0].mxu0
    %1780 = vdwg.mxu0
    %v1781 = vadd.f32 %v1542, %v1776
    %v1782 = vld [vmem:[#allocation5] sm:$0x1]
    %v1784 = vlaneseq
    %v1785 = vshrl.u32 %v1784, 7
    %v1786 = vsub.s32 0, %v1785
    %v1787 = vrot.slane %v1782, %v1786
    %v1789 = vadd.f32 %v1781, %v1787
    %s1790 = scalar_lea.vmem %s6, 16
    %v1791 = vld [vmem:[%s1790] sm:$0xf]
    %v1792 = vld [vmem:[%s1790 + $0x4] sm:$0xf]
    %v1793 = vld [vmem:[%s1790 + $0x8] sm:$0xf]
    %v1794 = vld [vmem:[%s1790 + $0xc] sm:$0xf]
    %v1799 = vunpack.c.l.b16 %v1791
    %v1800 = vunpack.c.l.b16 %v1792
    %v1801 = vunpack.c.l.b16 %v1793
    %v1802 = vunpack.c.l.b16 %v1794
    %v1803 = vpack.c.b16 %v1800, %v1799
    %v1804 = vpack.c.b16 %v1802, %v1801
    %1807 = vmatprep.subr.bf16.mxu0 0
    %1808 = vmatpush1.bf16.msra.mxu0 %v1803
    %1809 = vmatprep.subr.bf16.mxu0 0
    %1810 = vmatpush1.bf16.msra.mxu0 %v1804
    %1811 = vmatprep.subr.bf16.mxu0 0
    %1812 = vmatpush1.bf16.msra.mxu0 0
    %1813 = vmatprep.subr.bf16.mxu0 0
    %1814 = vmatpush1.bf16.msra.mxu0 0
    %1815 = vmatprep.subr.bf16.mxu0 0
    %1816 = vmatpush1.bf16.msra.mxu0 0
    %1817 = vmatprep.subr.bf16.mxu0 0
    %1818 = vmatpush1.bf16.msra.mxu0 0
    %1819 = vmatprep.subr.bf16.mxu0 0
    %1820 = vmatpush1.bf16.msra.mxu0 0
    %1821 = vmatprep.subr.bf16.mxu0 0
    %1822 = vmatpush1.bf16.msra.mxu0 0
    %1823 = vmatprep.subr.bf16.mxu0 0
    %1824 = vmatpush1.bf16.msra.mxu0 0
    %1825 = vmatprep.subr.bf16.mxu0 0
    %1826 = vmatpush1.bf16.msra.mxu0 0
    %1827 = vmatprep.subr.bf16.mxu0 0
    %1828 = vmatpush1.bf16.msra.mxu0 0
    %1829 = vmatprep.subr.bf16.mxu0 0
    %1830 = vmatpush1.bf16.msra.mxu0 0
    %1831 = vmatprep.subr.bf16.mxu0 0
    %1832 = vmatpush1.bf16.msra.mxu0 0
    %1833 = vmatprep.subr.bf16.mxu0 0
    %1834 = vmatpush1.bf16.msra.mxu0 0
    %1835 = vmatprep.subr.bf16.mxu0 0
    %1836 = vmatpush1.bf16.msra.mxu0 0
    %1837 = vmatprep.subr.bf16.mxu0 0
    %1838 = vmatpush1.bf16.msra.mxu0 0
    %1839 = vmatprep.mubr.bf16.mxu0 0
    %1840 = vmatmul.mubr.bf16.gmra.mrb[0].mxu0 %v1739
    %v1841 = vpop.f32.mrb[0].mxu0
    %v1842 = vadd.f32 0.0, %v1841
    %v1843 = vpop.f32.mrb[0].mxu0
    %v1844 = vpop.f32.mrb[0].mxu0
    %v1845 = vpop.f32.mrb[0].mxu0
    %1846 = vdwg.mxu0
    %v1847 = vadd.f32 %v1600, %v1842
    %s1848 = scalar_lea.vmem [#allocation5], 1
    %v1849 = vld [vmem:[%s1848] sm:$0x1]
    %v1851 = vlaneseq
    %v1852 = vshrl.u32 %v1851, 7
    %v1853 = vsub.s32 0, %v1852
    %v1854 = vrot.slane %v1849, %v1853
    %v1856 = vadd.f32 %v1847, %v1854
    %s1857 = scalar_lea.vmem %s6, 32
    %v1858 = vld [vmem:[%s1857] sm:$0xf]
    %v1859 = vld [vmem:[%s1857 + $0x4] sm:$0xf]
    %v1860 = vld [vmem:[%s1857 + $0x8] sm:$0xf]
    %v1861 = vld [vmem:[%s1857 + $0xc] sm:$0xf]
    %v1866 = vunpack.c.l.b16 %v1858
    %v1867 = vunpack.c.l.b16 %v1859
    %v1868 = vunpack.c.l.b16 %v1860
    %v1869 = vunpack.c.l.b16 %v1861
    %v1870 = vpack.c.b16 %v1867, %v1866
    %v1871 = vpack.c.b16 %v1869, %v1868
    %1874 = vmatprep.subr.bf16.mxu0 0
    %1875 = vmatpush1.bf16.msra.mxu0 %v1870
    %1876 = vmatprep.subr.bf16.mxu0 0
    %1877 = vmatpush1.bf16.msra.mxu0 %v1871
    %1878 = vmatprep.subr.bf16.mxu0 0
    %1879 = vmatpush1.bf16.msra.mxu0 0
    %1880 = vmatprep.subr.bf16.mxu0 0
    %1881 = vmatpush1.bf16.msra.mxu0 0
    %1882 = vmatprep.subr.bf16.mxu0 0
    %1883 = vmatpush1.bf16.msra.mxu0 0
    %1884 = vmatprep.subr.bf16.mxu0 0
    %1885 = vmatpush1.bf16.msra.mxu0 0
    %1886 = vmatprep.subr.bf16.mxu0 0
    %1887 = vmatpush1.bf16.msra.mxu0 0
    %1888 = vmatprep.subr.bf16.mxu0 0
    %1889 = vmatpush1.bf16.msra.mxu0 0
    %1890 = vmatprep.subr.bf16.mxu0 0
    %1891 = vmatpush1.bf16.msra.mxu0 0
    %1892 = vmatprep.subr.bf16.mxu0 0
    %1893 = vmatpush1.bf16.msra.mxu0 0
    %1894 = vmatprep.subr.bf16.mxu0 0
    %1895 = vmatpush1.bf16.msra.mxu0 0
    %1896 = vmatprep.subr.bf16.mxu0 0
    %1897 = vmatpush1.bf16.msra.mxu0 0
    %1898 = vmatprep.subr.bf16.mxu0 0
    %1899 = vmatpush1.bf16.msra.mxu0 0
    %1900 = vmatprep.subr.bf16.mxu0 0
    %1901 = vmatpush1.bf16.msra.mxu0 0
    %1902 = vmatprep.subr.bf16.mxu0 0
    %1903 = vmatpush1.bf16.msra.mxu0 0
    %1904 = vmatprep.subr.bf16.mxu0 0
    %1905 = vmatpush1.bf16.msra.mxu0 0
    %1906 = vmatprep.mubr.bf16.mxu0 0
    %1907 = vmatmul.mubr.bf16.gmra.mrb[0].mxu0 %v1739
    %v1908 = vpop.f32.mrb[0].mxu0
    %v1909 = vadd.f32 0.0, %v1908
    %v1910 = vpop.f32.mrb[0].mxu0
    %v1911 = vpop.f32.mrb[0].mxu0
    %v1912 = vpop.f32.mrb[0].mxu0
    %1913 = vdwg.mxu0
    %v1914 = vadd.f32 %v1658, %v1909
    %s1915 = scalar_lea.vmem [#allocation5], 2
    %v1916 = vld [vmem:[%s1915] sm:$0x1]
    %v1918 = vlaneseq
    %v1919 = vshrl.u32 %v1918, 7
    %v1920 = vsub.s32 0, %v1919
    %v1921 = vrot.slane %v1916, %v1920
    %v1923 = vadd.f32 %v1914, %v1921
    %s1924 = scalar_lea.vmem %s6, 48
    %v1925 = vld [vmem:[%s1924] sm:$0xf]
    %v1926 = vld [vmem:[%s1924 + $0x4] sm:$0xf]
    %v1927 = vld [vmem:[%s1924 + $0x8] sm:$0xf]
    %v1928 = vld [vmem:[%s1924 + $0xc] sm:$0xf]
    %v1933 = vunpack.c.l.b16 %v1925
    %v1934 = vunpack.c.l.b16 %v1926
    %v1935 = vunpack.c.l.b16 %v1927
    %v1936 = vunpack.c.l.b16 %v1928
    %v1937 = vpack.c.b16 %v1934, %v1933
    %v1938 = vpack.c.b16 %v1936, %v1935
    %1941 = vmatprep.subr.bf16.mxu0 0
    %1942 = vmatpush1.bf16.msra.mxu0 %v1937
    %1943 = vmatprep.subr.bf16.mxu0 0
    %1944 = vmatpush1.bf16.msra.mxu0 %v1938
    %1945 = vmatprep.subr.bf16.mxu0 0
    %1946 = vmatpush1.bf16.msra.mxu0 0
    %1947 = vmatprep.subr.bf16.mxu0 0
    %1948 = vmatpush1.bf16.msra.mxu0 0
    %1949 = vmatprep.subr.bf16.mxu0 0
    %1950 = vmatpush1.bf16.msra.mxu0 0
    %1951 = vmatprep.subr.bf16.mxu0 0
    %1952 = vmatpush1.bf16.msra.mxu0 0
    %1953 = vmatprep.subr.bf16.mxu0 0
    %1954 = vmatpush1.bf16.msra.mxu0 0
    %1955 = vmatprep.subr.bf16.mxu0 0
    %1956 = vmatpush1.bf16.msra.mxu0 0
    %1957 = vmatprep.subr.bf16.mxu0 0
    %1958 = vmatpush1.bf16.msra.mxu0 0
    %1959 = vmatprep.subr.bf16.mxu0 0
    %1960 = vmatpush1.bf16.msra.mxu0 0
    %1961 = vmatprep.subr.bf16.mxu0 0
    %1962 = vmatpush1.bf16.msra.mxu0 0
    %1963 = vmatprep.subr.bf16.mxu0 0
    %1964 = vmatpush1.bf16.msra.mxu0 0
    %1965 = vmatprep.subr.bf16.mxu0 0
    %1966 = vmatpush1.bf16.msra.mxu0 0
    %1967 = vmatprep.subr.bf16.mxu0 0
    %1968 = vmatpush1.bf16.msra.mxu0 0
    %1969 = vmatprep.subr.bf16.mxu0 0
    %1970 = vmatpush1.bf16.msra.mxu0 0
    %1971 = vmatprep.subr.bf16.mxu0 0
    %1972 = vmatpush1.bf16.msra.mxu0 0
    %1973 = vmatprep.mubr.bf16.mxu0 0
    %1974 = vmatmul.mubr.bf16.gmra.mrb[0].mxu0 %v1739
    %v1975 = vpop.f32.mrb[0].mxu0
    %v1976 = vadd.f32 0.0, %v1975
    %v1977 = vpop.f32.mrb[0].mxu0
    %v1978 = vpop.f32.mrb[0].mxu0
    %v1979 = vpop.f32.mrb[0].mxu0
    %1980 = vdwg.mxu0
    %v1981 = vadd.f32 %v1716, %v1976
    %s1982 = scalar_lea.vmem [#allocation5], 3
    %v1983 = vld [vmem:[%s1982] sm:$0x1]
    %v1985 = vlaneseq
    %v1986 = vshrl.u32 %v1985, 7
    %v1987 = vsub.s32 0, %v1986
    %v1988 = vrot.slane %v1983, %v1987
    %v1990 = vadd.f32 %v1981, %v1988
    %v1991 = vxor.u32 %v1789, 2147483648
    %v1992 = vmul.f32 %v1991, 1.442695
    %v1993 = vpow.pop %v1992
    %v1994 = vadd.f32 %v1993, 1.0
    %v1995 = vrcp.pop %v1994
    %v1996 = vmul.f32 1.0, %v1995
    %v1997 = vxor.u32 %v1856, 2147483648
    %v1998 = vmul.f32 %v1997, 1.442695
    %v1999 = vpow.pop %v1998
    %v2000 = vadd.f32 %v1999, 1.0
    %v2001 = vrcp.pop %v2000
    %v2002 = vmul.f32 1.0, %v2001
    %v2003 = vtanh.pop %v1923
    %v2004 = vxor.u32 %v1990, 2147483648
    %v2005 = vmul.f32 %v2004, 1.442695
    %v2006 = vpow.pop %v2005
    %v2007 = vadd.f32 %v2006, 1.0
    %v2008 = vrcp.pop %v2007
    %v2009 = vmul.f32 1.0, %v2008
    %v2010 = vmul.f32 %v2002, 0.0
    %v2011 = vmul.f32 %v1996, %v2003
    %v2012 = vadd.f32 %v2010, %v2011
    %v2013 = vtanh.pop %v2012
    %v2014 = vmul.f32 %v2009, %v2013
    %v2015 = vpack.c.bf16 %v2014, %v2014
    %v2017 = vsel %vm495, %v2015, 0
    %2019 = vmatprep.subr.bf16.mxu0 0
    %2020 = vmatpush1.bf16.msra.mxu0 %v1734
    %2021 = vmatprep.subr.bf16.mxu0 0
    %2022 = vmatpush1.bf16.msra.mxu0 %v1735
    %2023 = vmatprep.subr.bf16.mxu0 0
    %2024 = vmatpush1.bf16.msra.mxu0 0
    %2025 = vmatprep.subr.bf16.mxu0 0
    %2026 = vmatpush1.bf16.msra.mxu0 0
    %2027 = vmatprep.subr.bf16.mxu0 0
    %2028 = vmatpush1.bf16.msra.mxu0 0
    %2029 = vmatprep.subr.bf16.mxu0 0
    %2030 = vmatpush1.bf16.msra.mxu0 0
    %2031 = vmatprep.subr.bf16.mxu0 0
    %2032 = vmatpush1.bf16.msra.mxu0 0
    %2033 = vmatprep.subr.bf16.mxu0 0
    %2034 = vmatpush1.bf16.msra.mxu0 0
    %2035 = vmatprep.subr.bf16.mxu0 0
    %2036 = vmatpush1.bf16.msra.mxu0 0
    %2037 = vmatprep.subr.bf16.mxu0 0
    %2038 = vmatpush1.bf16.msra.mxu0 0
    %2039 = vmatprep.subr.bf16.mxu0 0
    %2040 = vmatpush1.bf16.msra.mxu0 0
    %2041 = vmatprep.subr.bf16.mxu0 0
    %2042 = vmatpush1.bf16.msra.mxu0 0
    %2043 = vmatprep.subr.bf16.mxu0 0
    %2044 = vmatpush1.bf16.msra.mxu0 0
    %2045 = vmatprep.subr.bf16.mxu0 0
    %2046 = vmatpush1.bf16.msra.mxu0 0
    %2047 = vmatprep.subr.bf16.mxu0 0
    %2048 = vmatpush1.bf16.msra.mxu0 0
    %2049 = vmatprep.subr.bf16.mxu0 0
    %2050 = vmatpush1.bf16.msra.mxu0 0
    %2051 = vmatprep.mubr.bf16.mxu0 0
    %2052 = vmatmul.mubr.bf16.gmra.mrb[0].mxu0 %v2017
    %v2053 = vpop.f32.mrb[0].mxu0
    %v2054 = vadd.f32 0.0, %v2053
    %v2055 = vpop.f32.mrb[0].mxu0
    %v2056 = vpop.f32.mrb[0].mxu0
    %v2057 = vpop.f32.mrb[0].mxu0
    %2058 = vdwg.mxu0
    %v2060 = vrot.slane %v2054, 6
    %v2062 = vadd.f32 %v1542, %v2060
    %v2063 = vadd.f32 %v2062, %v1787
    %2064 = vmatprep.subr.bf16.mxu0 0
    %2065 = vmatpush1.bf16.msra.mxu0 %v1803
    %2066 = vmatprep.subr.bf16.mxu0 0
    %2067 = vmatpush1.bf16.msra.mxu0 %v1804
    %2068 = vmatprep.subr.bf16.mxu0 0
    %2069 = vmatpush1.bf16.msra.mxu0 0
    %2070 = vmatprep.subr.bf16.mxu0 0
    %2071 = vmatpush1.bf16.msra.mxu0 0
    %2072 = vmatprep.subr.bf16.mxu0 0
    %2073 = vmatpush1.bf16.msra.mxu0 0
    %2074 = vmatprep.subr.bf16.mxu0 0
    %2075 = vmatpush1.bf16.msra.mxu0 0
    %2076 = vmatprep.subr.bf16.mxu0 0
    %2077 = vmatpush1.bf16.msra.mxu0 0
    %2078 = vmatprep.subr.bf16.mxu0 0
    %2079 = vmatpush1.bf16.msra.mxu0 0
    %2080 = vmatprep.subr.bf16.mxu0 0
    %2081 = vmatpush1.bf16.msra.mxu0 0
    %2082 = vmatprep.subr.bf16.mxu0 0
    %2083 = vmatpush1.bf16.msra.mxu0 0
    %2084 = vmatprep.subr.bf16.mxu0 0
    %2085 = vmatpush1.bf16.msra.mxu0 0
    %2086 = vmatprep.subr.bf16.mxu0 0
    %2087 = vmatpush1.bf16.msra.mxu0 0
    %2088 = vmatprep.subr.bf16.mxu0 0
    %2089 = vmatpush1.bf16.msra.mxu0 0
    %2090 = vmatprep.subr.bf16.mxu0 0
    %2091 = vmatpush1.bf16.msra.mxu0 0
    %2092 = vmatprep.subr.bf16.mxu0 0
    %2093 = vmatpush1.bf16.msra.mxu0 0
    %2094 = vmatprep.subr.bf16.mxu0 0
    %2095 = vmatpush1.bf16.msra.mxu0 0
    %2096 = vmatprep.mubr.bf16.mxu0 0
    %2097 = vmatmul.mubr.bf16.gmra.mrb[0].mxu0 %v2017
    %v2098 = vpop.f32.mrb[0].mxu0
    %v2099 = vadd.f32 0.0, %v2098
    %v2100 = vpop.f32.mrb[0].mxu0
    %v2101 = vpop.f32.mrb[0].mxu0
    %v2102 = vpop.f32.mrb[0].mxu0
    %2103 = vdwg.mxu0
    %v2105 = vrot.slane %v2099, 6
    %v2107 = vadd.f32 %v1600, %v2105
    %v2108 = vadd.f32 %v2107, %v1854
    %2109 = vmatprep.subr.bf16.mxu0 0
    %2110 = vmatpush1.bf16.msra.mxu0 %v1870
    %2111 = vmatprep.subr.bf16.mxu0 0
    %2112 = vmatpush1.bf16.msra.mxu0 %v1871
    %2113 = vmatprep.subr.bf16.mxu0 0
    %2114 = vmatpush1.bf16.msra.mxu0 0
    %2115 = vmatprep.subr.bf16.mxu0 0
    %2116 = vmatpush1.bf16.msra.mxu0 0
    %2117 = vmatprep.subr.bf16.mxu0 0
    %2118 = vmatpush1.bf16.msra.mxu0 0
    %2119 = vmatprep.subr.bf16.mxu0 0
    %2120 = vmatpush1.bf16.msra.mxu0 0
    %2121 = vmatprep.subr.bf16.mxu0 0
    %2122 = vmatpush1.bf16.msra.mxu0 0
    %2123 = vmatprep.subr.bf16.mxu0 0
    %2124 = vmatpush1.bf16.msra.mxu0 0
    %2125 = vmatprep.subr.bf16.mxu0 0
    %2126 = vmatpush1.bf16.msra.mxu0 0
    %2127 = vmatprep.subr.bf16.mxu0 0
    %2128 = vmatpush1.bf16.msra.mxu0 0
    %2129 = vmatprep.subr.bf16.mxu0 0
    %2130 = vmatpush1.bf16.msra.mxu0 0
    %2131 = vmatprep.subr.bf16.mxu0 0
    %2132 = vmatpush1.bf16.msra.mxu0 0
    %2133 = vmatprep.subr.bf16.mxu0 0
    %2134 = vmatpush1.bf16.msra.mxu0 0
    %2135 = vmatprep.subr.bf16.mxu0 0
    %2136 = vmatpush1.bf16.msra.mxu0 0
    %2137 = vmatprep.subr.bf16.mxu0 0
    %2138 = vmatpush1.bf16.msra.mxu0 0
    %2139 = vmatprep.subr.bf16.mxu0 0
    %2140 = vmatpush1.bf16.msra.mxu0 0
    %2141 = vmatprep.mubr.bf16.mxu0 0
    %2142 = vmatmul.mubr.bf16.gmra.mrb[0].mxu0 %v2017
    %v2143 = vpop.f32.mrb[0].mxu0
    %v2144 = vadd.f32 0.0, %v2143
    %v2145 = vpop.f32.mrb[0].mxu0
    %v2146 = vpop.f32.mrb[0].mxu0
    %v2147 = vpop.f32.mrb[0].mxu0
    %2148 = vdwg.mxu0
    %v2150 = vrot.slane %v2144, 6
    %v2152 = vadd.f32 %v1658, %v2150
    %v2153 = vadd.f32 %v2152, %v1921
    %2154 = vmatprep.subr.bf16.mxu0 0
    %2155 = vmatpush1.bf16.msra.mxu0 %v1937
    %2156 = vmatprep.subr.bf16.mxu0 0
    %2157 = vmatpush1.bf16.msra.mxu0 %v1938
    %2158 = vmatprep.subr.bf16.mxu0 0
    %2159 = vmatpush1.bf16.msra.mxu0 0
    %2160 = vmatprep.subr.bf16.mxu0 0
    %2161 = vmatpush1.bf16.msra.mxu0 0
    %2162 = vmatprep.subr.bf16.mxu0 0
    %2163 = vmatpush1.bf16.msra.mxu0 0
    %2164 = vmatprep.subr.bf16.mxu0 0
    %2165 = vmatpush1.bf16.msra.mxu0 0
    %2166 = vmatprep.subr.bf16.mxu0 0
    %2167 = vmatpush1.bf16.msra.mxu0 0
    %2168 = vmatprep.subr.bf16.mxu0 0
    %2169 = vmatpush1.bf16.msra.mxu0 0
    %2170 = vmatprep.subr.bf16.mxu0 0
    %2171 = vmatpush1.bf16.msra.mxu0 0
    %2172 = vmatprep.subr.bf16.mxu0 0
    %2173 = vmatpush1.bf16.msra.mxu0 0
    %2174 = vmatprep.subr.bf16.mxu0 0
    %2175 = vmatpush1.bf16.msra.mxu0 0
    %2176 = vmatprep.subr.bf16.mxu0 0
    %2177 = vmatpush1.bf16.msra.mxu0 0
    %2178 = vmatprep.subr.bf16.mxu0 0
    %2179 = vmatpush1.bf16.msra.mxu0 0
    %2180 = vmatprep.subr.bf16.mxu0 0
    %2181 = vmatpush1.bf16.msra.mxu0 0
    %2182 = vmatprep.subr.bf16.mxu0 0
    %2183 = vmatpush1.bf16.msra.mxu0 0
    %2184 = vmatprep.subr.bf16.mxu0 0
    %2185 = vmatpush1.bf16.msra.mxu0 0
    %2186 = vmatprep.mubr.bf16.mxu0 0
    %2187 = vmatmul.mubr.bf16.gmra.mrb[0].mxu0 %v2017
    %v2188 = vpop.f32.mrb[0].mxu0
    %v2189 = vadd.f32 0.0, %v2188
    %v2190 = vpop.f32.mrb[0].mxu0
    %v2191 = vpop.f32.mrb[0].mxu0
    %v2192 = vpop.f32.mrb[0].mxu0
    %2193 = vdwg.mxu0
    %v2195 = vrot.slane %v2189, 6
    %v2197 = vadd.f32 %v1716, %v2195
    %v2198 = vadd.f32 %v2197, %v1988
    %v2199 = vxor.u32 %v2063, 2147483648
    %v2200 = vmul.f32 %v2199, 1.442695
    %v2201 = vpow.pop %v2200
    %v2202 = vadd.f32 %v2201, 1.0
    %v2203 = vrcp.pop %v2202
    %v2204 = vmul.f32 1.0, %v2203
    %v2205 = vxor.u32 %v2108, 2147483648
    %v2206 = vmul.f32 %v2205, 1.442695
    %v2207 = vpow.pop %v2206
    %v2208 = vadd.f32 %v2207, 1.0
    %v2209 = vrcp.pop %v2208
    %v2210 = vmul.f32 1.0, %v2209
    %v2211 = vtanh.pop %v2153
    %v2212 = vxor.u32 %v2198, 2147483648
    %v2213 = vmul.f32 %v2212, 1.442695
    %v2214 = vpow.pop %v2213
    %v2215 = vadd.f32 %v2214, 1.0
    %v2216 = vrcp.pop %v2215
    %v2217 = vmul.f32 1.0, %v2216
    %v2219 = vrot.slane %v2012, 6
    %v2221 = vmul.f32 %v2210, %v2219
    %v2222 = vmul.f32 %v2204, %v2211
    %v2223 = vadd.f32 %v2221, %v2222
    %v2224 = vtanh.pop %v2223
    %v2225 = vmul.f32 %v2217, %v2224
    %v2226 = vpack.c.bf16 %v2225, %v2225
    %v2228 = vrot.slane %v2226, 1
    %v2230 = vsel %vm495, %v2228, 0
    %2232 = vmatprep.subr.bf16.mxu0 0
    %2233 = vmatpush1.bf16.msra.mxu0 %v1734
    %2234 = vmatprep.subr.bf16.mxu0 0
    %2235 = vmatpush1.bf16.msra.mxu0 %v1735
    %2236 = vmatprep.subr.bf16.mxu0 0
    %2237 = vmatpush1.bf16.msra.mxu0 0
    %2238 = vmatprep.subr.bf16.mxu0 0
    %2239 = vmatpush1.bf16.msra.mxu0 0
    %2240 = vmatprep.subr.bf16.mxu0 0
    %2241 = vmatpush1.bf16.msra.mxu0 0
    %2242 = vmatprep.subr.bf16.mxu0 0
    %2243 = vmatpush1.bf16.msra.mxu0 0
    %2244 = vmatprep.subr.bf16.mxu0 0
    %2245 = vmatpush1.bf16.msra.mxu0 0
    %2246 = vmatprep.subr.bf16.mxu0 0
    %2247 = vmatpush1.bf16.msra.mxu0 0
    %2248 = vmatprep.subr.bf16.mxu0 0
    %2249 = vmatpush1.bf16.msra.mxu0 0
    %2250 = vmatprep.subr.bf16.mxu0 0
    %2251 = vmatpush1.bf16.msra.mxu0 0
    %2252 = vmatprep.subr.bf16.mxu0 0
    %2253 = vmatpush1.bf16.msra.mxu0 0
    %2254 = vmatprep.subr.bf16.mxu0 0
    %2255 = vmatpush1.bf16.msra.mxu0 0
    %2256 = vmatprep.subr.bf16.mxu0 0
    %2257 = vmatpush1.bf16.msra.mxu0 0
    %2258 = vmatprep.subr.bf16.mxu0 0
    %2259 = vmatpush1.bf16.msra.mxu0 0
    %2260 = vmatprep.subr.bf16.mxu0 0
    %2261 = vmatpush1.bf16.msra.mxu0 0
    %2262 = vmatprep.subr.bf16.mxu0 0
    %2263 = vmatpush1.bf16.msra.mxu0 0
    %2264 = vmatprep.mubr.bf16.mxu0 0
    %2265 = vmatmul.mubr.bf16.gmra.mrb[0].mxu0 %v2230
    %v2266 = vpop.f32.mrb[0].mxu0
    %v2267 = vadd.f32 0.0, %v2266
    %v2268 = vpop.f32.mrb[0].mxu0
    %v2269 = vpop.f32.mrb[0].mxu0
    %v2270 = vpop.f32.mrb[0].mxu0
    %2271 = vdwg.mxu0
    %v2273 = vrot.slane %v2267, 4
    %v2275 = vadd.f32 %v1542, %v2273
    %v2276 = vadd.f32 %v2275, %v1787
    %2277 = vmatprep.subr.bf16.mxu0 0
    %2278 = vmatpush1.bf16.msra.mxu0 %v1803
    %2279 = vmatprep.subr.bf16.mxu0 0
    %2280 = vmatpush1.bf16.msra.mxu0 %v1804
    %2281 = vmatprep.subr.bf16.mxu0 0
    %2282 = vmatpush1.bf16.msra.mxu0 0
    %2283 = vmatprep.subr.bf16.mxu0 0
    %2284 = vmatpush1.bf16.msra.mxu0 0
    %2285 = vmatprep.subr.bf16.mxu0 0
    %2286 = vmatpush1.bf16.msra.mxu0 0
    %2287 = vmatprep.subr.bf16.mxu0 0
    %2288 = vmatpush1.bf16.msra.mxu0 0
    %2289 = vmatprep.subr.bf16.mxu0 0
    %2290 = vmatpush1.bf16.msra.mxu0 0
    %2291 = vmatprep.subr.bf16.mxu0 0
    %2292 = vmatpush1.bf16.msra.mxu0 0
    %2293 = vmatprep.subr.bf16.mxu0 0
    %2294 = vmatpush1.bf16.msra.mxu0 0
    %2295 = vmatprep.subr.bf16.mxu0 0
    %2296 = vmatpush1.bf16.msra.mxu0 0
    %2297 = vmatprep.subr.bf16.mxu0 0
    %2298 = vmatpush1.bf16.msra.mxu0 0
    %2299 = vmatprep.subr.bf16.mxu0 0
    %2300 = vmatpush1.bf16.msra.mxu0 0
    %2301 = vmatprep.subr.bf16.mxu0 0
    %2302 = vmatpush1.bf16.msra.mxu0 0
    %2303 = vmatprep.subr.bf16.mxu0 0
    %2304 = vmatpush1.bf16.msra.mxu0 0
    %2305 = vmatprep.subr.bf16.mxu0 0
    %2306 = vmatpush1.bf16.msra.mxu0 0
    %2307 = vmatprep.subr.bf16.mxu0 0
    %2308 = vmatpush1.bf16.msra.mxu0 0
    %2309 = vmatprep.mubr.bf16.mxu0 0
    %2310 = vmatmul.mubr.bf16.gmra.mrb[0].mxu0 %v2230
    %v2311 = vpop.f32.mrb[0].mxu0
    %v2312 = vadd.f32 0.0, %v2311
    %v2313 = vpop.f32.mrb[0].mxu0
    %v2314 = vpop.f32.mrb[0].mxu0
    %v2315 = vpop.f32.mrb[0].mxu0
    %2316 = vdwg.mxu0
    %v2318 = vrot.slane %v2312, 4
    %v2320 = vadd.f32 %v1600, %v2318
    %v2321 = vadd.f32 %v2320, %v1854
    %2322 = vmatprep.subr.bf16.mxu0 0
    %2323 = vmatpush1.bf16.msra.mxu0 %v1870
    %2324 = vmatprep.subr.bf16.mxu0 0
    %2325 = vmatpush1.bf16.msra.mxu0 %v1871
    %2326 = vmatprep.subr.bf16.mxu0 0
    %2327 = vmatpush1.bf16.msra.mxu0 0
    %2328 = vmatprep.subr.bf16.mxu0 0
    %2329 = vmatpush1.bf16.msra.mxu0 0
    %2330 = vmatprep.subr.bf16.mxu0 0
    %2331 = vmatpush1.bf16.msra.mxu0 0
    %2332 = vmatprep.subr.bf16.mxu0 0
    %2333 = vmatpush1.bf16.msra.mxu0 0
    %2334 = vmatprep.subr.bf16.mxu0 0
    %2335 = vmatpush1.bf16.msra.mxu0 0
    %2336 = vmatprep.subr.bf16.mxu0 0
    %2337 = vmatpush1.bf16.msra.mxu0 0
    %2338 = vmatprep.subr.bf16.mxu0 0
    %2339 = vmatpush1.bf16.msra.mxu0 0
    %2340 = vmatprep.subr.bf16.mxu0 0
    %2341 = vmatpush1.bf16.msra.mxu0 0
    %2342 = vmatprep.subr.bf16.mxu0 0
    %2343 = vmatpush1.bf16.msra.mxu0 0
    %2344 = vmatprep.subr.bf16.mxu0 0
    %2345 = vmatpush1.bf16.msra.mxu0 0
    %2346 = vmatprep.subr.bf16.mxu0 0
    %2347 = vmatpush1.bf16.msra.mxu0 0
    %2348 = vmatprep.subr.bf16.mxu0 0
    %2349 = vmatpush1.bf16.msra.mxu0 0
    %2350 = vmatprep.subr.bf16.mxu0 0
    %2351 = vmatpush1.bf16.msra.mxu0 0
    %2352 = vmatprep.subr.bf16.mxu0 0
    %2353 = vmatpush1.bf16.msra.mxu0 0
    %2354 = vmatprep.mubr.bf16.mxu0 0
    %2355 = vmatmul.mubr.bf16.gmra.mrb[0].mxu0 %v2230
    %v2356 = vpop.f32.mrb[0].mxu0
    %v2357 = vadd.f32 0.0, %v2356
    %v2358 = vpop.f32.mrb[0].mxu0
    %v2359 = vpop.f32.mrb[0].mxu0
    %v2360 = vpop.f32.mrb[0].mxu0
    %2361 = vdwg.mxu0
    %v2363 = vrot.slane %v2357, 4
    %v2365 = vadd.f32 %v1658, %v2363
    %v2366 = vadd.f32 %v2365, %v1921
    %2367 = vmatprep.subr.bf16.mxu0 0
    %2368 = vmatpush1.bf16.msra.mxu0 %v1937
    %2369 = vmatprep.subr.bf16.mxu0 0
    %2370 = vmatpush1.bf16.msra.mxu0 %v1938
    %2371 = vmatprep.subr.bf16.mxu0 0
    %2372 = vmatpush1.bf16.msra.mxu0 0
    %2373 = vmatprep.subr.bf16.mxu0 0
    %2374 = vmatpush1.bf16.msra.mxu0 0
    %2375 = vmatprep.subr.bf16.mxu0 0
    %2376 = vmatpush1.bf16.msra.mxu0 0
    %2377 = vmatprep.subr.bf16.mxu0 0
    %2378 = vmatpush1.bf16.msra.mxu0 0
    %2379 = vmatprep.subr.bf16.mxu0 0
    %2380 = vmatpush1.bf16.msra.mxu0 0
    %2381 = vmatprep.subr.bf16.mxu0 0
    %2382 = vmatpush1.bf16.msra.mxu0 0
    %2383 = vmatprep.subr.bf16.mxu0 0
    %2384 = vmatpush1.bf16.msra.mxu0 0
    %2385 = vmatprep.subr.bf16.mxu0 0
    %2386 = vmatpush1.bf16.msra.mxu0 0
    %2387 = vmatprep.subr.bf16.mxu0 0
    %2388 = vmatpush1.bf16.msra.mxu0 0
    %2389 = vmatprep.subr.bf16.mxu0 0
    %2390 = vmatpush1.bf16.msra.mxu0 0
    %2391 = vmatprep.subr.bf16.mxu0 0
    %2392 = vmatpush1.bf16.msra.mxu0 0
    %2393 = vmatprep.subr.bf16.mxu0 0
    %2394 = vmatpush1.bf16.msra.mxu0 0
    %2395 = vmatprep.subr.bf16.mxu0 0
    %2396 = vmatpush1.bf16.msra.mxu0 0
    %2397 = vmatprep.subr.bf16.mxu0 0
    %2398 = vmatpush1.bf16.msra.mxu0 0
    %2399 = vmatprep.mubr.bf16.mxu0 0
    %2400 = vmatmul.mubr.bf16.gmra.mrb[0].mxu0 %v2230
    %v2401 = vpop.f32.mrb[0].mxu0
    %v2402 = vadd.f32 0.0, %v2401
    %v2403 = vpop.f32.mrb[0].mxu0
    %v2404 = vpop.f32.mrb[0].mxu0
    %v2405 = vpop.f32.mrb[0].mxu0
    %2406 = vdwg.mxu0
    %v2408 = vrot.slane %v2402, 4
    %v2410 = vadd.f32 %v1716, %v2408
    %v2411 = vadd.f32 %v2410, %v1988
    %v2412 = vxor.u32 %v2276, 2147483648
    %v2413 = vmul.f32 %v2412, 1.442695
    %v2414 = vpow.pop %v2413
    %v2415 = vadd.f32 %v2414, 1.0
    %v2416 = vrcp.pop %v2415
    %v2417 = vmul.f32 1.0, %v2416
    %v2418 = vxor.u32 %v2321, 2147483648
    %v2419 = vmul.f32 %v2418, 1.442695
    %v2420 = vpow.pop %v2419
    %v2421 = vadd.f32 %v2420, 1.0
    %v2422 = vrcp.pop %v2421
    %v2423 = vmul.f32 1.0, %v2422
    %v2424 = vtanh.pop %v2366
    %v2425 = vxor.u32 %v2411, 2147483648
    %v2426 = vmul.f32 %v2425, 1.442695
    %v2427 = vpow.pop %v2426
    %v2428 = vadd.f32 %v2427, 1.0
    %v2429 = vrcp.pop %v2428
    %v2430 = vmul.f32 1.0, %v2429
    %v2432 = vrot.slane %v2223, 6
    %v2434 = vmul.f32 %v2423, %v2432
    %v2435 = vmul.f32 %v2417, %v2424
    %v2436 = vadd.f32 %v2434, %v2435
    %v2437 = vtanh.pop %v2436
    %v2438 = vmul.f32 %v2430, %v2437
    %v2439 = vpack.c.bf16 %v2438, %v2438
    %v2441 = vrot.slane %v2439, 2
    %v2443 = vsel %vm495, %v2441, 0
    %2445 = vmatprep.subr.bf16.mxu0 0
    %2446 = vmatpush1.bf16.msra.mxu0 %v1734
    %2447 = vmatprep.subr.bf16.mxu0 0
    %2448 = vmatpush1.bf16.msra.mxu0 %v1735
    %2449 = vmatprep.subr.bf16.mxu0 0
    %2450 = vmatpush1.bf16.msra.mxu0 0
    %2451 = vmatprep.subr.bf16.mxu0 0
    %2452 = vmatpush1.bf16.msra.mxu0 0
    %2453 = vmatprep.subr.bf16.mxu0 0
    %2454 = vmatpush1.bf16.msra.mxu0 0
    %2455 = vmatprep.subr.bf16.mxu0 0
    %2456 = vmatpush1.bf16.msra.mxu0 0
    %2457 = vmatprep.subr.bf16.mxu0 0
    %2458 = vmatpush1.bf16.msra.mxu0 0
    %2459 = vmatprep.subr.bf16.mxu0 0
    %2460 = vmatpush1.bf16.msra.mxu0 0
    %2461 = vmatprep.subr.bf16.mxu0 0
    %2462 = vmatpush1.bf16.msra.mxu0 0
    %2463 = vmatprep.subr.bf16.mxu0 0
    %2464 = vmatpush1.bf16.msra.mxu0 0
    %2465 = vmatprep.subr.bf16.mxu0 0
    %2466 = vmatpush1.bf16.msra.mxu0 0
    %2467 = vmatprep.subr.bf16.mxu0 0
    %2468 = vmatpush1.bf16.msra.mxu0 0
    %2469 = vmatprep.subr.bf16.mxu0 0
    %2470 = vmatpush1.bf16.msra.mxu0 0
    %2471 = vmatprep.subr.bf16.mxu0 0
    %2472 = vmatpush1.bf16.msra.mxu0 0
    %2473 = vmatprep.subr.bf16.mxu0 0
    %2474 = vmatpush1.bf16.msra.mxu0 0
    %2475 = vmatprep.subr.bf16.mxu0 0
    %2476 = vmatpush1.bf16.msra.mxu0 0
    %2477 = vmatprep.mubr.bf16.mxu0 0
    %2478 = vmatmul.mubr.bf16.gmra.mrb[0].mxu0 %v2443
    %v2479 = vpop.f32.mrb[0].mxu0
    %v2480 = vadd.f32 0.0, %v2479
    %v2481 = vpop.f32.mrb[0].mxu0
    %v2482 = vpop.f32.mrb[0].mxu0
    %v2483 = vpop.f32.mrb[0].mxu0
    %2484 = vdwg.mxu0
    %v2486 = vrot.slane %v2480, 2
    %v2488 = vadd.f32 %v1542, %v2486
    %v2489 = vadd.f32 %v2488, %v1787
    %2490 = vmatprep.subr.bf16.mxu0 0
    %2491 = vmatpush1.bf16.msra.mxu0 %v1803
    %2492 = vmatprep.subr.bf16.mxu0 0
    %2493 = vmatpush1.bf16.msra.mxu0 %v1804
    %2494 = vmatprep.subr.bf16.mxu0 0
    %2495 = vmatpush1.bf16.msra.mxu0 0
    %2496 = vmatprep.subr.bf16.mxu0 0
    %2497 = vmatpush1.bf16.msra.mxu0 0
    %2498 = vmatprep.subr.bf16.mxu0 0
    %2499 = vmatpush1.bf16.msra.mxu0 0
    %2500 = vmatprep.subr.bf16.mxu0 0
    %2501 = vmatpush1.bf16.msra.mxu0 0
    %2502 = vmatprep.subr.bf16.mxu0 0
    %2503 = vmatpush1.bf16.msra.mxu0 0
    %2504 = vmatprep.subr.bf16.mxu0 0
    %2505 = vmatpush1.bf16.msra.mxu0 0
    %2506 = vmatprep.subr.bf16.mxu0 0
    %2507 = vmatpush1.bf16.msra.mxu0 0
    %2508 = vmatprep.subr.bf16.mxu0 0
    %2509 = vmatpush1.bf16.msra.mxu0 0
    %2510 = vmatprep.subr.bf16.mxu0 0
    %2511 = vmatpush1.bf16.msra.mxu0 0
    %2512 = vmatprep.subr.bf16.mxu0 0
    %2513 = vmatpush1.bf16.msra.mxu0 0
    %2514 = vmatprep.subr.bf16.mxu0 0
    %2515 = vmatpush1.bf16.msra.mxu0 0
    %2516 = vmatprep.subr.bf16.mxu0 0
    %2517 = vmatpush1.bf16.msra.mxu0 0
    %2518 = vmatprep.subr.bf16.mxu0 0
    %2519 = vmatpush1.bf16.msra.mxu0 0
    %2520 = vmatprep.subr.bf16.mxu0 0
    %2521 = vmatpush1.bf16.msra.mxu0 0
    %2522 = vmatprep.mubr.bf16.mxu0 0
    %2523 = vmatmul.mubr.bf16.gmra.mrb[0].mxu0 %v2443
    %v2524 = vpop.f32.mrb[0].mxu0
    %v2525 = vadd.f32 0.0, %v2524
    %v2526 = vpop.f32.mrb[0].mxu0
    %v2527 = vpop.f32.mrb[0].mxu0
    %v2528 = vpop.f32.mrb[0].mxu0
    %2529 = vdwg.mxu0
    %v2531 = vrot.slane %v2525, 2
    %v2533 = vadd.f32 %v1600, %v2531
    %v2534 = vadd.f32 %v2533, %v1854
    %2535 = vmatprep.subr.bf16.mxu0 0
    %2536 = vmatpush1.bf16.msra.mxu0 %v1870
    %2537 = vmatprep.subr.bf16.mxu0 0
    %2538 = vmatpush1.bf16.msra.mxu0 %v1871
    %2539 = vmatprep.subr.bf16.mxu0 0
    %2540 = vmatpush1.bf16.msra.mxu0 0
    %2541 = vmatprep.subr.bf16.mxu0 0
    %2542 = vmatpush1.bf16.msra.mxu0 0
    %2543 = vmatprep.subr.bf16.mxu0 0
    %2544 = vmatpush1.bf16.msra.mxu0 0
    %2545 = vmatprep.subr.bf16.mxu0 0
    %2546 = vmatpush1.bf16.msra.mxu0 0
    %2547 = vmatprep.subr.bf16.mxu0 0
    %2548 = vmatpush1.bf16.msra.mxu0 0
    %2549 = vmatprep.subr.bf16.mxu0 0
    %2550 = vmatpush1.bf16.msra.mxu0 0
    %2551 = vmatprep.subr.bf16.mxu0 0
    %2552 = vmatpush1.bf16.msra.mxu0 0
    %2553 = vmatprep.subr.bf16.mxu0 0
    %2554 = vmatpush1.bf16.msra.mxu0 0
    %2555 = vmatprep.subr.bf16.mxu0 0
    %2556 = vmatpush1.bf16.msra.mxu0 0
    %2557 = vmatprep.subr.bf16.mxu0 0
    %2558 = vmatpush1.bf16.msra.mxu0 0
    %2559 = vmatprep.subr.bf16.mxu0 0
    %2560 = vmatpush1.bf16.msra.mxu0 0
    %2561 = vmatprep.subr.bf16.mxu0 0
    %2562 = vmatpush1.bf16.msra.mxu0 0
    %2563 = vmatprep.subr.bf16.mxu0 0
    %2564 = vmatpush1.bf16.msra.mxu0 0
    %2565 = vmatprep.subr.bf16.mxu0 0
    %2566 = vmatpush1.bf16.msra.mxu0 0
    %2567 = vmatprep.mubr.bf16.mxu0 0
    %2568 = vmatmul.mubr.bf16.gmra.mrb[0].mxu0 %v2443
    %v2569 = vpop.f32.mrb[0].mxu0
    %v2570 = vadd.f32 0.0, %v2569
    %v2571 = vpop.f32.mrb[0].mxu0
    %v2572 = vpop.f32.mrb[0].mxu0
    %v2573 = vpop.f32.mrb[0].mxu0
    %2574 = vdwg.mxu0
    %v2576 = vrot.slane %v2570, 2
    %v2578 = vadd.f32 %v1658, %v2576
    %v2579 = vadd.f32 %v2578, %v1921
    %2580 = vmatprep.subr.bf16.mxu0 0
    %2581 = vmatpush1.bf16.msra.mxu0 %v1937
    %2582 = vmatprep.subr.bf16.mxu0 0
    %2583 = vmatpush1.bf16.msra.mxu0 %v1938
    %2584 = vmatprep.subr.bf16.mxu0 0
    %2585 = vmatpush1.bf16.msra.mxu0 0
    %2586 = vmatprep.subr.bf16.mxu0 0
    %2587 = vmatpush1.bf16.msra.mxu0 0
    %2588 = vmatprep.subr.bf16.mxu0 0
    %2589 = vmatpush1.bf16.msra.mxu0 0
    %2590 = vmatprep.subr.bf16.mxu0 0
    %2591 = vmatpush1.bf16.msra.mxu0 0
    %2592 = vmatprep.subr.bf16.mxu0 0
    %2593 = vmatpush1.bf16.msra.mxu0 0
    %2594 = vmatprep.subr.bf16.mxu0 0
    %2595 = vmatpush1.bf16.msra.mxu0 0
    %2596 = vmatprep.subr.bf16.mxu0 0
    %2597 = vmatpush1.bf16.msra.mxu0 0
    %2598 = vmatprep.subr.bf16.mxu0 0
    %2599 = vmatpush1.bf16.msra.mxu0 0
    %2600 = vmatprep.subr.bf16.mxu0 0
    %2601 = vmatpush1.bf16.msra.mxu0 0
    %2602 = vmatprep.subr.bf16.mxu0 0
    %2603 = vmatpush1.bf16.msra.mxu0 0
    %2604 = vmatprep.subr.bf16.mxu0 0
    %2605 = vmatpush1.bf16.msra.mxu0 0
    %2606 = vmatprep.subr.bf16.mxu0 0
    %2607 = vmatpush1.bf16.msra.mxu0 0
    %2608 = vmatprep.subr.bf16.mxu0 0
    %2609 = vmatpush1.bf16.msra.mxu0 0
    %2610 = vmatprep.subr.bf16.mxu0 0
    %2611 = vmatpush1.bf16.msra.mxu0 0
    %2612 = vmatprep.mubr.bf16.mxu0 0
    %2613 = vmatmul.mubr.bf16.gmra.mrb[0].mxu0 %v2443
    %v2614 = vpop.f32.mrb[0].mxu0
    %v2615 = vadd.f32 0.0, %v2614
    %v2616 = vpop.f32.mrb[0].mxu0
    %v2617 = vpop.f32.mrb[0].mxu0
    %v2618 = vpop.f32.mrb[0].mxu0
    %2619 = vdwg.mxu0
    %v2621 = vrot.slane %v2615, 2
    %v2623 = vadd.f32 %v1716, %v2621
    %v2624 = vadd.f32 %v2623, %v1988
    %v2625 = vxor.u32 %v2489, 2147483648
    %v2626 = vmul.f32 %v2625, 1.442695
    %v2627 = vpow.pop %v2626
    %v2628 = vadd.f32 %v2627, 1.0
    %v2629 = vrcp.pop %v2628
    %v2630 = vmul.f32 1.0, %v2629
    %v2631 = vxor.u32 %v2534, 2147483648
    %v2632 = vmul.f32 %v2631, 1.442695
    %v2633 = vpow.pop %v2632
    %v2634 = vadd.f32 %v2633, 1.0
    %v2635 = vrcp.pop %v2634
    %v2636 = vmul.f32 1.0, %v2635
    %v2637 = vtanh.pop %v2579
    %v2638 = vxor.u32 %v2624, 2147483648
    %v2639 = vmul.f32 %v2638, 1.442695
    %v2640 = vpow.pop %v2639
    %v2641 = vadd.f32 %v2640, 1.0
    %v2642 = vrcp.pop %v2641
    %v2643 = vmul.f32 1.0, %v2642
    %v2645 = vrot.slane %v2436, 6
    %v2647 = vmul.f32 %v2636, %v2645
    %v2648 = vmul.f32 %v2630, %v2637
    %v2649 = vadd.f32 %v2647, %v2648
    %v2650 = vtanh.pop %v2649
    %v2651 = vmul.f32 %v2643, %v2650
    %v2652 = vpack.c.bf16 %v2651, %v2651
    %v2654 = vrot.slane %v2652, 3
    %v2656 = vsel %vm495, %v2654, 0
    %2658 = vmatprep.subr.bf16.mxu0 0
    %2659 = vmatpush1.bf16.msra.mxu0 %v1734
    %2660 = vmatprep.subr.bf16.mxu0 0
    %2661 = vmatpush1.bf16.msra.mxu0 %v1735
    %2662 = vmatprep.subr.bf16.mxu0 0
    %2663 = vmatpush1.bf16.msra.mxu0 0
    %2664 = vmatprep.subr.bf16.mxu0 0
    %2665 = vmatpush1.bf16.msra.mxu0 0
    %2666 = vmatprep.subr.bf16.mxu0 0
    %2667 = vmatpush1.bf16.msra.mxu0 0
    %2668 = vmatprep.subr.bf16.mxu0 0
    %2669 = vmatpush1.bf16.msra.mxu0 0
    %2670 = vmatprep.subr.bf16.mxu0 0
    %2671 = vmatpush1.bf16.msra.mxu0 0
    %2672 = vmatprep.subr.bf16.mxu0 0
    %2673 = vmatpush1.bf16.msra.mxu0 0
    %2674 = vmatprep.subr.bf16.mxu0 0
    %2675 = vmatpush1.bf16.msra.mxu0 0
    %2676 = vmatprep.subr.bf16.mxu0 0
    %2677 = vmatpush1.bf16.msra.mxu0 0
    %2678 = vmatprep.subr.bf16.mxu0 0
    %2679 = vmatpush1.bf16.msra.mxu0 0
    %2680 = vmatprep.subr.bf16.mxu0 0
    %2681 = vmatpush1.bf16.msra.mxu0 0
    %2682 = vmatprep.subr.bf16.mxu0 0
    %2683 = vmatpush1.bf16.msra.mxu0 0
    %2684 = vmatprep.subr.bf16.mxu0 0
    %2685 = vmatpush1.bf16.msra.mxu0 0
    %2686 = vmatprep.subr.bf16.mxu0 0
    %2687 = vmatpush1.bf16.msra.mxu0 0
    %2688 = vmatprep.subr.bf16.mxu0 0
    %2689 = vmatpush1.bf16.msra.mxu0 0
    %2690 = vmatprep.mubr.bf16.mxu0 0
    %2691 = vmatmul.mubr.bf16.gmra.mrb[0].mxu0 %v2656
    %v2692 = vpop.f32.mrb[0].mxu0
    %v2693 = vadd.f32 0.0, %v2692
    %v2694 = vpop.f32.mrb[0].mxu0
    %v2695 = vpop.f32.mrb[0].mxu0
    %v2696 = vpop.f32.mrb[0].mxu0
    %2697 = vdwg.mxu0
    %v2698 = vadd.f32 %v1545, %v2693
    %v2699 = vadd.f32 %v2698, %v1787
    %2700 = vmatprep.subr.bf16.mxu0 0
    %2701 = vmatpush1.bf16.msra.mxu0 %v1803
    %2702 = vmatprep.subr.bf16.mxu0 0
    %2703 = vmatpush1.bf16.msra.mxu0 %v1804
    %2704 = vmatprep.subr.bf16.mxu0 0
    %2705 = vmatpush1.bf16.msra.mxu0 0
    %2706 = vmatprep.subr.bf16.mxu0 0
    %2707 = vmatpush1.bf16.msra.mxu0 0
    %2708 = vmatprep.subr.bf16.mxu0 0
    %2709 = vmatpush1.bf16.msra.mxu0 0
    %2710 = vmatprep.subr.bf16.mxu0 0
    %2711 = vmatpush1.bf16.msra.mxu0 0
    %2712 = vmatprep.subr.bf16.mxu0 0
    %2713 = vmatpush1.bf16.msra.mxu0 0
    %2714 = vmatprep.subr.bf16.mxu0 0
    %2715 = vmatpush1.bf16.msra.mxu0 0
    %2716 = vmatprep.subr.bf16.mxu0 0
    %2717 = vmatpush1.bf16.msra.mxu0 0
    %2718 = vmatprep.subr.bf16.mxu0 0
    %2719 = vmatpush1.bf16.msra.mxu0 0
    %2720 = vmatprep.subr.bf16.mxu0 0
    %2721 = vmatpush1.bf16.msra.mxu0 0
    %2722 = vmatprep.subr.bf16.mxu0 0
    %2723 = vmatpush1.bf16.msra.mxu0 0
    %2724 = vmatprep.subr.bf16.mxu0 0
    %2725 = vmatpush1.bf16.msra.mxu0 0
    %2726 = vmatprep.subr.bf16.mxu0 0
    %2727 = vmatpush1.bf16.msra.mxu0 0
    %2728 = vmatprep.subr.bf16.mxu0 0
    %2729 = vmatpush1.bf16.msra.mxu0 0
    %2730 = vmatprep.subr.bf16.mxu0 0
    %2731 = vmatpush1.bf16.msra.mxu0 0
    %2732 = vmatprep.mubr.bf16.mxu0 0
    %2733 = vmatmul.mubr.bf16.gmra.mrb[0].mxu0 %v2656
    %v2734 = vpop.f32.mrb[0].mxu0
    %v2735 = vadd.f32 0.0, %v2734
    %v2736 = vpop.f32.mrb[0].mxu0
    %v2737 = vpop.f32.mrb[0].mxu0
    %v2738 = vpop.f32.mrb[0].mxu0
    %2739 = vdwg.mxu0
    %v2740 = vadd.f32 %v1603, %v2735
    %v2741 = vadd.f32 %v2740, %v1854
    %2742 = vmatprep.subr.bf16.mxu0 0
    %2743 = vmatpush1.bf16.msra.mxu0 %v1870
    %2744 = vmatprep.subr.bf16.mxu0 0
    %2745 = vmatpush1.bf16.msra.mxu0 %v1871
    %2746 = vmatprep.subr.bf16.mxu0 0
    %2747 = vmatpush1.bf16.msra.mxu0 0
    %2748 = vmatprep.subr.bf16.mxu0 0
    %2749 = vmatpush1.bf16.msra.mxu0 0
    %2750 = vmatprep.subr.bf16.mxu0 0
    %2751 = vmatpush1.bf16.msra.mxu0 0
    %2752 = vmatprep.subr.bf16.mxu0 0
    %2753 = vmatpush1.bf16.msra.mxu0 0
    %2754 = vmatprep.subr.bf16.mxu0 0
    %2755 = vmatpush1.bf16.msra.mxu0 0
    %2756 = vmatprep.subr.bf16.mxu0 0
    %2757 = vmatpush1.bf16.msra.mxu0 0
    %2758 = vmatprep.subr.bf16.mxu0 0
    %2759 = vmatpush1.bf16.msra.mxu0 0
    %2760 = vmatprep.subr.bf16.mxu0 0
    %2761 = vmatpush1.bf16.msra.mxu0 0
    %2762 = vmatprep.subr.bf16.mxu0 0
    %2763 = vmatpush1.bf16.msra.mxu0 0
    %2764 = vmatprep.subr.bf16.mxu0 0
    %2765 = vmatpush1.bf16.msra.mxu0 0
    %2766 = vmatprep.subr.bf16.mxu0 0
    %2767 = vmatpush1.bf16.msra.mxu0 0
    %2768 = vmatprep.subr.bf16.mxu0 0
    %2769 = vmatpush1.bf16.msra.mxu0 0
    %2770 = vmatprep.subr.bf16.mxu0 0
    %2771 = vmatpush1.bf16.msra.mxu0 0
    %2772 = vmatprep.subr.bf16.mxu0 0
    %2773 = vmatpush1.bf16.msra.mxu0 0
    %2774 = vmatprep.mubr.bf16.mxu0 0
    %2775 = vmatmul.mubr.bf16.gmra.mrb[0].mxu0 %v2656
    %v2776 = vpop.f32.mrb[0].mxu0
    %v2777 = vadd.f32 0.0, %v2776
    %v2778 = vpop.f32.mrb[0].mxu0
    %v2779 = vpop.f32.mrb[0].mxu0
    %v2780 = vpop.f32.mrb[0].mxu0
    %2781 = vdwg.mxu0
    %v2782 = vadd.f32 %v1661, %v2777
    %v2783 = vadd.f32 %v2782, %v1921
    %2784 = vmatprep.subr.bf16.mxu0 0
    %2785 = vmatpush1.bf16.msra.mxu0 %v1937
    %2786 = vmatprep.subr.bf16.mxu0 0
    %2787 = vmatpush1.bf16.msra.mxu0 %v1938
    %2788 = vmatprep.subr.bf16.mxu0 0
    %2789 = vmatpush1.bf16.msra.mxu0 0
    %2790 = vmatprep.subr.bf16.mxu0 0
    %2791 = vmatpush1.bf16.msra.mxu0 0
    %2792 = vmatprep.subr.bf16.mxu0 0
    %2793 = vmatpush1.bf16.msra.mxu0 0
    %2794 = vmatprep.subr.bf16.mxu0 0
    %2795 = vmatpush1.bf16.msra.mxu0 0
    %2796 = vmatprep.subr.bf16.mxu0 0
    %2797 = vmatpush1.bf16.msra.mxu0 0
    %2798 = vmatprep.subr.bf16.mxu0 0
    %2799 = vmatpush1.bf16.msra.mxu0 0
    %2800 = vmatprep.subr.bf16.mxu0 0
    %2801 = vmatpush1.bf16.msra.mxu0 0
    %2802 = vmatprep.subr.bf16.mxu0 0
    %2803 = vmatpush1.bf16.msra.mxu0 0
    %2804 = vmatprep.subr.bf16.mxu0 0
    %2805 = vmatpush1.bf16.msra.mxu0 0
    %2806 = vmatprep.subr.bf16.mxu0 0
    %2807 = vmatpush1.bf16.msra.mxu0 0
    %2808 = vmatprep.subr.bf16.mxu0 0
    %2809 = vmatpush1.bf16.msra.mxu0 0
    %2810 = vmatprep.subr.bf16.mxu0 0
    %2811 = vmatpush1.bf16.msra.mxu0 0
    %2812 = vmatprep.subr.bf16.mxu0 0
    %2813 = vmatpush1.bf16.msra.mxu0 0
    %2814 = vmatprep.subr.bf16.mxu0 0
    %2815 = vmatpush1.bf16.msra.mxu0 0
    %2816 = vmatprep.mubr.bf16.mxu0 0
    %2817 = vmatmul.mubr.bf16.gmra.mrb[0].mxu0 %v2656
    %v2818 = vpop.f32.mrb[0].mxu0
    %v2819 = vadd.f32 0.0, %v2818
    %v2820 = vpop.f32.mrb[0].mxu0
    %v2821 = vpop.f32.mrb[0].mxu0
    %v2822 = vpop.f32.mrb[0].mxu0
    %2823 = vdwg.mxu0
    %v2824 = vadd.f32 %v1719, %v2819
    %v2825 = vadd.f32 %v2824, %v1988
    %v2826 = vxor.u32 %v2699, 2147483648
    %v2827 = vmul.f32 %v2826, 1.442695
    %v2828 = vpow.pop %v2827
    %v2829 = vadd.f32 %v2828, 1.0
    %v2830 = vrcp.pop %v2829
    %v2831 = vmul.f32 1.0, %v2830
    %v2832 = vxor.u32 %v2741, 2147483648
    %v2833 = vmul.f32 %v2832, 1.442695
    %v2834 = vpow.pop %v2833
    %v2835 = vadd.f32 %v2834, 1.0
    %v2836 = vrcp.pop %v2835
    %v2837 = vmul.f32 1.0, %v2836
    %v2838 = vtanh.pop %v2783
    %v2839 = vxor.u32 %v2825, 2147483648
    %v2840 = vmul.f32 %v2839, 1.442695
    %v2841 = vpow.pop %v2840
    %v2842 = vadd.f32 %v2841, 1.0
    %v2843 = vrcp.pop %v2842
    %v2844 = vmul.f32 1.0, %v2843
    %v2846 = vrot.slane %v2649, 6
    %v2848 = vmul.f32 %v2837, %v2846
    %v2849 = vmul.f32 %v2831, %v2838
    %v2850 = vadd.f32 %v2848, %v2849
    %v2851 = vtanh.pop %v2850
    %v2852 = vmul.f32 %v2844, %v2851
    %v2853 = vpack.c.bf16 %v2852, %v2852
    %v2855 = vsel %vm495, %v2853, 0
    %2857 = vmatprep.subr.bf16.mxu0 0
    %2858 = vmatpush1.bf16.msra.mxu0 %v1734
    %2859 = vmatprep.subr.bf16.mxu0 0
    %2860 = vmatpush1.bf16.msra.mxu0 %v1735
    %2861 = vmatprep.subr.bf16.mxu0 0
    %2862 = vmatpush1.bf16.msra.mxu0 0
    %2863 = vmatprep.subr.bf16.mxu0 0
    %2864 = vmatpush1.bf16.msra.mxu0 0
    %2865 = vmatprep.subr.bf16.mxu0 0
    %2866 = vmatpush1.bf16.msra.mxu0 0
    %2867 = vmatprep.subr.bf16.mxu0 0
    %2868 = vmatpush1.bf16.msra.mxu0 0
    %2869 = vmatprep.subr.bf16.mxu0 0
    %2870 = vmatpush1.bf16.msra.mxu0 0
    %2871 = vmatprep.subr.bf16.mxu0 0
    %2872 = vmatpush1.bf16.msra.mxu0 0
    %2873 = vmatprep.subr.bf16.mxu0 0
    %2874 = vmatpush1.bf16.msra.mxu0 0
    %2875 = vmatprep.subr.bf16.mxu0 0
    %2876 = vmatpush1.bf16.msra.mxu0 0
    %2877 = vmatprep.subr.bf16.mxu0 0
    %2878 = vmatpush1.bf16.msra.mxu0 0
    %2879 = vmatprep.subr.bf16.mxu0 0
    %2880 = vmatpush1.bf16.msra.mxu0 0
    %2881 = vmatprep.subr.bf16.mxu0 0
    %2882 = vmatpush1.bf16.msra.mxu0 0
    %2883 = vmatprep.subr.bf16.mxu0 0
    %2884 = vmatpush1.bf16.msra.mxu0 0
    %2885 = vmatprep.subr.bf16.mxu0 0
    %2886 = vmatpush1.bf16.msra.mxu0 0
    %2887 = vmatprep.subr.bf16.mxu0 0
    %2888 = vmatpush1.bf16.msra.mxu0 0
    %2889 = vmatprep.mubr.bf16.mxu0 0
    %2890 = vmatmul.mubr.bf16.gmra.mrb[0].mxu0 %v2855
    %v2891 = vpop.f32.mrb[0].mxu0
    %v2892 = vadd.f32 0.0, %v2891
    %v2893 = vpop.f32.mrb[0].mxu0
    %v2894 = vpop.f32.mrb[0].mxu0
    %v2895 = vpop.f32.mrb[0].mxu0
    %2896 = vdwg.mxu0
    %v2898 = vrot.slane %v2892, 6
    %v2900 = vadd.f32 %v1545, %v2898
    %v2901 = vadd.f32 %v2900, %v1787
    %2902 = vmatprep.subr.bf16.mxu0 0
    %2903 = vmatpush1.bf16.msra.mxu0 %v1803
    %2904 = vmatprep.subr.bf16.mxu0 0
    %2905 = vmatpush1.bf16.msra.mxu0 %v1804
    %2906 = vmatprep.subr.bf16.mxu0 0
    %2907 = vmatpush1.bf16.msra.mxu0 0
    %2908 = vmatprep.subr.bf16.mxu0 0
    %2909 = vmatpush1.bf16.msra.mxu0 0
    %2910 = vmatprep.subr.bf16.mxu0 0
    %2911 = vmatpush1.bf16.msra.mxu0 0
    %2912 = vmatprep.subr.bf16.mxu0 0
    %2913 = vmatpush1.bf16.msra.mxu0 0
    %2914 = vmatprep.subr.bf16.mxu0 0
    %2915 = vmatpush1.bf16.msra.mxu0 0
    %2916 = vmatprep.subr.bf16.mxu0 0
    %2917 = vmatpush1.bf16.msra.mxu0 0
    %2918 = vmatprep.subr.bf16.mxu0 0
    %2919 = vmatpush1.bf16.msra.mxu0 0
    %2920 = vmatprep.subr.bf16.mxu0 0
    %2921 = vmatpush1.bf16.msra.mxu0 0
    %2922 = vmatprep.subr.bf16.mxu0 0
    %2923 = vmatpush1.bf16.msra.mxu0 0
    %2924 = vmatprep.subr.bf16.mxu0 0
    %2925 = vmatpush1.bf16.msra.mxu0 0
    %2926 = vmatprep.subr.bf16.mxu0 0
    %2927 = vmatpush1.bf16.msra.mxu0 0
    %2928 = vmatprep.subr.bf16.mxu0 0
    %2929 = vmatpush1.bf16.msra.mxu0 0
    %2930 = vmatprep.subr.bf16.mxu0 0
    %2931 = vmatpush1.bf16.msra.mxu0 0
    %2932 = vmatprep.subr.bf16.mxu0 0
    %2933 = vmatpush1.bf16.msra.mxu0 0
    %2934 = vmatprep.mubr.bf16.mxu0 0
    %2935 = vmatmul.mubr.bf16.gmra.mrb[0].mxu0 %v2855
    %v2936 = vpop.f32.mrb[0].mxu0
    %v2937 = vadd.f32 0.0, %v2936
    %v2938 = vpop.f32.mrb[0].mxu0
    %v2939 = vpop.f32.mrb[0].mxu0
    %v2940 = vpop.f32.mrb[0].mxu0
    %2941 = vdwg.mxu0
    %v2943 = vrot.slane %v2937, 6
    %v2945 = vadd.f32 %v1603, %v2943
    %v2946 = vadd.f32 %v2945, %v1854
    %2947 = vmatprep.subr.bf16.mxu0 0
    %2948 = vmatpush1.bf16.msra.mxu0 %v1870
    %2949 = vmatprep.subr.bf16.mxu0 0
    %2950 = vmatpush1.bf16.msra.mxu0 %v1871
    %2951 = vmatprep.subr.bf16.mxu0 0
    %2952 = vmatpush1.bf16.msra.mxu0 0
    %2953 = vmatprep.subr.bf16.mxu0 0
    %2954 = vmatpush1.bf16.msra.mxu0 0
    %2955 = vmatprep.subr.bf16.mxu0 0
    %2956 = vmatpush1.bf16.msra.mxu0 0
    %2957 = vmatprep.subr.bf16.mxu0 0
    %2958 = vmatpush1.bf16.msra.mxu0 0
    %2959 = vmatprep.subr.bf16.mxu0 0
    %2960 = vmatpush1.bf16.msra.mxu0 0
    %2961 = vmatprep.subr.bf16.mxu0 0
    %2962 = vmatpush1.bf16.msra.mxu0 0
    %2963 = vmatprep.subr.bf16.mxu0 0
    %2964 = vmatpush1.bf16.msra.mxu0 0
    %2965 = vmatprep.subr.bf16.mxu0 0
    %2966 = vmatpush1.bf16.msra.mxu0 0
    %2967 = vmatprep.subr.bf16.mxu0 0
    %2968 = vmatpush1.bf16.msra.mxu0 0
    %2969 = vmatprep.subr.bf16.mxu0 0
    %2970 = vmatpush1.bf16.msra.mxu0 0
    %2971 = vmatprep.subr.bf16.mxu0 0
    %2972 = vmatpush1.bf16.msra.mxu0 0
    %2973 = vmatprep.subr.bf16.mxu0 0
    %2974 = vmatpush1.bf16.msra.mxu0 0
    %2975 = vmatprep.subr.bf16.mxu0 0
    %2976 = vmatpush1.bf16.msra.mxu0 0
    %2977 = vmatprep.subr.bf16.mxu0 0
    %2978 = vmatpush1.bf16.msra.mxu0 0
    %2979 = vmatprep.mubr.bf16.mxu0 0
    %2980 = vmatmul.mubr.bf16.gmra.mrb[0].mxu0 %v2855
    %v2981 = vpop.f32.mrb[0].mxu0
    %v2982 = vadd.f32 0.0, %v2981
    %v2983 = vpop.f32.mrb[0].mxu0
    %v2984 = vpop.f32.mrb[0].mxu0
    %v2985 = vpop.f32.mrb[0].mxu0
    %2986 = vdwg.mxu0
    %v2988 = vrot.slane %v2982, 6
    %v2990 = vadd.f32 %v1661, %v2988
    %v2991 = vadd.f32 %v2990, %v1921
    %2992 = vmatprep.subr.bf16.mxu0 0
    %2993 = vmatpush1.bf16.msra.mxu0 %v1937
    %2994 = vmatprep.subr.bf16.mxu0 0
    %2995 = vmatpush1.bf16.msra.mxu0 %v1938
    %2996 = vmatprep.subr.bf16.mxu0 0
    %2997 = vmatpush1.bf16.msra.mxu0 0
    %2998 = vmatprep.subr.bf16.mxu0 0
    %2999 = vmatpush1.bf16.msra.mxu0 0
    %3000 = vmatprep.subr.bf16.mxu0 0
    %3001 = vmatpush1.bf16.msra.mxu0 0
    %3002 = vmatprep.subr.bf16.mxu0 0
    %3003 = vmatpush1.bf16.msra.mxu0 0
    %3004 = vmatprep.subr.bf16.mxu0 0
    %3005 = vmatpush1.bf16.msra.mxu0 0
    %3006 = vmatprep.subr.bf16.mxu0 0
    %3007 = vmatpush1.bf16.msra.mxu0 0
    %3008 = vmatprep.subr.bf16.mxu0 0
    %3009 = vmatpush1.bf16.msra.mxu0 0
    %3010 = vmatprep.subr.bf16.mxu0 0
    %3011 = vmatpush1.bf16.msra.mxu0 0
    %3012 = vmatprep.subr.bf16.mxu0 0
    %3013 = vmatpush1.bf16.msra.mxu0 0
    %3014 = vmatprep.subr.bf16.mxu0 0
    %3015 = vmatpush1.bf16.msra.mxu0 0
    %3016 = vmatprep.subr.bf16.mxu0 0
    %3017 = vmatpush1.bf16.msra.mxu0 0
    %3018 = vmatprep.subr.bf16.mxu0 0
    %3019 = vmatpush1.bf16.msra.mxu0 0
    %3020 = vmatprep.subr.bf16.mxu0 0
    %3021 = vmatpush1.bf16.msra.mxu0 0
    %3022 = vmatprep.subr.bf16.mxu0 0
    %3023 = vmatpush1.bf16.msra.mxu0 0
    %3024 = vmatprep.mubr.bf16.mxu0 0
    %3025 = vmatmul.mubr.bf16.gmra.mrb[0].mxu0 %v2855
    %v3026 = vpop.f32.mrb[0].mxu0
    %v3027 = vadd.f32 0.0, %v3026
    %v3028 = vpop.f32.mrb[0].mxu0
    %v3029 = vpop.f32.mrb[0].mxu0
    %v3030 = vpop.f32.mrb[0].mxu0
    %3031 = vdwg.mxu0
    %v3033 = vrot.slane %v3027, 6
    %v3035 = vadd.f32 %v1719, %v3033
    %v3036 = vadd.f32 %v3035, %v1988
    %v3037 = vxor.u32 %v2901, 2147483648
    %v3038 = vmul.f32 %v3037, 1.442695
    %v3039 = vpow.pop %v3038
    %v3040 = vadd.f32 %v3039, 1.0
    %v3041 = vrcp.pop %v3040
    %v3042 = vmul.f32 1.0, %v3041
    %v3043 = vxor.u32 %v2946, 2147483648
    %v3044 = vmul.f32 %v3043, 1.442695
    %v3045 = vpow.pop %v3044
    %v3046 = vadd.f32 %v3045, 1.0
    %v3047 = vrcp.pop %v3046
    %v3048 = vmul.f32 1.0, %v3047
    %v3049 = vtanh.pop %v2991
    %v3050 = vxor.u32 %v3036, 2147483648
    %v3051 = vmul.f32 %v3050, 1.442695
    %v3052 = vpow.pop %v3051
    %v3053 = vadd.f32 %v3052, 1.0
    %v3054 = vrcp.pop %v3053
    %v3055 = vmul.f32 1.0, %v3054
    %v3057 = vrot.slane %v2850, 6
    %v3059 = vmul.f32 %v3048, %v3057
    %v3060 = vmul.f32 %v3042, %v3049
    %v3061 = vadd.f32 %v3059, %v3060
    %v3062 = vtanh.pop %v3061
    %v3063 = vmul.f32 %v3055, %v3062
    %v3064 = vpack.c.bf16 %v3063, %v3063
    %v3066 = vrot.slane %v3064, 1
    %v3068 = vsel %vm495, %v3066, 0
    %3070 = vmatprep.subr.bf16.mxu0 0
    %3071 = vmatpush1.bf16.msra.mxu0 %v1734
    %3072 = vmatprep.subr.bf16.mxu0 0
    %3073 = vmatpush1.bf16.msra.mxu0 %v1735
    %3074 = vmatprep.subr.bf16.mxu0 0
    %3075 = vmatpush1.bf16.msra.mxu0 0
    %3076 = vmatprep.subr.bf16.mxu0 0
    %3077 = vmatpush1.bf16.msra.mxu0 0
    %3078 = vmatprep.subr.bf16.mxu0 0
    %3079 = vmatpush1.bf16.msra.mxu0 0
    %3080 = vmatprep.subr.bf16.mxu0 0
    %3081 = vmatpush1.bf16.msra.mxu0 0
    %3082 = vmatprep.subr.bf16.mxu0 0
    %3083 = vmatpush1.bf16.msra.mxu0 0
    %3084 = vmatprep.subr.bf16.mxu0 0
    %3085 = vmatpush1.bf16.msra.mxu0 0
    %3086 = vmatprep.subr.bf16.mxu0 0
    %3087 = vmatpush1.bf16.msra.mxu0 0
    %3088 = vmatprep.subr.bf16.mxu0 0
    %3089 = vmatpush1.bf16.msra.mxu0 0
    %3090 = vmatprep.subr.bf16.mxu0 0
    %3091 = vmatpush1.bf16.msra.mxu0 0
    %3092 = vmatprep.subr.bf16.mxu0 0
    %3093 = vmatpush1.bf16.msra.mxu0 0
    %3094 = vmatprep.subr.bf16.mxu0 0
    %3095 = vmatpush1.bf16.msra.mxu0 0
    %3096 = vmatprep.subr.bf16.mxu0 0
    %3097 = vmatpush1.bf16.msra.mxu0 0
    %3098 = vmatprep.subr.bf16.mxu0 0
    %3099 = vmatpush1.bf16.msra.mxu0 0
    %3100 = vmatprep.subr.bf16.mxu0 0
    %3101 = vmatpush1.bf16.msra.mxu0 0
    %3102 = vmatprep.mubr.bf16.mxu0 0
    %3103 = vmatmul.mubr.bf16.gmra.mrb[0].mxu0 %v3068
    %v3104 = vpop.f32.mrb[0].mxu0
    %v3105 = vadd.f32 0.0, %v3104
    %v3106 = vpop.f32.mrb[0].mxu0
    %v3107 = vpop.f32.mrb[0].mxu0
    %v3108 = vpop.f32.mrb[0].mxu0
    %3109 = vdwg.mxu0
    %v3111 = vrot.slane %v3105, 4
    %v3113 = vadd.f32 %v1545, %v3111
    %v3114 = vadd.f32 %v3113, %v1787
    %3115 = vmatprep.subr.bf16.mxu0 0
    %3116 = vmatpush1.bf16.msra.mxu0 %v1803
    %3117 = vmatprep.subr.bf16.mxu0 0
    %3118 = vmatpush1.bf16.msra.mxu0 %v1804
    %3119 = vmatprep.subr.bf16.mxu0 0
    %3120 = vmatpush1.bf16.msra.mxu0 0
    %3121 = vmatprep.subr.bf16.mxu0 0
    %3122 = vmatpush1.bf16.msra.mxu0 0
    %3123 = vmatprep.subr.bf16.mxu0 0
    %3124 = vmatpush1.bf16.msra.mxu0 0
    %3125 = vmatprep.subr.bf16.mxu0 0
    %3126 = vmatpush1.bf16.msra.mxu0 0
    %3127 = vmatprep.subr.bf16.mxu0 0
    %3128 = vmatpush1.bf16.msra.mxu0 0
    %3129 = vmatprep.subr.bf16.mxu0 0
    %3130 = vmatpush1.bf16.msra.mxu0 0
    %3131 = vmatprep.subr.bf16.mxu0 0
    %3132 = vmatpush1.bf16.msra.mxu0 0
    %3133 = vmatprep.subr.bf16.mxu0 0
    %3134 = vmatpush1.bf16.msra.mxu0 0
    %3135 = vmatprep.subr.bf16.mxu0 0
    %3136 = vmatpush1.bf16.msra.mxu0 0
    %3137 = vmatprep.subr.bf16.mxu0 0
    %3138 = vmatpush1.bf16.msra.mxu0 0
    %3139 = vmatprep.subr.bf16.mxu0 0
    %3140 = vmatpush1.bf16.msra.mxu0 0
    %3141 = vmatprep.subr.bf16.mxu0 0
    %3142 = vmatpush1.bf16.msra.mxu0 0
    %3143 = vmatprep.subr.bf16.mxu0 0
    %3144 = vmatpush1.bf16.msra.mxu0 0
    %3145 = vmatprep.subr.bf16.mxu0 0
    %3146 = vmatpush1.bf16.msra.mxu0 0
    %3147 = vmatprep.mubr.bf16.mxu0 0
    %3148 = vmatmul.mubr.bf16.gmra.mrb[0].mxu0 %v3068
    %v3149 = vpop.f32.mrb[0].mxu0
    %v3150 = vadd.f32 0.0, %v3149
    %v3151 = vpop.f32.mrb[0].mxu0
    %v3152 = vpop.f32.mrb[0].mxu0
    %v3153 = vpop.f32.mrb[0].mxu0
    %3154 = vdwg.mxu0
    %v3156 = vrot.slane %v3150, 4
    %v3158 = vadd.f32 %v1603, %v3156
    %v3159 = vadd.f32 %v3158, %v1854
    %3160 = vmatprep.subr.bf16.mxu0 0
    %3161 = vmatpush1.bf16.msra.mxu0 %v1870
    %3162 = vmatprep.subr.bf16.mxu0 0
    %3163 = vmatpush1.bf16.msra.mxu0 %v1871
    %3164 = vmatprep.subr.bf16.mxu0 0
    %3165 = vmatpush1.bf16.msra.mxu0 0
    %3166 = vmatprep.subr.bf16.mxu0 0
    %3167 = vmatpush1.bf16.msra.mxu0 0
    %3168 = vmatprep.subr.bf16.mxu0 0
    %3169 = vmatpush1.bf16.msra.mxu0 0
    %3170 = vmatprep.subr.bf16.mxu0 0
    %3171 = vmatpush1.bf16.msra.mxu0 0
    %3172 = vmatprep.subr.bf16.mxu0 0
    %3173 = vmatpush1.bf16.msra.mxu0 0
    %3174 = vmatprep.subr.bf16.mxu0 0
    %3175 = vmatpush1.bf16.msra.mxu0 0
    %3176 = vmatprep.subr.bf16.mxu0 0
    %3177 = vmatpush1.bf16.msra.mxu0 0
    %3178 = vmatprep.subr.bf16.mxu0 0
    %3179 = vmatpush1.bf16.msra.mxu0 0
    %3180 = vmatprep.subr.bf16.mxu0 0
    %3181 = vmatpush1.bf16.msra.mxu0 0
    %3182 = vmatprep.subr.bf16.mxu0 0
    %3183 = vmatpush1.bf16.msra.mxu0 0
    %3184 = vmatprep.subr.bf16.mxu0 0
    %3185 = vmatpush1.bf16.msra.mxu0 0
    %3186 = vmatprep.subr.bf16.mxu0 0
    %3187 = vmatpush1.bf16.msra.mxu0 0
    %3188 = vmatprep.subr.bf16.mxu0 0
    %3189 = vmatpush1.bf16.msra.mxu0 0
    %3190 = vmatprep.subr.bf16.mxu0 0
    %3191 = vmatpush1.bf16.msra.mxu0 0
    %3192 = vmatprep.mubr.bf16.mxu0 0
    %3193 = vmatmul.mubr.bf16.gmra.mrb[0].mxu0 %v3068
    %v3194 = vpop.f32.mrb[0].mxu0
    %v3195 = vadd.f32 0.0, %v3194
    %v3196 = vpop.f32.mrb[0].mxu0
    %v3197 = vpop.f32.mrb[0].mxu0
    %v3198 = vpop.f32.mrb[0].mxu0
    %3199 = vdwg.mxu0
    %v3201 = vrot.slane %v3195, 4
    %v3203 = vadd.f32 %v1661, %v3201
    %v3204 = vadd.f32 %v3203, %v1921
    %3205 = vmatprep.subr.bf16.mxu0 0
    %3206 = vmatpush1.bf16.msra.mxu0 %v1937
    %3207 = vmatprep.subr.bf16.mxu0 0
    %3208 = vmatpush1.bf16.msra.mxu0 %v1938
    %3209 = vmatprep.subr.bf16.mxu0 0
    %3210 = vmatpush1.bf16.msra.mxu0 0
    %3211 = vmatprep.subr.bf16.mxu0 0
    %3212 = vmatpush1.bf16.msra.mxu0 0
    %3213 = vmatprep.subr.bf16.mxu0 0
    %3214 = vmatpush1.bf16.msra.mxu0 0
    %3215 = vmatprep.subr.bf16.mxu0 0
    %3216 = vmatpush1.bf16.msra.mxu0 0
    %3217 = vmatprep.subr.bf16.mxu0 0
    %3218 = vmatpush1.bf16.msra.mxu0 0
    %3219 = vmatprep.subr.bf16.mxu0 0
    %3220 = vmatpush1.bf16.msra.mxu0 0
    %3221 = vmatprep.subr.bf16.mxu0 0
    %3222 = vmatpush1.bf16.msra.mxu0 0
    %3223 = vmatprep.subr.bf16.mxu0 0
    %3224 = vmatpush1.bf16.msra.mxu0 0
    %3225 = vmatprep.subr.bf16.mxu0 0
    %3226 = vmatpush1.bf16.msra.mxu0 0
    %3227 = vmatprep.subr.bf16.mxu0 0
    %3228 = vmatpush1.bf16.msra.mxu0 0
    %3229 = vmatprep.subr.bf16.mxu0 0
    %3230 = vmatpush1.bf16.msra.mxu0 0
    %3231 = vmatprep.subr.bf16.mxu0 0
    %3232 = vmatpush1.bf16.msra.mxu0 0
    %3233 = vmatprep.subr.bf16.mxu0 0
    %3234 = vmatpush1.bf16.msra.mxu0 0
    %3235 = vmatprep.subr.bf16.mxu0 0
    %3236 = vmatpush1.bf16.msra.mxu0 0
    %3237 = vmatprep.mubr.bf16.mxu0 0
    %3238 = vmatmul.mubr.bf16.gmra.mrb[0].mxu0 %v3068
    %v3239 = vpop.f32.mrb[0].mxu0
    %v3240 = vadd.f32 0.0, %v3239
    %v3241 = vpop.f32.mrb[0].mxu0
    %v3242 = vpop.f32.mrb[0].mxu0
    %v3243 = vpop.f32.mrb[0].mxu0
    %3244 = vdwg.mxu0
    %v3246 = vrot.slane %v3240, 4
    %v3248 = vadd.f32 %v1719, %v3246
    %v3249 = vadd.f32 %v3248, %v1988
    %v3250 = vxor.u32 %v3114, 2147483648
    %v3251 = vmul.f32 %v3250, 1.442695
    %v3252 = vpow.pop %v3251
    %v3253 = vadd.f32 %v3252, 1.0
    %v3254 = vrcp.pop %v3253
    %v3255 = vmul.f32 1.0, %v3254
    %v3256 = vxor.u32 %v3159, 2147483648
    %v3257 = vmul.f32 %v3256, 1.442695
    %v3258 = vpow.pop %v3257
    %v3259 = vadd.f32 %v3258, 1.0
    %v3260 = vrcp.pop %v3259
    %v3261 = vmul.f32 1.0, %v3260
    %v3262 = vtanh.pop %v3204
    %v3263 = vxor.u32 %v3249, 2147483648
    %v3264 = vmul.f32 %v3263, 1.442695
    %v3265 = vpow.pop %v3264
    %v3266 = vadd.f32 %v3265, 1.0
    %v3267 = vrcp.pop %v3266
    %v3268 = vmul.f32 1.0, %v3267
    %v3270 = vrot.slane %v3061, 6
    %v3272 = vmul.f32 %v3261, %v3270
    %v3273 = vmul.f32 %v3255, %v3262
    %v3274 = vadd.f32 %v3272, %v3273
    %v3275 = vtanh.pop %v3274
    %v3276 = vmul.f32 %v3268, %v3275
    %v3277 = vpack.c.bf16 %v3276, %v3276
    %v3279 = vrot.slane %v3277, 2
    %v3281 = vsel %vm495, %v3279, 0
    %3283 = vmatprep.subr.bf16.mxu0 0
    %3284 = vmatpush1.bf16.msra.mxu0 %v1734
    %3285 = vmatprep.subr.bf16.mxu0 0
    %3286 = vmatpush1.bf16.msra.mxu0 %v1735
    %3287 = vmatprep.subr.bf16.mxu0 0
    %3288 = vmatpush1.bf16.msra.mxu0 0
    %3289 = vmatprep.subr.bf16.mxu0 0
    %3290 = vmatpush1.bf16.msra.mxu0 0
    %3291 = vmatprep.subr.bf16.mxu0 0
    %3292 = vmatpush1.bf16.msra.mxu0 0
    %3293 = vmatprep.subr.bf16.mxu0 0
    %3294 = vmatpush1.bf16.msra.mxu0 0
    %3295 = vmatprep.subr.bf16.mxu0 0
    %3296 = vmatpush1.bf16.msra.mxu0 0
    %3297 = vmatprep.subr.bf16.mxu0 0
    %3298 = vmatpush1.bf16.msra.mxu0 0
    %3299 = vmatprep.subr.bf16.mxu0 0
    %3300 = vmatpush1.bf16.msra.mxu0 0
    %3301 = vmatprep.subr.bf16.mxu0 0
    %3302 = vmatpush1.bf16.msra.mxu0 0
    %3303 = vmatprep.subr.bf16.mxu0 0
    %3304 = vmatpush1.bf16.msra.mxu0 0
    %3305 = vmatprep.subr.bf16.mxu0 0
    %3306 = vmatpush1.bf16.msra.mxu0 0
    %3307 = vmatprep.subr.bf16.mxu0 0
    %3308 = vmatpush1.bf16.msra.mxu0 0
    %3309 = vmatprep.subr.bf16.mxu0 0
    %3310 = vmatpush1.bf16.msra.mxu0 0
    %3311 = vmatprep.subr.bf16.mxu0 0
    %3312 = vmatpush1.bf16.msra.mxu0 0
    %3313 = vmatprep.subr.bf16.mxu0 0
    %3314 = vmatpush1.bf16.msra.mxu0 0
    %3315 = vmatprep.mubr.bf16.mxu0 0
    %3316 = vmatmul.mubr.bf16.gmra.mrb[0].mxu0 %v3281
    %v3317 = vpop.f32.mrb[0].mxu0
    %v3318 = vadd.f32 0.0, %v3317
    %v3319 = vpop.f32.mrb[0].mxu0
    %v3320 = vpop.f32.mrb[0].mxu0
    %v3321 = vpop.f32.mrb[0].mxu0
    %3322 = vdwg.mxu0
    %v3324 = vrot.slane %v3318, 2
    %v3326 = vadd.f32 %v1545, %v3324
    %v3327 = vadd.f32 %v3326, %v1787
    %3328 = vmatprep.subr.bf16.mxu0 0
    %3329 = vmatpush1.bf16.msra.mxu0 %v1803
    %3330 = vmatprep.subr.bf16.mxu0 0
    %3331 = vmatpush1.bf16.msra.mxu0 %v1804
    %3332 = vmatprep.subr.bf16.mxu0 0
    %3333 = vmatpush1.bf16.msra.mxu0 0
    %3334 = vmatprep.subr.bf16.mxu0 0
    %3335 = vmatpush1.bf16.msra.mxu0 0
    %3336 = vmatprep.subr.bf16.mxu0 0
    %3337 = vmatpush1.bf16.msra.mxu0 0
    %3338 = vmatprep.subr.bf16.mxu0 0
    %3339 = vmatpush1.bf16.msra.mxu0 0
    %3340 = vmatprep.subr.bf16.mxu0 0
    %3341 = vmatpush1.bf16.msra.mxu0 0
    %3342 = vmatprep.subr.bf16.mxu0 0
    %3343 = vmatpush1.bf16.msra.mxu0 0
    %3344 = vmatprep.subr.bf16.mxu0 0
    %3345 = vmatpush1.bf16.msra.mxu0 0
    %3346 = vmatprep.subr.bf16.mxu0 0
    %3347 = vmatpush1.bf16.msra.mxu0 0
    %3348 = vmatprep.subr.bf16.mxu0 0
    %3349 = vmatpush1.bf16.msra.mxu0 0
    %3350 = vmatprep.subr.bf16.mxu0 0
    %3351 = vmatpush1.bf16.msra.mxu0 0
    %3352 = vmatprep.subr.bf16.mxu0 0
    %3353 = vmatpush1.bf16.msra.mxu0 0
    %3354 = vmatprep.subr.bf16.mxu0 0
    %3355 = vmatpush1.bf16.msra.mxu0 0
    %3356 = vmatprep.subr.bf16.mxu0 0
    %3357 = vmatpush1.bf16.msra.mxu0 0
    %3358 = vmatprep.subr.bf16.mxu0 0
    %3359 = vmatpush1.bf16.msra.mxu0 0
    %3360 = vmatprep.mubr.bf16.mxu0 0
    %3361 = vmatmul.mubr.bf16.gmra.mrb[0].mxu0 %v3281
    %v3362 = vpop.f32.mrb[0].mxu0
    %v3363 = vadd.f32 0.0, %v3362
    %v3364 = vpop.f32.mrb[0].mxu0
    %v3365 = vpop.f32.mrb[0].mxu0
    %v3366 = vpop.f32.mrb[0].mxu0
    %3367 = vdwg.mxu0
    %v3369 = vrot.slane %v3363, 2
    %v3371 = vadd.f32 %v1603, %v3369
    %v3372 = vadd.f32 %v3371, %v1854
    %3373 = vmatprep.subr.bf16.mxu0 0
    %3374 = vmatpush1.bf16.msra.mxu0 %v1870
    %3375 = vmatprep.subr.bf16.mxu0 0
    %3376 = vmatpush1.bf16.msra.mxu0 %v1871
    %3377 = vmatprep.subr.bf16.mxu0 0
    %3378 = vmatpush1.bf16.msra.mxu0 0
    %3379 = vmatprep.subr.bf16.mxu0 0
    %3380 = vmatpush1.bf16.msra.mxu0 0
    %3381 = vmatprep.subr.bf16.mxu0 0
    %3382 = vmatpush1.bf16.msra.mxu0 0
    %3383 = vmatprep.subr.bf16.mxu0 0
    %3384 = vmatpush1.bf16.msra.mxu0 0
    %3385 = vmatprep.subr.bf16.mxu0 0
    %3386 = vmatpush1.bf16.msra.mxu0 0
    %3387 = vmatprep.subr.bf16.mxu0 0
    %3388 = vmatpush1.bf16.msra.mxu0 0
    %3389 = vmatprep.subr.bf16.mxu0 0
    %3390 = vmatpush1.bf16.msra.mxu0 0
    %3391 = vmatprep.subr.bf16.mxu0 0
    %3392 = vmatpush1.bf16.msra.mxu0 0
    %3393 = vmatprep.subr.bf16.mxu0 0
    %3394 = vmatpush1.bf16.msra.mxu0 0
    %3395 = vmatprep.subr.bf16.mxu0 0
    %3396 = vmatpush1.bf16.msra.mxu0 0
    %3397 = vmatprep.subr.bf16.mxu0 0
    %3398 = vmatpush1.bf16.msra.mxu0 0
    %3399 = vmatprep.subr.bf16.mxu0 0
    %3400 = vmatpush1.bf16.msra.mxu0 0
    %3401 = vmatprep.subr.bf16.mxu0 0
    %3402 = vmatpush1.bf16.msra.mxu0 0
    %3403 = vmatprep.subr.bf16.mxu0 0
    %3404 = vmatpush1.bf16.msra.mxu0 0
    %3405 = vmatprep.mubr.bf16.mxu0 0
    %3406 = vmatmul.mubr.bf16.gmra.mrb[0].mxu0 %v3281
    %v3407 = vpop.f32.mrb[0].mxu0
    %v3408 = vadd.f32 0.0, %v3407
    %v3409 = vpop.f32.mrb[0].mxu0
    %v3410 = vpop.f32.mrb[0].mxu0
    %v3411 = vpop.f32.mrb[0].mxu0
    %3412 = vdwg.mxu0
    %v3414 = vrot.slane %v3408, 2
    %v3416 = vadd.f32 %v1661, %v3414
    %v3417 = vadd.f32 %v3416, %v1921
    %3418 = vmatprep.subr.bf16.mxu0 0
    %3419 = vmatpush1.bf16.msra.mxu0 %v1937
    %3420 = vmatprep.subr.bf16.mxu0 0
    %3421 = vmatpush1.bf16.msra.mxu0 %v1938
    %3422 = vmatprep.subr.bf16.mxu0 0
    %3423 = vmatpush1.bf16.msra.mxu0 0
    %3424 = vmatprep.subr.bf16.mxu0 0
    %3425 = vmatpush1.bf16.msra.mxu0 0
    %3426 = vmatprep.subr.bf16.mxu0 0
    %3427 = vmatpush1.bf16.msra.mxu0 0
    %3428 = vmatprep.subr.bf16.mxu0 0
    %3429 = vmatpush1.bf16.msra.mxu0 0
    %3430 = vmatprep.subr.bf16.mxu0 0
    %3431 = vmatpush1.bf16.msra.mxu0 0
    %3432 = vmatprep.subr.bf16.mxu0 0
    %3433 = vmatpush1.bf16.msra.mxu0 0
    %3434 = vmatprep.subr.bf16.mxu0 0
    %3435 = vmatpush1.bf16.msra.mxu0 0
    %3436 = vmatprep.subr.bf16.mxu0 0
    %3437 = vmatpush1.bf16.msra.mxu0 0
    %3438 = vmatprep.subr.bf16.mxu0 0
    %3439 = vmatpush1.bf16.msra.mxu0 0
    %3440 = vmatprep.subr.bf16.mxu0 0
    %3441 = vmatpush1.bf16.msra.mxu0 0
    %3442 = vmatprep.subr.bf16.mxu0 0
    %3443 = vmatpush1.bf16.msra.mxu0 0
    %3444 = vmatprep.subr.bf16.mxu0 0
    %3445 = vmatpush1.bf16.msra.mxu0 0
    %3446 = vmatprep.subr.bf16.mxu0 0
    %3447 = vmatpush1.bf16.msra.mxu0 0
    %3448 = vmatprep.subr.bf16.mxu0 0
    %3449 = vmatpush1.bf16.msra.mxu0 0
    %3450 = vmatprep.mubr.bf16.mxu0 0
    %3451 = vmatmul.mubr.bf16.gmra.mrb[0].mxu0 %v3281
    %v3452 = vpop.f32.mrb[0].mxu0
    %v3453 = vadd.f32 0.0, %v3452
    %v3454 = vpop.f32.mrb[0].mxu0
    %v3455 = vpop.f32.mrb[0].mxu0
    %v3456 = vpop.f32.mrb[0].mxu0
    %3457 = vdwg.mxu0
    %v3459 = vrot.slane %v3453, 2
    %v3461 = vadd.f32 %v1719, %v3459
    %v3462 = vadd.f32 %v3461, %v1988
    %v3463 = vxor.u32 %v3327, 2147483648
    %v3464 = vmul.f32 %v3463, 1.442695
    %v3465 = vpow.pop %v3464
    %v3466 = vadd.f32 %v3465, 1.0
    %v3467 = vrcp.pop %v3466
    %v3468 = vmul.f32 1.0, %v3467
    %v3469 = vxor.u32 %v3372, 2147483648
    %v3470 = vmul.f32 %v3469, 1.442695
    %v3471 = vpow.pop %v3470
    %v3472 = vadd.f32 %v3471, 1.0
    %v3473 = vrcp.pop %v3472
    %v3474 = vmul.f32 1.0, %v3473
    %v3475 = vtanh.pop %v3417
    %v3476 = vxor.u32 %v3462, 2147483648
    %v3477 = vmul.f32 %v3476, 1.442695
    %v3478 = vpow.pop %v3477
    %v3479 = vadd.f32 %v3478, 1.0
    %v3480 = vrcp.pop %v3479
    %v3481 = vmul.f32 1.0, %v3480
    %v3483 = vrot.slane %v3274, 6
    %v3485 = vmul.f32 %v3474, %v3483
    %v3486 = vmul.f32 %v3468, %v3475
    %v3487 = vadd.f32 %v3485, %v3486
    %v3488 = vtanh.pop %v3487
    %v3489 = vmul.f32 %v3481, %v3488
    %v3490 = vpack.c.bf16 %v3489, %v3489
    %v3491 = vld [vmem:[%s8] sm:$0xff]
    %v3492 = vld [vmem:[%s8 + $0x8] sm:$0xff]
    %v3493 = vld [vmem:[%s8 + $0x10] sm:$0xff]
    %v3494 = vld [vmem:[%s8 + $0x18] sm:$0xff]
    %v3495 = vld [vmem:[%s8 + $0x20] sm:$0xff]
    %v3496 = vld [vmem:[%s8 + $0x28] sm:$0xff]
    %v3497 = vld [vmem:[%s8 + $0x30] sm:$0xff]
    %v3498 = vld [vmem:[%s8 + $0x38] sm:$0xff]
    %v3499 = vld [vmem:[%s8 + $0x40] sm:$0xff]
    %v3500 = vld [vmem:[%s8 + $0x48] sm:$0xff]
    %v3501 = vld [vmem:[%s8 + $0x50] sm:$0xff]
    %v3502 = vld [vmem:[%s8 + $0x58] sm:$0xff]
    %v3503 = vld [vmem:[%s8 + $0x60] sm:$0xff]
    %v3504 = vld [vmem:[%s8 + $0x68] sm:$0xff]
    %v3505 = vld [vmem:[%s8 + $0x70] sm:$0xff]
    %v3506 = vld [vmem:[%s8 + $0x78] sm:$0xff]
    %v3507 = vld [vmem:[%s9] sm:$0xff]
    %v3509 = vlaneseq
    %v3510 = vshrl.u32 %v3509, 7
    %v3511 = vsub.s32 0, %v3510
    %v3512 = vrot.slane %v3507, %v3511
    %v3513 = vlaneseq
    %v3514 = vshrl.u32 %v3513, 7
    %v3515 = vsub.s32 1, %v3514
    %v3516 = vrot.slane %v3507, %v3515
    %v3517 = vlaneseq
    %v3518 = vshrl.u32 %v3517, 7
    %v3519 = vsub.s32 2, %v3518
    %v3520 = vrot.slane %v3507, %v3519
    %v3521 = vlaneseq
    %v3522 = vshrl.u32 %v3521, 7
    %v3523 = vsub.s32 3, %v3522
    %v3524 = vrot.slane %v3507, %v3523
    %v3525 = vlaneseq
    %v3526 = vshrl.u32 %v3525, 7
    %v3527 = vsub.s32 4, %v3526
    %v3528 = vrot.slane %v3507, %v3527
    %v3529 = vlaneseq
    %v3530 = vshrl.u32 %v3529, 7
    %v3531 = vsub.s32 5, %v3530
    %v3532 = vrot.slane %v3507, %v3531
    %v3533 = vlaneseq
    %v3534 = vshrl.u32 %v3533, 7
    %v3535 = vsub.s32 6, %v3534
    %v3536 = vrot.slane %v3507, %v3535
    %v3537 = vlaneseq
    %v3538 = vshrl.u32 %v3537, 7
    %v3539 = vsub.s32 7, %v3538
    %v3540 = vrot.slane %v3507, %v3539
    %v3550 = vrot.slane %v3490, 3
    %v3567 = vunpack.c.l.b16 %v3491
    %v3568 = vunpack.c.h.b16 %v3491
    %v3569 = vunpack.c.l.b16 %v3492
    %v3570 = vunpack.c.h.b16 %v3492
    %v3571 = vunpack.c.l.b16 %v3493
    %v3572 = vunpack.c.h.b16 %v3493
    %v3573 = vunpack.c.l.b16 %v3494
    %v3574 = vunpack.c.h.b16 %v3494
    %v3575 = vunpack.c.l.b16 %v3495
    %v3576 = vunpack.c.h.b16 %v3495
    %v3577 = vunpack.c.l.b16 %v3496
    %v3578 = vunpack.c.h.b16 %v3496
    %v3579 = vunpack.c.l.b16 %v3497
    %v3580 = vunpack.c.h.b16 %v3497
    %v3581 = vunpack.c.l.b16 %v3498
    %v3582 = vunpack.c.h.b16 %v3498
    %v3583 = vunpack.c.l.b16 %v3499
    %v3584 = vunpack.c.h.b16 %v3499
    %v3585 = vunpack.c.l.b16 %v3500
    %v3586 = vunpack.c.h.b16 %v3500
    %v3587 = vunpack.c.l.b16 %v3501
    %v3588 = vunpack.c.h.b16 %v3501
    %v3589 = vunpack.c.l.b16 %v3502
    %v3590 = vunpack.c.h.b16 %v3502
    %v3591 = vunpack.c.l.b16 %v3503
    %v3592 = vunpack.c.h.b16 %v3503
    %v3593 = vunpack.c.l.b16 %v3504
    %v3594 = vunpack.c.h.b16 %v3504
    %v3595 = vunpack.c.l.b16 %v3505
    %v3596 = vunpack.c.h.b16 %v3505
    %v3597 = vunpack.c.l.b16 %v3506
    %v3598 = vunpack.c.h.b16 %v3506
    %v3599 = vpack.c.b16 %v3575, %v3567
    %v3600 = vpack.c.b16 %v3576, %v3568
    %v3601 = vpack.c.b16 %v3577, %v3569
    %v3602 = vpack.c.b16 %v3578, %v3570
    %v3603 = vpack.c.b16 %v3579, %v3571
    %v3604 = vpack.c.b16 %v3580, %v3572
    %v3605 = vpack.c.b16 %v3581, %v3573
    %v3606 = vpack.c.b16 %v3582, %v3574
    %v3607 = vpack.c.b16 %v3591, %v3583
    %v3608 = vpack.c.b16 %v3592, %v3584
    %v3609 = vpack.c.b16 %v3593, %v3585
    %v3610 = vpack.c.b16 %v3594, %v3586
    %v3611 = vpack.c.b16 %v3595, %v3587
    %v3612 = vpack.c.b16 %v3596, %v3588
    %v3613 = vpack.c.b16 %v3597, %v3589
    %v3614 = vpack.c.b16 %v3598, %v3590
    %v3632 = vsel %vm495, %v3550, 0
    %3634 = vmatprep.subr.bf16.mxu0 %v3600
    %3635 = vmatpush1.bf16.msra.mxu0 %v3599
    %3636 = vmatprep.subr.bf16.mxu0 %v3608
    %3637 = vmatpush1.bf16.msra.mxu0 %v3607
    %3638 = vmatprep.subr.bf16.mxu0 0
    %3639 = vmatpush1.bf16.msra.mxu0 0
    %3640 = vmatprep.subr.bf16.mxu0 0
    %3641 = vmatpush1.bf16.msra.mxu0 0
    %3642 = vmatprep.subr.bf16.mxu0 0
    %3643 = vmatpush1.bf16.msra.mxu0 0
    %3644 = vmatprep.subr.bf16.mxu0 0
    %3645 = vmatpush1.bf16.msra.mxu0 0
    %3646 = vmatprep.subr.bf16.mxu0 0
    %3647 = vmatpush1.bf16.msra.mxu0 0
    %3648 = vmatprep.subr.bf16.mxu0 0
    %3649 = vmatpush1.bf16.msra.mxu0 0
    %3650 = vmatprep.subr.bf16.mxu0 0
    %3651 = vmatpush1.bf16.msra.mxu0 0
    %3652 = vmatprep.subr.bf16.mxu0 0
    %3653 = vmatpush1.bf16.msra.mxu0 0
    %3654 = vmatprep.subr.bf16.mxu0 0
    %3655 = vmatpush1.bf16.msra.mxu0 0
    %3656 = vmatprep.subr.bf16.mxu0 0
    %3657 = vmatpush1.bf16.msra.mxu0 0
    %3658 = vmatprep.subr.bf16.mxu0 0
    %3659 = vmatpush1.bf16.msra.mxu0 0
    %3660 = vmatprep.subr.bf16.mxu0 0
    %3661 = vmatpush1.bf16.msra.mxu0 0
    %3662 = vmatprep.subr.bf16.mxu0 0
    %3663 = vmatpush1.bf16.msra.mxu0 0
    %3664 = vmatprep.subr.bf16.mxu0 0
    %3665 = vmatpush1.bf16.msra.mxu0 0
    %3666 = vmatprep.mubr.bf16.mxu0 0
    %3667 = vmatmul.mubr.bf16.gmra.mrb[0].mxu0 %v3632
    %v3668 = vpop.f32.mrb[0].mxu0
    %v3669 = vadd.f32 %v3512, %v3668
    %v3670 = vpop.f32.mrb[0].mxu0
    %v3671 = vadd.f32 %v3516, %v3670
    %v3672 = vpop.f32.mrb[0].mxu0
    %v3673 = vpop.f32.mrb[0].mxu0
    %3674 = vdwg.mxu0
    %3675 = vmatprep.subr.bf16.mxu0 %v3602
    %3676 = vmatpush1.bf16.msra.mxu0 %v3601
    %3677 = vmatprep.subr.bf16.mxu0 %v3610
    %3678 = vmatpush1.bf16.msra.mxu0 %v3609
    %3679 = vmatprep.subr.bf16.mxu0 0
    %3680 = vmatpush1.bf16.msra.mxu0 0
    %3681 = vmatprep.subr.bf16.mxu0 0
    %3682 = vmatpush1.bf16.msra.mxu0 0
    %3683 = vmatprep.subr.bf16.mxu0 0
    %3684 = vmatpush1.bf16.msra.mxu0 0
    %3685 = vmatprep.subr.bf16.mxu0 0
    %3686 = vmatpush1.bf16.msra.mxu0 0
    %3687 = vmatprep.subr.bf16.mxu0 0
    %3688 = vmatpush1.bf16.msra.mxu0 0
    %3689 = vmatprep.subr.bf16.mxu0 0
    %3690 = vmatpush1.bf16.msra.mxu0 0
    %3691 = vmatprep.subr.bf16.mxu0 0
    %3692 = vmatpush1.bf16.msra.mxu0 0
    %3693 = vmatprep.subr.bf16.mxu0 0
    %3694 = vmatpush1.bf16.msra.mxu0 0
    %3695 = vmatprep.subr.bf16.mxu0 0
    %3696 = vmatpush1.bf16.msra.mxu0 0
    %3697 = vmatprep.subr.bf16.mxu0 0
    %3698 = vmatpush1.bf16.msra.mxu0 0
    %3699 = vmatprep.subr.bf16.mxu0 0
    %3700 = vmatpush1.bf16.msra.mxu0 0
    %3701 = vmatprep.subr.bf16.mxu0 0
    %3702 = vmatpush1.bf16.msra.mxu0 0
    %3703 = vmatprep.subr.bf16.mxu0 0
    %3704 = vmatpush1.bf16.msra.mxu0 0
    %3705 = vmatprep.subr.bf16.mxu0 0
    %3706 = vmatpush1.bf16.msra.mxu0 0
    %3707 = vmatprep.mubr.bf16.mxu0 0
    %3708 = vmatmul.mubr.bf16.gmra.mrb[0].mxu0 %v3632
    %v3709 = vpop.f32.mrb[0].mxu0
    %v3710 = vadd.f32 %v3520, %v3709
    %v3711 = vpop.f32.mrb[0].mxu0
    %v3712 = vadd.f32 %v3524, %v3711
    %v3713 = vpop.f32.mrb[0].mxu0
    %v3714 = vpop.f32.mrb[0].mxu0
    %3715 = vdwg.mxu0
    %3716 = vmatprep.subr.bf16.mxu0 %v3604
    %3717 = vmatpush1.bf16.msra.mxu0 %v3603
    %3718 = vmatprep.subr.bf16.mxu0 %v3612
    %3719 = vmatpush1.bf16.msra.mxu0 %v3611
    %3720 = vmatprep.subr.bf16.mxu0 0
    %3721 = vmatpush1.bf16.msra.mxu0 0
    %3722 = vmatprep.subr.bf16.mxu0 0
    %3723 = vmatpush1.bf16.msra.mxu0 0
    %3724 = vmatprep.subr.bf16.mxu0 0
    %3725 = vmatpush1.bf16.msra.mxu0 0
    %3726 = vmatprep.subr.bf16.mxu0 0
    %3727 = vmatpush1.bf16.msra.mxu0 0
    %3728 = vmatprep.subr.bf16.mxu0 0
    %3729 = vmatpush1.bf16.msra.mxu0 0
    %3730 = vmatprep.subr.bf16.mxu0 0
    %3731 = vmatpush1.bf16.msra.mxu0 0
    %3732 = vmatprep.subr.bf16.mxu0 0
    %3733 = vmatpush1.bf16.msra.mxu0 0
    %3734 = vmatprep.subr.bf16.mxu0 0
    %3735 = vmatpush1.bf16.msra.mxu0 0
    %3736 = vmatprep.subr.bf16.mxu0 0
    %3737 = vmatpush1.bf16.msra.mxu0 0
    %3738 = vmatprep.subr.bf16.mxu0 0
    %3739 = vmatpush1.bf16.msra.mxu0 0
    %3740 = vmatprep.subr.bf16.mxu0 0
    %3741 = vmatpush1.bf16.msra.mxu0 0
    %3742 = vmatprep.subr.bf16.mxu0 0
    %3743 = vmatpush1.bf16.msra.mxu0 0
    %3744 = vmatprep.subr.bf16.mxu0 0
    %3745 = vmatpush1.bf16.msra.mxu0 0
    %3746 = vmatprep.subr.bf16.mxu0 0
    %3747 = vmatpush1.bf16.msra.mxu0 0
    %3748 = vmatprep.mubr.bf16.mxu0 0
    %3749 = vmatmul.mubr.bf16.gmra.mrb[0].mxu0 %v3632
    %v3750 = vpop.f32.mrb[0].mxu0
    %v3751 = vadd.f32 %v3528, %v3750
    %v3752 = vpop.f32.mrb[0].mxu0
    %v3753 = vadd.f32 %v3532, %v3752
    %v3754 = vpop.f32.mrb[0].mxu0
    %v3755 = vpop.f32.mrb[0].mxu0
    %3756 = vdwg.mxu0
    %3757 = vmatprep.subr.bf16.mxu0 %v3606
    %3758 = vmatpush1.bf16.msra.mxu0 %v3605
    %3759 = vmatprep.subr.bf16.mxu0 %v3614
    %3760 = vmatpush1.bf16.msra.mxu0 %v3613
    %3761 = vmatprep.subr.bf16.mxu0 0
    %3762 = vmatpush1.bf16.msra.mxu0 0
    %3763 = vmatprep.subr.bf16.mxu0 0
    %3764 = vmatpush1.bf16.msra.mxu0 0
    %3765 = vmatprep.subr.bf16.mxu0 0
    %3766 = vmatpush1.bf16.msra.mxu0 0
    %3767 = vmatprep.subr.bf16.mxu0 0
    %3768 = vmatpush1.bf16.msra.mxu0 0
    %3769 = vmatprep.subr.bf16.mxu0 0
    %3770 = vmatpush1.bf16.msra.mxu0 0
    %3771 = vmatprep.subr.bf16.mxu0 0
    %3772 = vmatpush1.bf16.msra.mxu0 0
    %3773 = vmatprep.subr.bf16.mxu0 0
    %3774 = vmatpush1.bf16.msra.mxu0 0
    %3775 = vmatprep.subr.bf16.mxu0 0
    %3776 = vmatpush1.bf16.msra.mxu0 0
    %3777 = vmatprep.subr.bf16.mxu0 0
    %3778 = vmatpush1.bf16.msra.mxu0 0
    %3779 = vmatprep.subr.bf16.mxu0 0
    %3780 = vmatpush1.bf16.msra.mxu0 0
    %3781 = vmatprep.subr.bf16.mxu0 0
    %3782 = vmatpush1.bf16.msra.mxu0 0
    %3783 = vmatprep.subr.bf16.mxu0 0
    %3784 = vmatpush1.bf16.msra.mxu0 0
    %3785 = vmatprep.subr.bf16.mxu0 0
    %3786 = vmatpush1.bf16.msra.mxu0 0
    %3787 = vmatprep.subr.bf16.mxu0 0
    %3788 = vmatpush1.bf16.msra.mxu0 0
    %3789 = vmatprep.mubr.bf16.mxu0 0
    %3790 = vmatmul.mubr.bf16.gmra.mrb[0].mxu0 %v3632
    %v3791 = vpop.f32.mrb[0].mxu0
    %v3792 = vadd.f32 %v3536, %v3791
    %v3793 = vpop.f32.mrb[0].mxu0
    %v3794 = vadd.f32 %v3540, %v3793
    %v3795 = vpop.f32.mrb[0].mxu0
    %v3796 = vpop.f32.mrb[0].mxu0
    %3797 = vdwg.mxu0
    %v3798 = vxor.u32 %v3669, 2147483648
    %v3799 = vxor.u32 %v3671, 2147483648
    %v3800 = vxor.u32 %v3710, 2147483648
    %v3801 = vxor.u32 %v3712, 2147483648
    %v3802 = vxor.u32 %v3751, 2147483648
    %v3803 = vxor.u32 %v3753, 2147483648
    %v3804 = vxor.u32 %v3792, 2147483648
    %v3805 = vxor.u32 %v3794, 2147483648
    %v3806 = vmul.f32 %v3798, 1.442695
    %v3807 = vpow.pop %v3806
    %v3808 = vmul.f32 %v3799, 1.442695
    %v3809 = vpow.pop %v3808
    %v3810 = vmul.f32 %v3800, 1.442695
    %v3811 = vpow.pop %v3810
    %v3812 = vmul.f32 %v3801, 1.442695
    %v3813 = vpow.pop %v3812
    %v3814 = vmul.f32 %v3802, 1.442695
    %v3815 = vpow.pop %v3814
    %v3816 = vmul.f32 %v3803, 1.442695
    %v3817 = vpow.pop %v3816
    %v3818 = vmul.f32 %v3804, 1.442695
    %v3819 = vpow.pop %v3818
    %v3820 = vmul.f32 %v3805, 1.442695
    %v3821 = vpow.pop %v3820
    %v3822 = vadd.f32 %v3807, 1.0
    %v3823 = vadd.f32 %v3809, 1.0
    %v3824 = vadd.f32 %v3811, 1.0
    %v3825 = vadd.f32 %v3813, 1.0
    %v3826 = vadd.f32 %v3815, 1.0
    %v3827 = vadd.f32 %v3817, 1.0
    %v3828 = vadd.f32 %v3819, 1.0
    %v3829 = vadd.f32 %v3821, 1.0
    %v3830 = vrcp.pop %v3822
    %v3831 = vmul.f32 1.0, %v3830
    %v3832 = vrcp.pop %v3823
    %v3833 = vmul.f32 1.0, %v3832
    %v3834 = vrcp.pop %v3824
    %v3835 = vmul.f32 1.0, %v3834
    %v3836 = vrcp.pop %v3825
    %v3837 = vmul.f32 1.0, %v3836
    %v3838 = vrcp.pop %v3826
    %v3839 = vmul.f32 1.0, %v3838
    %v3840 = vrcp.pop %v3827
    %v3841 = vmul.f32 1.0, %v3840
    %v3842 = vrcp.pop %v3828
    %v3843 = vmul.f32 1.0, %v3842
    %v3844 = vrcp.pop %v3829
    %v3845 = vmul.f32 1.0, %v3844
    %v3854 = vcombine.low %v3831, %v3833
    %v3855 = vcombine.low %v3835, %v3837
    %v3857 = vunpack.c.l.s4 1983009808
    %v3858 = vunpack.c.0.s8 %v3857
    %v3859 = vlaneseq
    %v3860 = vshrl.u32 %v3859, 7
    %v3861 = vsub.s32 %v3858, %v3860
    %v3862 = vrot.slane %v3854, %v3861
    %v3864 = vunpack.c.l.s4 1983009808
    %v3865 = vunpack.c.0.s8 %v3864
    %v3866 = vlaneseq
    %v3867 = vshrl.u32 %v3866, 7
    %v3868 = vsub.s32 %v3865, %v3867
    %v3869 = vrot.slane %v3855, %v3868
    %v3870 = vcombine.low %v3862, %v3869
    %v3871 = vcombine.low %v3839, %v3841
    %v3872 = vcombine.low %v3843, %v3845
    %v3874 = vunpack.c.l.s4 1983009808
    %v3875 = vunpack.c.0.s8 %v3874
    %v3876 = vlaneseq
    %v3877 = vshrl.u32 %v3876, 7
    %v3878 = vsub.s32 %v3875, %v3877
    %v3879 = vrot.slane %v3871, %v3878
    %v3881 = vunpack.c.l.s4 1983009808
    %v3882 = vunpack.c.0.s8 %v3881
    %v3883 = vlaneseq
    %v3884 = vshrl.u32 %v3883, 7
    %v3885 = vsub.s32 %v3882, %v3884
    %v3886 = vrot.slane %v3872, %v3885
    %v3887 = vcombine.low %v3879, %v3886
    %3890 = vst [vmem:[#allocation7] sm:$0xff] %v3870
    %3891 = vst [vmem:[#allocation7 + $0x8] sm:$0xff] %v3887
    // Predicated region
    $region50: #{tpu_custom_call.1} parent=1 // pred_check
      _
    $region51: #{tpu_custom_call.1} parent=1 // pred_check_branch
      %3893 = sbr.rel (0) target = $region53
    $region52: #{tpu_custom_call.1} parent=1 // pred_region
      %s3895 = ssub.s32 256, 256
      %3896 = vsyncadd [#allocation4], %s3895
      %s3898 = sshll.u32 [#allocation7], 4
      %s3899 = int_to_ptr.vmem [resolvable:$true] %s3898
      %3901 = dma.vmem_to_hbm [thread:$0]  %s3899, 256, %s10, [#allocation4]
    $region53: #{tpu_custom_call.1} parent=1 // pred_fallthru
      _
    // Predicated region
    $region54: #{tpu_custom_call.1} parent=1 // pred_check
      _
    $region55: #{tpu_custom_call.1} parent=1 // pred_check_branch
      %3903 = sbr.rel (0) target = $region57
    $region56: #{tpu_custom_call.1} parent=1 // pred_region
      %3904 = dma.done [#allocation4], 256
    $region57: #{tpu_custom_call.1} parent=1 // pred_fallthru
      _
    %3905 = vsyncpa [#allocation3], 1
    %3906 = vsyncpa [#allocation6], 1
    %3907 = vsyncpa [#allocation4], 1

</llo_original>
